<compile_context>
chip_gen: v7x
topology: tpu7x:2x2x1
jax: 0.10.0
libtpu: 0.0.40
codegen_flags: <defaults>
</compile_context>

<pallas_src>
import functools
import math

import jax
import jax.numpy as jnp
from jax.experimental import pallas as pl
from jax.experimental.pallas import tpu as pltpu


# ----------------------------------------------------------------------------
# helpers
# ----------------------------------------------------------------------------
def _round_up(x, m):
    return ((x + m - 1) // m) * m


def _tile(extent, target, align):
    """Pick a block size (<= target, aligned) and the padded extent it divides."""
    blk = min(target, _round_up(extent, align))
    return blk, _round_up(extent, blk)


def _vmem_limit_bytes():
    # Budget chosen to fit v7x (64 MiB physical / 32 MiB default scoped VMEM);
    # also valid on v5e/v6e (128 MiB physical).
    limit = 48 * 1024 * 1024
    try:
        cap = pltpu.get_tpu_info().vmem_capacity_bytes
        limit = min(limit, int(cap) * 3 // 4)
    except Exception:
        pass
    return limit


_VMEM_LIMIT = _vmem_limit_bytes()


# ----------------------------------------------------------------------------
# Pallas kernels
# ----------------------------------------------------------------------------
def _matmul_kernel(a_ref, b_ref, bias_ref, o_ref, acc_ref, *, pre_act, epilogue):
    """Tiled o = epilogue(pre_act(a) @ b) with an f32 VMEM accumulator.

    grid = (M tiles, K tiles); K is the last ("arbitrary") reduction axis.
    a/b tiles are bf16 (MXU-native); accumulation stays f32.
    """
    k = pl.program_id(1)

    @pl.when(k == 0)
    def _():
        acc_ref[...] = jnp.zeros_like(acc_ref)

    a = a_ref[...]
    if pre_act == "lrelu":            # nn.LeakyReLU(0.2) fused on the A tile
        a = jnp.where(a >= 0.0, a, 0.2 * a)
    elif pre_act == "relu":           # nn.ReLU fused on the A tile
        a = jnp.maximum(a, 0.0)
    acc_ref[...] += jnp.dot(a, b_ref[...], preferred_element_type=jnp.float32)

    @pl.when(k == pl.num_programs(1) - 1)
    def _():
        y = acc_ref[...]
        if epilogue == "bias_tanh":   # ConvTranspose bias + nn.Tanh fused
            y = jnp.tanh(y + bias_ref[...])
        o_ref[...] = y.astype(o_ref.dtype)


def matmul_fused(a, b, *, pre_act="none", epilogue="none", bias=None,
                 block_m=512, block_k=512):
    """a:(M,K) @ b:(K,N) with fused pre-activation / epilogue.

    Pads N to a lane-dense multiple of 128 and M/K to block multiples. Zero
    padding is exact: lrelu/relu(0)=0 and zero K-columns contribute nothing;
    padded rows/cols are sliced back off.
    """
    M, K = a.shape
    K2, N = b.shape
    assert K == K2
    n_pad = _round_up(N, 128)
    bm, m_pad = _tile(M, block_m, 16)
    bk, k_pad = _tile(K, block_k, 128)

    a_p = jnp.pad(a.astype(jnp.bfloat16), ((0, m_pad - M), (0, k_pad - K)))
    b_p = jnp.pad(b.astype(jnp.bfloat16), ((0, k_pad - K), (0, n_pad - N)))
    if bias is None:
        bias_p = jnp.zeros((1, n_pad), jnp.float32)
    else:
        bias_p = jnp.pad(bias.reshape(1, N).astype(jnp.float32),
                         ((0, 0), (0, n_pad - N)))

    out = pl.pallas_call(
        functools.partial(_matmul_kernel, pre_act=pre_act, epilogue=epilogue),
        out_shape=jax.ShapeDtypeStruct((m_pad, n_pad), jnp.float32),
        grid=(m_pad // bm, k_pad // bk),
        in_specs=[
            pl.BlockSpec((bm, bk), lambda i, k: (i, k)),
            pl.BlockSpec((bk, n_pad), lambda i, k: (k, 0)),
            pl.BlockSpec((1, n_pad), lambda i, k: (0, 0)),
        ],
        out_specs=pl.BlockSpec((bm, n_pad), lambda i, k: (i, 0)),
        scratch_shapes=[pltpu.VMEM((bm, n_pad), jnp.float32)],
        compiler_params=pltpu.CompilerParams(
            dimension_semantics=("parallel", "arbitrary"),
            vmem_limit_bytes=_VMEM_LIMIT),
    )(a_p, b_p, bias_p)
    return out[:M, :N]


def _bn_stats_kernel(x_ref, g_ref, b_ref, scale_ref, shift_ref, sum_ref, sq_ref,
                     *, m_actual, eps):
    """Streaming per-channel sum / sum-of-squares; finalize to (scale, shift)."""
    i = pl.program_id(0)

    @pl.when(i == 0)
    def _():
        sum_ref[...] = jnp.zeros_like(sum_ref)
        sq_ref[...] = jnp.zeros_like(sq_ref)

    x = x_ref[...]
    sum_ref[...] += jnp.sum(x, axis=0, keepdims=True)
    sq_ref[...] += jnp.sum(x * x, axis=0, keepdims=True)

    @pl.when(i == pl.num_programs(0) - 1)
    def _():
        inv_m = 1.0 / m_actual
        mean = sum_ref[...] * inv_m
        var = sq_ref[...] * inv_m - mean * mean   # biased var, as PyTorch training BN
        scale = g_ref[...] * jax.lax.rsqrt(var + eps)
        scale_ref[...] = scale
        shift_ref[...] = b_ref[...] - mean * scale


def _scale_shift_kernel(x_ref, s_ref, t_ref, o_ref):
    o_ref[...] = x_ref[...] * s_ref[...] + t_ref[...]


def batchnorm_flat(x_flat, gamma, beta, *, eps=1e-5, block_m=512):
    """Training-mode BatchNorm over rows of (M, C), tiled two-pass:
       pass 1: streaming per-channel stats (grid over M, accumulators resident)
       pass 2: tiled scale/shift apply.
    Zero padding is exact (padded rows contribute 0 to the sums; we divide by
    the true M and slice the padding back off)."""
    M, C = x_flat.shape
    c_pad = _round_up(C, 128)
    bm, m_pad = _tile(M, block_m, 8)
    x_p = jnp.pad(x_flat.astype(jnp.float32), ((0, m_pad - M), (0, c_pad - C)))
    g_p = jnp.pad(gamma.reshape(1, C).astype(jnp.float32), ((0, 0), (0, c_pad - C)))
    b_p = jnp.pad(beta.reshape(1, C).astype(jnp.float32), ((0, 0), (0, c_pad - C)))
    grid = (m_pad // bm,)

    scale, shift = pl.pallas_call(
        functools.partial(_bn_stats_kernel, m_actual=float(M), eps=eps),
        out_shape=(jax.ShapeDtypeStruct((1, c_pad), jnp.float32),
                   jax.ShapeDtypeStruct((1, c_pad), jnp.float32)),
        grid=grid,
        in_specs=[
            pl.BlockSpec((bm, c_pad), lambda i: (i, 0)),
            pl.BlockSpec((1, c_pad), lambda i: (0, 0)),
            pl.BlockSpec((1, c_pad), lambda i: (0, 0)),
        ],
        out_specs=(pl.BlockSpec((1, c_pad), lambda i: (0, 0)),
                   pl.BlockSpec((1, c_pad), lambda i: (0, 0))),
        scratch_shapes=[pltpu.VMEM((1, c_pad), jnp.float32),
                        pltpu.VMEM((1, c_pad), jnp.float32)],
        compiler_params=pltpu.CompilerParams(
            dimension_semantics=("arbitrary",),
            vmem_limit_bytes=_VMEM_LIMIT),
    )(x_p, g_p, b_p)

    out = pl.pallas_call(
        _scale_shift_kernel,
        out_shape=jax.ShapeDtypeStruct((m_pad, c_pad), jnp.float32),
        grid=grid,
        in_specs=[
            pl.BlockSpec((bm, c_pad), lambda i: (i, 0)),
            pl.BlockSpec((1, c_pad), lambda i: (0, 0)),
            pl.BlockSpec((1, c_pad), lambda i: (0, 0)),
        ],
        out_specs=pl.BlockSpec((bm, c_pad), lambda i: (i, 0)),
        compiler_params=pltpu.CompilerParams(
            dimension_semantics=("parallel",),
            vmem_limit_bytes=_VMEM_LIMIT),
    )(x_p, scale, shift)
    return out[:M, :C]


# ----------------------------------------------------------------------------
# conv / conv-transpose building blocks (NHWC)
# ----------------------------------------------------------------------------
def conv_down_s2(x_nhwc, w, *, pre_act):
    """[LeakyReLU(0.2)?] -> Conv2d(k=4, s=2, p=1, no bias), NHWC.
    w: (inner, Cin, 4, 4) in PyTorch layout.  Returns (N, H/2, W/2, inner).
    The pre-activation is fused in the matmul (lrelu(0)=relu(0)=0, so fusing it
    after the zero spatial padding is exact)."""
    N, H, W, Cin = x_nhwc.shape
    inner = w.shape[0]
    Ho, Wo = H // 2, W // 2
    xp = jnp.pad(x_nhwc, ((0, 0), (1, 1), (1, 1), (0, 0)))
    # TODO(synk): fold this 16-tap gather into the matmul kernel's K axis (tap
    # offsets in the index_map) so the (pixels, 16*Cin) slab never hits HBM.
    taps = [xp[:, kh:kh + 2 * Ho:2, kw:kw + 2 * Wo:2, :]
            for kh in range(4) for kw in range(4)]
    patches = jnp.concatenate(taps, axis=-1).reshape(N * Ho * Wo, 16 * Cin)
    wmat = jnp.transpose(w, (2, 3, 1, 0)).reshape(16 * Cin, inner)
    h = matmul_fused(patches, wmat, pre_act=pre_act)
    return h.reshape(N, Ho, Wo, inner)


def conv_transpose_up(s_nhwc, w, *, bias=None, fuse_bias_tanh=False):
    """ReLU -> ConvTranspose2d(k=4, s=2, p=1) decomposed into 4 output-parity
    phase convolutions (each a K = 4*Cs matmul, lane-dense output planes),
    interleaved with a single reshape — no col2im scatter-adds.
    w: (Cs, outer, 4, 4) in PyTorch layout.  Returns (N, 2H, 2W, outer)."""
    N, Hi, Wi, Cs = s_nhwc.shape
    outer = w.shape[1]
    sp = jnp.pad(s_nhwc, ((0, 0), (1, 1), (1, 1), (0, 0)))
    M = N * Hi * Wi
    phase_rows = []
    for ph in range(2):
        row = []
        for pw in range(2):
            taps = [sp[:, ph + dh:ph + dh + Hi, pw + dw:pw + dw + Wi, :]
                    for dh in range(2) for dw in range(2)]
            a = jnp.concatenate(taps, axis=-1).reshape(M, 4 * Cs)
            # kernel tap feeding output parity (ph, pw) from input offset (dh, dw)
            wp = jnp.concatenate(
                [w[:, :, 3 - ph - 2 * dh, 3 - pw - 2 * dw]
                 for dh in range(2) for dw in range(2)], axis=0)       # (4*Cs, outer)
            out_p = matmul_fused(
                a, wp, pre_act="relu",
                epilogue="bias_tanh" if fuse_bias_tanh else "none",
                bias=bias)
            row.append(out_p.reshape(N, Hi, Wi, outer))
        phase_rows.append(row)
    p = jnp.stack([jnp.stack(r, axis=0) for r in phase_rows], axis=0)  # (2,2,N,Hi,Wi,C)
    p = jnp.transpose(p, (2, 3, 0, 4, 1, 5))                           # (N,Hi,2,Wi,2,C)
    return p.reshape(N, 2 * Hi, 2 * Wi, outer)


# ----------------------------------------------------------------------------
# UnetSkipConnectionBlock forward
# ----------------------------------------------------------------------------
def unet_skip_block_nhwc(params, x, submodule=None):
    """Forward in NHWC (lane-dense channel-last kept between recursive blocks).
    innermost / middle : cat([x, up(sub(down(x)))], channel)
    outermost          : tanh(up(sub(down(x))) + bias)"""
    mode = params["mode"]
    N, H, W, _ = x.shape
    Ho, Wo = H // 2, W // 2

    # down: [LeakyReLU(0.2)]? -> Conv2d(4, s2, p1, no bias) -> [BN]?
    pre = "none" if mode == "outermost" else "lrelu"
    h = conv_down_s2(x, params["down_w"], pre_act=pre)
    if mode == "middle":
        inner = h.shape[-1]
        h = batchnorm_flat(h.reshape(N * Ho * Wo, inner),
                           params["down_gamma"], params["down_beta"]
                           ).reshape(N, Ho, Wo, inner)

    # submodule (recursion)
    s = submodule(h) if submodule is not None else h

    # up: ReLU -> ConvTranspose2d(4, s2, p1) -> {bias + Tanh | BN}
    if mode == "outermost":
        return conv_transpose_up(s, params["up_w"], bias=params["up_bias"],
                                 fuse_bias_tanh=True)
    y = conv_transpose_up(s, params["up_w"])
    outer = y.shape[-1]
    y = batchnorm_flat(y.reshape(N * H * W, outer),
                       params["up_gamma"], params["up_beta"]
                       ).reshape(N, H, W, outer)
    return jnp.concatenate([x, y], axis=-1)          # skip connection


def unet_skip_block(params, x_nchw, submodule=None):
    """NCHW wrapper (PyTorch I/O convention); internals stay NHWC."""
    x = jnp.transpose(x_nchw, (0, 2, 3, 1))
    y = unet_skip_block_nhwc(params, x, submodule=submodule)
    return jnp.transpose(y, (0, 3, 1, 2))


# ----------------------------------------------------------------------------
# Deterministic parameter init (shapes mirror the PyTorch __init__)
# ----------------------------------------------------------------------------
def init_unet_block_params(key, outer_nc, inner_nc, input_nc=None,
                           innermost=False, outermost=False):
    assert not (innermost and outermost)
    if input_nc is None:
        input_nc = outer_nc
    mode = "innermost" if innermost else ("outermost" if outermost else "middle")
    k0, k1, k2 = jax.random.split(key, 3)
    p = {"mode": mode}
    # downconv: Conv2d(input_nc, inner_nc, 4, stride=2, pad=1, bias=False)
    p["down_w"] = jax.random.normal(k0, (inner_nc, input_nc, 4, 4), jnp.float32) \
        * (1.0 / math.sqrt(input_nc * 16))
    # upconv: ConvTranspose2d(up_in, outer_nc, 4, stride=2, pad=1)
    up_in = inner_nc if innermost else inner_nc * 2
    p["up_w"] = jax.random.normal(k1, (up_in, outer_nc, 4, 4), jnp.float32) \
        * (1.0 / math.sqrt(up_in * 16))
    if outermost:
        p["up_bias"] = 0.01 * jax.random.normal(k2, (outer_nc,), jnp.float32)
    else:
        p["up_gamma"] = jnp.ones((outer_nc,), jnp.float32)   # BatchNorm2d defaults
        p["up_beta"] = jnp.zeros((outer_nc,), jnp.float32)
    if mode == "middle":
        p["down_gamma"] = jnp.ones((inner_nc,), jnp.float32)
        p["down_beta"] = jnp.zeros((inner_nc,), jnp.float32)
    return p


# ----------------------------------------------------------------------------
if __name__ == "__main__":
    key = jax.random.PRNGKey(0)
    kx, ki, km, ko = jax.random.split(key, 4)

    # Small 3-level U-Net stack exercising innermost / middle / outermost blocks:
    #   outermost(out=3, inner=8, input_nc=1) -> middle(out=8, inner=16)
    #     -> innermost(out=16, inner=32)
    p_inner = init_unet_block_params(ki, outer_nc=16, inner_nc=32, innermost=True)
    p_mid = init_unet_block_params(km, outer_nc=8, inner_nc=16)
    p_outer = init_unet_block_params(ko, outer_nc=3, inner_nc=8, input_nc=1,
                                     outermost=True)

    # Inner blocks stay NHWC (no layout round-trips between recursion levels).
    innermost_fn = lambda h: unet_skip_block_nhwc(p_inner, h)
    middle_fn = lambda h: unet_skip_block_nhwc(p_mid, h, submodule=innermost_fn)

    x = jax.random.normal(kx, (2, 1, 32, 32), jnp.float32)   # NCHW at the boundary

    fwd = jax.jit(lambda inp: unet_skip_block(p_outer, inp, submodule=middle_fn))
    out = jax.block_until_ready(fwd(x))

    assert out.shape == (2, 3, 32, 32), out.shape
    assert jnp.all(jnp.isfinite(out))
    print("KERNEL_OK")
</pallas_src>

<mosaic_0001>
module attributes {stable_mosaic.version = 11 : i64} {
  func.func @_matmul_kernel(%arg0: i32, %arg1: i32, %arg2: memref<512x128xbf16, #tpu.memory_space<vmem>>, %arg3: memref<128x128xbf16, #tpu.memory_space<vmem>>, %arg4: memref<1x128xf32, #tpu.memory_space<vmem>>, %arg5: memref<512x128xf32, #tpu.memory_space<vmem>>, %arg6: memref<512x128xf32, #tpu.memory_space<vmem>>) attributes {dimension_semantics = [#tpu.dimension_semantics<parallel>, #tpu.dimension_semantics<arbitrary>], iteration_bounds = array<i64: 1, 1>, scalar_prefetch = 0 : i64, scratch_operands = 1 : i64, tpu.core_type = #tpu.core_type<tc>, window_params = [{transform_indices = @transform_0, window_bounds = array<i64: 512, 128>}, {transform_indices = @transform_1, window_bounds = array<i64: 128, 128>}, {pipeline_mode = #tpu.pipeline_mode<synchronous>, transform_indices = @transform_2, window_bounds = array<i64: 1, 128>}, {transform_indices = @transform_3, window_bounds = array<i64: 512, 128>}]} {
    %c0_i32 = arith.constant 0 : i32
    %0 = arith.cmpi eq, %arg1, %c0_i32 : i32
    %1 = arith.extui %0 : i1 to i32
    %c0_i32_0 = arith.constant 0 : i32
    %2 = arith.cmpi ne, %1, %c0_i32_0 : i32
    scf.if %2 {
      %cst_10 = arith.constant 0.000000e+00 : f32
      %12 = vector.broadcast %cst_10 : f32 to vector<512x128xf32>
      %c0_11 = arith.constant 0 : index
      %c0_12 = arith.constant 0 : index
      %13 = vector.load %arg6[%c0_11, %c0_12] : memref<512x128xf32, #tpu.memory_space<vmem>>, vector<512x128xf32>
      tpu.vector_store %arg6[%c0_11, %c0_12], %12 {strides = array<i32>} : memref<512x128xf32, #tpu.memory_space<vmem>>, vector<512x128xf32>,
    } else {
    }
    %c0 = arith.constant 0 : index
    %c0_1 = arith.constant 0 : index
    %3 = vector.load %arg2[%c0, %c0_1] : memref<512x128xbf16, #tpu.memory_space<vmem>>, vector<512x128xbf16>
    %c0_2 = arith.constant 0 : index
    %c0_3 = arith.constant 0 : index
    %4 = vector.load %arg6[%c0_2, %c0_3] : memref<512x128xf32, #tpu.memory_space<vmem>>, vector<512x128xf32>
    %c0_4 = arith.constant 0 : index
    %c0_5 = arith.constant 0 : index
    %5 = vector.load %arg3[%c0_4, %c0_5] : memref<128x128xbf16, #tpu.memory_space<vmem>>, vector<128x128xbf16>
    %cst = arith.constant dense<0.000000e+00> : vector<512x128xf32>
    %6 = tpu.matmul %3, %5, %cst {dimension_numbers = #tpu.dot_dimension_numbers<[1], [0], [0], [1], [0, 0, 1, 1], [], []>} : vector<512x128xbf16>, vector<128x128xbf16>, vector<512x128xf32> -> vector<512x128xf32>
    %7 = arith.addf %4, %6 : vector<512x128xf32>
    %c0_6 = arith.constant 0 : index
    %c0_7 = arith.constant 0 : index
    %8 = vector.load %arg6[%c0_6, %c0_7] : memref<512x128xf32, #tpu.memory_space<vmem>>, vector<512x128xf32>
    tpu.vector_store %arg6[%c0_6, %c0_7], %7 {strides = array<i32>} : memref<512x128xf32, #tpu.memory_space<vmem>>, vector<512x128xf32>,
    %c0_i32_8 = arith.constant 0 : i32
    %9 = arith.cmpi eq, %arg1, %c0_i32_8 : i32
    %10 = arith.extui %9 : i1 to i32
    %c0_i32_9 = arith.constant 0 : i32
    %11 = arith.cmpi ne, %10, %c0_i32_9 : i32
    scf.if %11 {
      %c0_10 = arith.constant 0 : index
      %c0_11 = arith.constant 0 : index
      %12 = vector.load %arg6[%c0_10, %c0_11] : memref<512x128xf32, #tpu.memory_space<vmem>>, vector<512x128xf32>
      %c0_12 = arith.constant 0 : index
      %c0_13 = arith.constant 0 : index
      %13 = vector.load %arg5[%c0_12, %c0_13] : memref<512x128xf32, #tpu.memory_space<vmem>>, vector<512x128xf32>
      tpu.vector_store %arg5[%c0_12, %c0_13], %12 {strides = array<i32>} : memref<512x128xf32, #tpu.memory_space<vmem>>, vector<512x128xf32>,
    } else {
    }
    return
  }
  func.func @transform_0(%arg0: i32, %arg1: i32) -> (i32, i32) {
    %c0_i32 = arith.constant 0 : i32
    return %arg0, %arg1 : i32, i32
  }
  func.func @transform_1(%arg0: i32, %arg1: i32) -> (i32, i32) {
    %c0_i32 = arith.constant 0 : i32
    %c0_i32_0 = arith.constant 0 : i32
    return %arg1, %c0_i32 : i32, i32
  }
  func.func @transform_2(%arg0: i32, %arg1: i32) -> (i32, i32) {
    %c0_i32 = arith.constant 0 : i32
    %c0_i32_0 = arith.constant 0 : i32
    %c0_i32_1 = arith.constant 0 : i32
    return %c0_i32, %c0_i32_0 : i32, i32
  }
  func.func @transform_3(%arg0: i32, %arg1: i32) -> (i32, i32) {
    %c0_i32 = arith.constant 0 : i32
    %c0_i32_0 = arith.constant 0 : i32
    return %arg0, %c0_i32 : i32, i32
  }
}

module attributes {stable_mosaic.version = 11 : i64} {
  func.func @_matmul_kernel(%arg0: i32, %arg1: i32, %arg2: memref<128x128xbf16, #tpu.memory_space<vmem>>, %arg3: memref<128x128xbf16, #tpu.memory_space<vmem>>, %arg4: memref<1x128xf32, #tpu.memory_space<vmem>>, %arg5: memref<128x128xf32, #tpu.memory_space<vmem>>, %arg6: memref<128x128xf32, #tpu.memory_space<vmem>>) attributes {dimension_semantics = [#tpu.dimension_semantics<parallel>, #tpu.dimension_semantics<arbitrary>], iteration_bounds = array<i64: 1, 1>, scalar_prefetch = 0 : i64, scratch_operands = 1 : i64, tpu.core_type = #tpu.core_type<tc>, window_params = [{transform_indices = @transform_0, window_bounds = array<i64: 128, 128>}, {transform_indices = @transform_1, window_bounds = array<i64: 128, 128>}, {pipeline_mode = #tpu.pipeline_mode<synchronous>, transform_indices = @transform_2, window_bounds = array<i64: 1, 128>}, {transform_indices = @transform_3, window_bounds = array<i64: 128, 128>}]} {
    %c0_i32 = arith.constant 0 : i32
    %0 = arith.cmpi eq, %arg1, %c0_i32 : i32
    %1 = arith.extui %0 : i1 to i32
    %c0_i32_0 = arith.constant 0 : i32
    %2 = arith.cmpi ne, %1, %c0_i32_0 : i32
    scf.if %2 {
      %cst_12 = arith.constant 0.000000e+00 : f32
      %17 = vector.broadcast %cst_12 : f32 to vector<128x128xf32>
      %c0_13 = arith.constant 0 : index
      %c0_14 = arith.constant 0 : index
      %18 = vector.load %arg6[%c0_13, %c0_14] : memref<128x128xf32, #tpu.memory_space<vmem>>, vector<128x128xf32>
      tpu.vector_store %arg6[%c0_13, %c0_14], %17 {strides = array<i32>} : memref<128x128xf32, #tpu.memory_space<vmem>>, vector<128x128xf32>,
    } else {
    }
    %c0 = arith.constant 0 : index
    %c0_1 = arith.constant 0 : index
    %3 = vector.load %arg2[%c0, %c0_1] : memref<128x128xbf16, #tpu.memory_space<vmem>>, vector<128x128xbf16>
    %cst = arith.constant 0.000000e+00 : bf16
    %4 = vector.broadcast %cst : bf16 to vector<128x128xbf16>
    %5 = arith.cmpf oge, %3, %4 : vector<128x128xbf16>
    %cst_2 = arith.constant 2.001950e-01 : bf16
    %6 = vector.broadcast %cst_2 : bf16 to vector<128x128xbf16>
    %7 = arith.mulf %6, %3 : vector<128x128xbf16>
    %8 = arith.select %5, %3, %7 : vector<128x128xi1>, vector<128x128xbf16>
    %c0_3 = arith.constant 0 : index
    %c0_4 = arith.constant 0 : index
    %9 = vector.load %arg6[%c0_3, %c0_4] : memref<128x128xf32, #tpu.memory_space<vmem>>, vector<128x128xf32>
    %c0_5 = arith.constant 0 : index
    %c0_6 = arith.constant 0 : index
    %10 = vector.load %arg3[%c0_5, %c0_6] : memref<128x128xbf16, #tpu.memory_space<vmem>>, vector<128x128xbf16>
    %cst_7 = arith.constant dense<0.000000e+00> : vector<128x128xf32>
    %11 = tpu.matmul %8, %10, %cst_7 {dimension_numbers = #tpu.dot_dimension_numbers<[1], [0], [0], [1], [0, 0, 1, 1], [], []>} : vector<128x128xbf16>, vector<128x128xbf16>, vector<128x128xf32> -> vector<128x128xf32>
    %12 = arith.addf %9, %11 : vector<128x128xf32>
    %c0_8 = arith.constant 0 : index
    %c0_9 = arith.constant 0 : index
    %13 = vector.load %arg6[%c0_8, %c0_9] : memref<128x128xf32, #tpu.memory_space<vmem>>, vector<128x128xf32>
    tpu.vector_store %arg6[%c0_8, %c0_9], %12 {strides = array<i32>} : memref<128x128xf32, #tpu.memory_space<vmem>>, vector<128x128xf32>,
    %c0_i32_10 = arith.constant 0 : i32
    %14 = arith.cmpi eq, %arg1, %c0_i32_10 : i32
    %15 = arith.extui %14 : i1 to i32
    %c0_i32_11 = arith.constant 0 : i32
    %16 = arith.cmpi ne, %15, %c0_i32_11 : i32
    scf.if %16 {
      %c0_12 = arith.constant 0 : index
      %c0_13 = arith.constant 0 : index
      %17 = vector.load %arg6[%c0_12, %c0_13] : memref<128x128xf32, #tpu.memory_space<vmem>>, vector<128x128xf32>
      %c0_14 = arith.constant 0 : index
      %c0_15 = arith.constant 0 : index
      %18 = vector.load %arg5[%c0_14, %c0_15] : memref<128x128xf32, #tpu.memory_space<vmem>>, vector<128x128xf32>
      tpu.vector_store %arg5[%c0_14, %c0_15], %17 {strides = array<i32>} : memref<128x128xf32, #tpu.memory_space<vmem>>, vector<128x128xf32>,
    } else {
    }
    return
  }
  func.func @transform_0(%arg0: i32, %arg1: i32) -> (i32, i32) {
    %c0_i32 = arith.constant 0 : i32
    return %arg0, %arg1 : i32, i32
  }
  func.func @transform_1(%arg0: i32, %arg1: i32) -> (i32, i32) {
    %c0_i32 = arith.constant 0 : i32
    %c0_i32_0 = arith.constant 0 : i32
    return %arg1, %c0_i32 : i32, i32
  }
  func.func @transform_2(%arg0: i32, %arg1: i32) -> (i32, i32) {
    %c0_i32 = arith.constant 0 : i32
    %c0_i32_0 = arith.constant 0 : i32
    %c0_i32_1 = arith.constant 0 : i32
    return %c0_i32, %c0_i32_0 : i32, i32
  }
  func.func @transform_3(%arg0: i32, %arg1: i32) -> (i32, i32) {
    %c0_i32 = arith.constant 0 : i32
    %c0_i32_0 = arith.constant 0 : i32
    return %arg0, %c0_i32 : i32, i32
  }
}

module attributes {stable_mosaic.version = 11 : i64} {
  func.func @_bn_stats_kernel(%arg0: i32, %arg1: memref<128x128xf32, #tpu.memory_space<vmem>>, %arg2: memref<1x128xf32, #tpu.memory_space<vmem>>, %arg3: memref<1x128xf32, #tpu.memory_space<vmem>>, %arg4: memref<1x128xf32, #tpu.memory_space<vmem>>, %arg5: memref<1x128xf32, #tpu.memory_space<vmem>>, %arg6: memref<1x128xf32, #tpu.memory_space<vmem>>, %arg7: memref<1x128xf32, #tpu.memory_space<vmem>>) attributes {dimension_semantics = [#tpu.dimension_semantics<arbitrary>], iteration_bounds = array<i64: 1>, scalar_prefetch = 0 : i64, scratch_operands = 2 : i64, tpu.core_type = #tpu.core_type<tc>, window_params = [{transform_indices = @transform_0, window_bounds = array<i64: 128, 128>}, {pipeline_mode = #tpu.pipeline_mode<synchronous>, transform_indices = @transform_1, window_bounds = array<i64: 1, 128>}, {pipeline_mode = #tpu.pipeline_mode<synchronous>, transform_indices = @transform_2, window_bounds = array<i64: 1, 128>}, {pipeline_mode = #tpu.pipeline_mode<synchronous>, transform_indices = @transform_3, window_bounds = array<i64: 1, 128>}, {pipeline_mode = #tpu.pipeline_mode<synchronous>, transform_indices = @transform_4, window_bounds = array<i64: 1, 128>}]} {
    %c0_i32 = arith.constant 0 : i32
    %0 = arith.cmpi eq, %arg0, %c0_i32 : i32
    %1 = arith.extui %0 : i1 to i32
    %c0_i32_0 = arith.constant 0 : i32
    %2 = arith.cmpi ne, %1, %c0_i32_0 : i32
    scf.if %2 {
      %cst_13 = arith.constant 0.000000e+00 : f32
      %18 = vector.broadcast %cst_13 : f32 to vector<1x128xf32>
      %c0_14 = arith.constant 0 : index
      %c0_15 = arith.constant 0 : index
      %19 = vector.load %arg6[%c0_14, %c0_15] : memref<1x128xf32, #tpu.memory_space<vmem>>, vector<1x128xf32>
      tpu.vector_store %arg6[%c0_14, %c0_15], %18 {strides = array<i32>} : memref<1x128xf32, #tpu.memory_space<vmem>>, vector<1x128xf32>,
      %cst_16 = arith.constant 0.000000e+00 : f32
      %20 = vector.broadcast %cst_16 : f32 to vector<1x128xf32>
      %c0_17 = arith.constant 0 : index
      %c0_18 = arith.constant 0 : index
      %21 = vector.load %arg7[%c0_17, %c0_18] : memref<1x128xf32, #tpu.memory_space<vmem>>, vector<1x128xf32>
      tpu.vector_store %arg7[%c0_17, %c0_18], %20 {strides = array<i32>} : memref<1x128xf32, #tpu.memory_space<vmem>>, vector<1x128xf32>,
    } else {
    }
    %c0 = arith.constant 0 : index
    %c0_1 = arith.constant 0 : index
    %3 = vector.load %arg1[%c0, %c0_1] : memref<128x128xf32, #tpu.memory_space<vmem>>, vector<128x128xf32>
    %c0_2 = arith.constant 0 : index
    %c0_3 = arith.constant 0 : index
    %4 = vector.load %arg6[%c0_2, %c0_3] : memref<1x128xf32, #tpu.memory_space<vmem>>, vector<1x128xf32>
    %cst = arith.constant dense<0.000000e+00> : vector<128xf32>
    %5 = vector.multi_reduction <add>, %3, %cst [0] : vector<128x128xf32> to vector<128xf32>
    %6 = vector.shape_cast %5 : vector<128xf32> to vector<1x128xf32>
    %7 = arith.addf %4, %6 : vector<1x128xf32>
    %c0_4 = arith.constant 0 : index
    %c0_5 = arith.constant 0 : index
    %8 = vector.load %arg6[%c0_4, %c0_5] : memref<1x128xf32, #tpu.memory_space<vmem>>, vector<1x128xf32>
    tpu.vector_store %arg6[%c0_4, %c0_5], %7 {strides = array<i32>} : memref<1x128xf32, #tpu.memory_space<vmem>>, vector<1x128xf32>,
    %c0_6 = arith.constant 0 : index
    %c0_7 = arith.constant 0 : index
    %9 = vector.load %arg7[%c0_6, %c0_7] : memref<1x128xf32, #tpu.memory_space<vmem>>, vector<1x128xf32>
    %10 = arith.mulf %3, %3 : vector<128x128xf32>
    %cst_8 = arith.constant dense<0.000000e+00> : vector<128xf32>
    %11 = vector.multi_reduction <add>, %10, %cst_8 [0] : vector<128x128xf32> to vector<128xf32>
    %12 = vector.shape_cast %11 : vector<128xf32> to vector<1x128xf32>
    %13 = arith.addf %9, %12 : vector<1x128xf32>
    %c0_9 = arith.constant 0 : index
    %c0_10 = arith.constant 0 : index
    %14 = vector.load %arg7[%c0_9, %c0_10] : memref<1x128xf32, #tpu.memory_space<vmem>>, vector<1x128xf32>
    tpu.vector_store %arg7[%c0_9, %c0_10], %13 {strides = array<i32>} : memref<1x128xf32, #tpu.memory_space<vmem>>, vector<1x128xf32>,
    %c0_i32_11 = arith.constant 0 : i32
    %15 = arith.cmpi eq, %arg0, %c0_i32_11 : i32
    %16 = arith.extui %15 : i1 to i32
    %c0_i32_12 = arith.constant 0 : i32
    %17 = arith.cmpi ne, %16, %c0_i32_12 : i32
    scf.if %17 {
      %c0_13 = arith.constant 0 : index
      %c0_14 = arith.constant 0 : index
      %18 = vector.load %arg6[%c0_13, %c0_14] : memref<1x128xf32, #tpu.memory_space<vmem>>, vector<1x128xf32>
      %cst_15 = arith.constant 7.812500e-03 : f32
      %19 = vector.broadcast %cst_15 : f32 to vector<1x128xf32>
      %20 = arith.mulf %18, %19 : vector<1x128xf32>
      %c0_16 = arith.constant 0 : index
      %c0_17 = arith.constant 0 : index
      %21 = vector.load %arg7[%c0_16, %c0_17] : memref<1x128xf32, #tpu.memory_space<vmem>>, vector<1x128xf32>
      %cst_18 = arith.constant 7.812500e-03 : f32
      %22 = vector.broadcast %cst_18 : f32 to vector<1x128xf32>
      %23 = arith.mulf %21, %22 : vector<1x128xf32>
      %24 = arith.mulf %20, %20 : vector<1x128xf32>
      %25 = arith.subf %23, %24 : vector<1x128xf32>
      %c0_19 = arith.constant 0 : index
      %c0_20 = arith.constant 0 : index
      %26 = vector.load %arg2[%c0_19, %c0_20] : memref<1x128xf32, #tpu.memory_space<vmem>>, vector<1x128xf32>
      %cst_21 = arith.constant 9.99999974E-6 : f32
      %27 = vector.broadcast %cst_21 : f32 to vector<1x128xf32>
      %28 = arith.addf %25, %27 : vector<1x128xf32>
      %29 = math.rsqrt %28 : vector<1x128xf32>
      %30 = arith.mulf %26, %29 : vector<1x128xf32>
      %c0_22 = arith.constant 0 : index
      %c0_23 = arith.constant 0 : index
      %31 = vector.load %arg4[%c0_22, %c0_23] : memref<1x128xf32, #tpu.memory_space<vmem>>, vector<1x128xf32>
      tpu.vector_store %arg4[%c0_22, %c0_23], %30 {strides = array<i32>} : memref<1x128xf32, #tpu.memory_space<vmem>>, vector<1x128xf32>,
      %c0_24 = arith.constant 0 : index
      %c0_25 = arith.constant 0 : index
      %32 = vector.load %arg3[%c0_24, %c0_25] : memref<1x128xf32, #tpu.memory_space<vmem>>, vector<1x128xf32>
      %33 = arith.mulf %20, %30 : vector<1x128xf32>
      %34 = arith.subf %32, %33 : vector<1x128xf32>
      %c0_26 = arith.constant 0 : index
      %c0_27 = arith.constant 0 : index
      %35 = vector.load %arg5[%c0_26, %c0_27] : memref<1x128xf32, #tpu.memory_space<vmem>>, vector<1x128xf32>
      tpu.vector_store %arg5[%c0_26, %c0_27], %34 {strides = array<i32>} : memref<1x128xf32, #tpu.memory_space<vmem>>, vector<1x128xf32>,
    } else {
    }
    return
  }
  func.func @transform_0(%arg0: i32) -> (i32, i32) {
    %c0_i32 = arith.constant 0 : i32
    %c0_i32_0 = arith.constant 0 : i32
    return %arg0, %c0_i32 : i32, i32
  }
  func.func @transform_1(%arg0: i32) -> (i32, i32) {
    %c0_i32 = arith.constant 0 : i32
    %c0_i32_0 = arith.constant 0 : i32
    %c0_i32_1 = arith.constant 0 : i32
    return %c0_i32, %c0_i32_0 : i32, i32
  }
  func.func @transform_2(%arg0: i32) -> (i32, i32) {
    %c0_i32 = arith.constant 0 : i32
    %c0_i32_0 = arith.constant 0 : i32
    %c0_i32_1 = arith.constant 0 : i32
    return %c0_i32, %c0_i32_0 : i32, i32
  }
  func.func @transform_3(%arg0: i32) -> (i32, i32) {
    %c0_i32 = arith.constant 0 : i32
    %c0_i32_0 = arith.constant 0 : i32
    %c0_i32_1 = arith.constant 0 : i32
    return %c0_i32, %c0_i32_0 : i32, i32
  }
  func.func @transform_4(%arg0: i32) -> (i32, i32) {
    %c0_i32 = arith.constant 0 : i32
    %c0_i32_0 = arith.constant 0 : i32
    %c0_i32_1 = arith.constant 0 : i32
    return %c0_i32, %c0_i32_0 : i32, i32
  }
}

module attributes {stable_mosaic.version = 11 : i64} {
  func.func @_scale_shift_kernel(%arg0: i32, %arg1: memref<128x128xf32, #tpu.memory_space<vmem>>, %arg2: memref<1x128xf32, #tpu.memory_space<vmem>>, %arg3: memref<1x128xf32, #tpu.memory_space<vmem>>, %arg4: memref<128x128xf32, #tpu.memory_space<vmem>>) attributes {dimension_semantics = [#tpu.dimension_semantics<parallel>], iteration_bounds = array<i64: 1>, scalar_prefetch = 0 : i64, scratch_operands = 0 : i64, tpu.core_type = #tpu.core_type<tc>, window_params = [{transform_indices = @transform_0, window_bounds = array<i64: 128, 128>}, {pipeline_mode = #tpu.pipeline_mode<synchronous>, transform_indices = @transform_1, window_bounds = array<i64: 1, 128>}, {pipeline_mode = #tpu.pipeline_mode<synchronous>, transform_indices = @transform_2, window_bounds = array<i64: 1, 128>}, {transform_indices = @transform_3, window_bounds = array<i64: 128, 128>}]} {
    %c0 = arith.constant 0 : index
    %c0_0 = arith.constant 0 : index
    %0 = vector.load %arg1[%c0, %c0_0] : memref<128x128xf32, #tpu.memory_space<vmem>>, vector<128x128xf32>
    %c0_1 = arith.constant 0 : index
    %c0_2 = arith.constant 0 : index
    %1 = vector.load %arg2[%c0_1, %c0_2] : memref<1x128xf32, #tpu.memory_space<vmem>>, vector<1x128xf32>
    %2 = vector.broadcast %1 : vector<1x128xf32> to vector<128x128xf32>
    %3 = arith.mulf %0, %2 : vector<128x128xf32>
    %c0_3 = arith.constant 0 : index
    %c0_4 = arith.constant 0 : index
    %4 = vector.load %arg3[%c0_3, %c0_4] : memref<1x128xf32, #tpu.memory_space<vmem>>, vector<1x128xf32>
    %5 = vector.broadcast %4 : vector<1x128xf32> to vector<128x128xf32>
    %6 = arith.addf %3, %5 : vector<128x128xf32>
    %c0_5 = arith.constant 0 : index
    %c0_6 = arith.constant 0 : index
    %7 = vector.load %arg4[%c0_5, %c0_6] : memref<128x128xf32, #tpu.memory_space<vmem>>, vector<128x128xf32>
    tpu.vector_store %arg4[%c0_5, %c0_6], %6 {strides = array<i32>} : memref<128x128xf32, #tpu.memory_space<vmem>>, vector<128x128xf32>,
    return
  }
  func.func @transform_0(%arg0: i32) -> (i32, i32) {
    %c0_i32 = arith.constant 0 : i32
    %c0_i32_0 = arith.constant 0 : i32
    return %arg0, %c0_i32 : i32, i32
  }
  func.func @transform_1(%arg0: i32) -> (i32, i32) {
    %c0_i32 = arith.constant 0 : i32
    %c0_i32_0 = arith.constant 0 : i32
    %c0_i32_1 = arith.constant 0 : i32
    return %c0_i32, %c0_i32_0 : i32, i32
  }
  func.func @transform_2(%arg0: i32) -> (i32, i32) {
    %c0_i32 = arith.constant 0 : i32
    %c0_i32_0 = arith.constant 0 : i32
    %c0_i32_1 = arith.constant 0 : i32
    return %c0_i32, %c0_i32_0 : i32, i32
  }
  func.func @transform_3(%arg0: i32) -> (i32, i32) {
    %c0_i32 = arith.constant 0 : i32
    %c0_i32_0 = arith.constant 0 : i32
    return %arg0, %c0_i32 : i32, i32
  }
}

module attributes {stable_mosaic.version = 11 : i64} {
  func.func @_matmul_kernel(%arg0: i32, %arg1: i32, %arg2: memref<32x256xbf16, #tpu.memory_space<vmem>>, %arg3: memref<256x128xbf16, #tpu.memory_space<vmem>>, %arg4: memref<1x128xf32, #tpu.memory_space<vmem>>, %arg5: memref<32x128xf32, #tpu.memory_space<vmem>>, %arg6: memref<32x128xf32, #tpu.memory_space<vmem>>) attributes {dimension_semantics = [#tpu.dimension_semantics<parallel>, #tpu.dimension_semantics<arbitrary>], iteration_bounds = array<i64: 1, 1>, scalar_prefetch = 0 : i64, scratch_operands = 1 : i64, tpu.core_type = #tpu.core_type<tc>, window_params = [{transform_indices = @transform_0, window_bounds = array<i64: 32, 256>}, {transform_indices = @transform_1, window_bounds = array<i64: 256, 128>}, {pipeline_mode = #tpu.pipeline_mode<synchronous>, transform_indices = @transform_2, window_bounds = array<i64: 1, 128>}, {transform_indices = @transform_3, window_bounds = array<i64: 32, 128>}]} {
    %c0_i32 = arith.constant 0 : i32
    %0 = arith.cmpi eq, %arg1, %c0_i32 : i32
    %1 = arith.extui %0 : i1 to i32
    %c0_i32_0 = arith.constant 0 : i32
    %2 = arith.cmpi ne, %1, %c0_i32_0 : i32
    scf.if %2 {
      %cst_12 = arith.constant 0.000000e+00 : f32
      %17 = vector.broadcast %cst_12 : f32 to vector<32x128xf32>
      %c0_13 = arith.constant 0 : index
      %c0_14 = arith.constant 0 : index
      %18 = vector.load %arg6[%c0_13, %c0_14] : memref<32x128xf32, #tpu.memory_space<vmem>>, vector<32x128xf32>
      tpu.vector_store %arg6[%c0_13, %c0_14], %17 {strides = array<i32>} : memref<32x128xf32, #tpu.memory_space<vmem>>, vector<32x128xf32>,
    } else {
    }
    %c0 = arith.constant 0 : index
    %c0_1 = arith.constant 0 : index
    %3 = vector.load %arg2[%c0, %c0_1] : memref<32x256xbf16, #tpu.memory_space<vmem>>, vector<32x256xbf16>
    %cst = arith.constant 0.000000e+00 : bf16
    %4 = vector.broadcast %cst : bf16 to vector<32x256xbf16>
    %5 = arith.cmpf oge, %3, %4 : vector<32x256xbf16>
    %cst_2 = arith.constant 2.001950e-01 : bf16
    %6 = vector.broadcast %cst_2 : bf16 to vector<32x256xbf16>
    %7 = arith.mulf %6, %3 : vector<32x256xbf16>
    %8 = arith.select %5, %3, %7 : vector<32x256xi1>, vector<32x256xbf16>
    %c0_3 = arith.constant 0 : index
    %c0_4 = arith.constant 0 : index
    %9 = vector.load %arg6[%c0_3, %c0_4] : memref<32x128xf32, #tpu.memory_space<vmem>>, vector<32x128xf32>
    %c0_5 = arith.constant 0 : index
    %c0_6 = arith.constant 0 : index
    %10 = vector.load %arg3[%c0_5, %c0_6] : memref<256x128xbf16, #tpu.memory_space<vmem>>, vector<256x128xbf16>
    %cst_7 = arith.constant dense<0.000000e+00> : vector<32x128xf32>
    %11 = tpu.matmul %8, %10, %cst_7 {dimension_numbers = #tpu.dot_dimension_numbers<[1], [0], [0], [1], [0, 0, 1, 1], [], []>} : vector<32x256xbf16>, vector<256x128xbf16>, vector<32x128xf32> -> vector<32x128xf32>
    %12 = arith.addf %9, %11 : vector<32x128xf32>
    %c0_8 = arith.constant 0 : index
    %c0_9 = arith.constant 0 : index
    %13 = vector.load %arg6[%c0_8, %c0_9] : memref<32x128xf32, #tpu.memory_space<vmem>>, vector<32x128xf32>
    tpu.vector_store %arg6[%c0_8, %c0_9], %12 {strides = array<i32>} : memref<32x128xf32, #tpu.memory_space<vmem>>, vector<32x128xf32>,
    %c0_i32_10 = arith.constant 0 : i32
    %14 = arith.cmpi eq, %arg1, %c0_i32_10 : i32
    %15 = arith.extui %14 : i1 to i32
    %c0_i32_11 = arith.constant 0 : i32
    %16 = arith.cmpi ne, %15, %c0_i32_11 : i32
    scf.if %16 {
      %c0_12 = arith.constant 0 : index
      %c0_13 = arith.constant 0 : index
      %17 = vector.load %arg6[%c0_12, %c0_13] : memref<32x128xf32, #tpu.memory_space<vmem>>, vector<32x128xf32>
      %c0_14 = arith.constant 0 : index
      %c0_15 = arith.constant 0 : index
      %18 = vector.load %arg5[%c0_14, %c0_15] : memref<32x128xf32, #tpu.memory_space<vmem>>, vector<32x128xf32>
      tpu.vector_store %arg5[%c0_14, %c0_15], %17 {strides = array<i32>} : memref<32x128xf32, #tpu.memory_space<vmem>>, vector<32x128xf32>,
    } else {
    }
    return
  }
  func.func @transform_0(%arg0: i32, %arg1: i32) -> (i32, i32) {
    %c0_i32 = arith.constant 0 : i32
    return %arg0, %arg1 : i32, i32
  }
  func.func @transform_1(%arg0: i32, %arg1: i32) -> (i32, i32) {
    %c0_i32 = arith.constant 0 : i32
    %c0_i32_0 = arith.constant 0 : i32
    return %arg1, %c0_i32 : i32, i32
  }
  func.func @transform_2(%arg0: i32, %arg1: i32) -> (i32, i32) {
    %c0_i32 = arith.constant 0 : i32
    %c0_i32_0 = arith.constant 0 : i32
    %c0_i32_1 = arith.constant 0 : i32
    return %c0_i32, %c0_i32_0 : i32, i32
  }
  func.func @transform_3(%arg0: i32, %arg1: i32) -> (i32, i32) {
    %c0_i32 = arith.constant 0 : i32
    %c0_i32_0 = arith.constant 0 : i32
    return %arg0, %c0_i32 : i32, i32
  }
}

module attributes {stable_mosaic.version = 11 : i64} {
  func.func @_matmul_kernel(%arg0: i32, %arg1: i32, %arg2: memref<32x128xbf16, #tpu.memory_space<vmem>>, %arg3: memref<128x128xbf16, #tpu.memory_space<vmem>>, %arg4: memref<1x128xf32, #tpu.memory_space<vmem>>, %arg5: memref<32x128xf32, #tpu.memory_space<vmem>>, %arg6: memref<32x128xf32, #tpu.memory_space<vmem>>) attributes {dimension_semantics = [#tpu.dimension_semantics<parallel>, #tpu.dimension_semantics<arbitrary>], iteration_bounds = array<i64: 1, 1>, scalar_prefetch = 0 : i64, scratch_operands = 1 : i64, tpu.core_type = #tpu.core_type<tc>, window_params = [{transform_indices = @transform_0, window_bounds = array<i64: 32, 128>}, {transform_indices = @transform_1, window_bounds = array<i64: 128, 128>}, {pipeline_mode = #tpu.pipeline_mode<synchronous>, transform_indices = @transform_2, window_bounds = array<i64: 1, 128>}, {transform_indices = @transform_3, window_bounds = array<i64: 32, 128>}]} {
    %c0_i32 = arith.constant 0 : i32
    %0 = arith.cmpi eq, %arg1, %c0_i32 : i32
    %1 = arith.extui %0 : i1 to i32
    %c0_i32_0 = arith.constant 0 : i32
    %2 = arith.cmpi ne, %1, %c0_i32_0 : i32
    scf.if %2 {
      %cst_11 = arith.constant 0.000000e+00 : f32
      %14 = vector.broadcast %cst_11 : f32 to vector<32x128xf32>
      %c0_12 = arith.constant 0 : index
      %c0_13 = arith.constant 0 : index
      %15 = vector.load %arg6[%c0_12, %c0_13] : memref<32x128xf32, #tpu.memory_space<vmem>>, vector<32x128xf32>
      tpu.vector_store %arg6[%c0_12, %c0_13], %14 {strides = array<i32>} : memref<32x128xf32, #tpu.memory_space<vmem>>, vector<32x128xf32>,
    } else {
    }
    %c0 = arith.constant 0 : index
    %c0_1 = arith.constant 0 : index
    %3 = vector.load %arg2[%c0, %c0_1] : memref<32x128xbf16, #tpu.memory_space<vmem>>, vector<32x128xbf16>
    %cst = arith.constant 0.000000e+00 : bf16
    %4 = vector.broadcast %cst : bf16 to vector<32x128xbf16>
    %5 = arith.maximumf %3, %4 : vector<32x128xbf16>
    %c0_2 = arith.constant 0 : index
    %c0_3 = arith.constant 0 : index
    %6 = vector.load %arg6[%c0_2, %c0_3] : memref<32x128xf32, #tpu.memory_space<vmem>>, vector<32x128xf32>
    %c0_4 = arith.constant 0 : index
    %c0_5 = arith.constant 0 : index
    %7 = vector.load %arg3[%c0_4, %c0_5] : memref<128x128xbf16, #tpu.memory_space<vmem>>, vector<128x128xbf16>
    %cst_6 = arith.constant dense<0.000000e+00> : vector<32x128xf32>
    %8 = tpu.matmul %5, %7, %cst_6 {dimension_numbers = #tpu.dot_dimension_numbers<[1], [0], [0], [1], [0, 0, 1, 1], [], []>} : vector<32x128xbf16>, vector<128x128xbf16>, vector<32x128xf32> -> vector<32x128xf32>
    %9 = arith.addf %6, %8 : vector<32x128xf32>
    %c0_7 = arith.constant 0 : index
    %c0_8 = arith.constant 0 : index
    %10 = vector.load %arg6[%c0_7, %c0_8] : memref<32x128xf32, #tpu.memory_space<vmem>>, vector<32x128xf32>
    tpu.vector_store %arg6[%c0_7, %c0_8], %9 {strides = array<i32>} : memref<32x128xf32, #tpu.memory_space<vmem>>, vector<32x128xf32>,
    %c0_i32_9 = arith.constant 0 : i32
    %11 = arith.cmpi eq, %arg1, %c0_i32_9 : i32
    %12 = arith.extui %11 : i1 to i32
    %c0_i32_10 = arith.constant 0 : i32
    %13 = arith.cmpi ne, %12, %c0_i32_10 : i32
    scf.if %13 {
      %c0_11 = arith.constant 0 : index
      %c0_12 = arith.constant 0 : index
      %14 = vector.load %arg6[%c0_11, %c0_12] : memref<32x128xf32, #tpu.memory_space<vmem>>, vector<32x128xf32>
      %c0_13 = arith.constant 0 : index
      %c0_14 = arith.constant 0 : index
      %15 = vector.load %arg5[%c0_13, %c0_14] : memref<32x128xf32, #tpu.memory_space<vmem>>, vector<32x128xf32>
      tpu.vector_store %arg5[%c0_13, %c0_14], %14 {strides = array<i32>} : memref<32x128xf32, #tpu.memory_space<vmem>>, vector<32x128xf32>,
    } else {
    }
    return
  }
  func.func @transform_0(%arg0: i32, %arg1: i32) -> (i32, i32) {
    %c0_i32 = arith.constant 0 : i32
    return %arg0, %arg1 : i32, i32
  }
  func.func @transform_1(%arg0: i32, %arg1: i32) -> (i32, i32) {
    %c0_i32 = arith.constant 0 : i32
    %c0_i32_0 = arith.constant 0 : i32
    return %arg1, %c0_i32 : i32, i32
  }
  func.func @transform_2(%arg0: i32, %arg1: i32) -> (i32, i32) {
    %c0_i32 = arith.constant 0 : i32
    %c0_i32_0 = arith.constant 0 : i32
    %c0_i32_1 = arith.constant 0 : i32
    return %c0_i32, %c0_i32_0 : i32, i32
  }
  func.func @transform_3(%arg0: i32, %arg1: i32) -> (i32, i32) {
    %c0_i32 = arith.constant 0 : i32
    %c0_i32_0 = arith.constant 0 : i32
    return %arg0, %c0_i32 : i32, i32
  }
}

module attributes {stable_mosaic.version = 11 : i64} {
  func.func @_matmul_kernel(%arg0: i32, %arg1: i32, %arg2: memref<128x128xbf16, #tpu.memory_space<vmem>>, %arg3: memref<128x128xbf16, #tpu.memory_space<vmem>>, %arg4: memref<1x128xf32, #tpu.memory_space<vmem>>, %arg5: memref<128x128xf32, #tpu.memory_space<vmem>>, %arg6: memref<128x128xf32, #tpu.memory_space<vmem>>) attributes {dimension_semantics = [#tpu.dimension_semantics<parallel>, #tpu.dimension_semantics<arbitrary>], iteration_bounds = array<i64: 1, 1>, scalar_prefetch = 0 : i64, scratch_operands = 1 : i64, tpu.core_type = #tpu.core_type<tc>, window_params = [{transform_indices = @transform_0, window_bounds = array<i64: 128, 128>}, {transform_indices = @transform_1, window_bounds = array<i64: 128, 128>}, {pipeline_mode = #tpu.pipeline_mode<synchronous>, transform_indices = @transform_2, window_bounds = array<i64: 1, 128>}, {transform_indices = @transform_3, window_bounds = array<i64: 128, 128>}]} {
    %c0_i32 = arith.constant 0 : i32
    %0 = arith.cmpi eq, %arg1, %c0_i32 : i32
    %1 = arith.extui %0 : i1 to i32
    %c0_i32_0 = arith.constant 0 : i32
    %2 = arith.cmpi ne, %1, %c0_i32_0 : i32
    scf.if %2 {
      %cst_11 = arith.constant 0.000000e+00 : f32
      %14 = vector.broadcast %cst_11 : f32 to vector<128x128xf32>
      %c0_12 = arith.constant 0 : index
      %c0_13 = arith.constant 0 : index
      %15 = vector.load %arg6[%c0_12, %c0_13] : memref<128x128xf32, #tpu.memory_space<vmem>>, vector<128x128xf32>
      tpu.vector_store %arg6[%c0_12, %c0_13], %14 {strides = array<i32>} : memref<128x128xf32, #tpu.memory_space<vmem>>, vector<128x128xf32>,
    } else {
    }
    %c0 = arith.constant 0 : index
    %c0_1 = arith.constant 0 : index
    %3 = vector.load %arg2[%c0, %c0_1] : memref<128x128xbf16, #tpu.memory_space<vmem>>, vector<128x128xbf16>
    %cst = arith.constant 0.000000e+00 : bf16
    %4 = vector.broadcast %cst : bf16 to vector<128x128xbf16>
    %5 = arith.maximumf %3, %4 : vector<128x128xbf16>
    %c0_2 = arith.constant 0 : index
    %c0_3 = arith.constant 0 : index
    %6 = vector.load %arg6[%c0_2, %c0_3] : memref<128x128xf32, #tpu.memory_space<vmem>>, vector<128x128xf32>
    %c0_4 = arith.constant 0 : index
    %c0_5 = arith.constant 0 : index
    %7 = vector.load %arg3[%c0_4, %c0_5] : memref<128x128xbf16, #tpu.memory_space<vmem>>, vector<128x128xbf16>
    %cst_6 = arith.constant dense<0.000000e+00> : vector<128x128xf32>
    %8 = tpu.matmul %5, %7, %cst_6 {dimension_numbers = #tpu.dot_dimension_numbers<[1], [0], [0], [1], [0, 0, 1, 1], [], []>} : vector<128x128xbf16>, vector<128x128xbf16>, vector<128x128xf32> -> vector<128x128xf32>
    %9 = arith.addf %6, %8 : vector<128x128xf32>
    %c0_7 = arith.constant 0 : index
    %c0_8 = arith.constant 0 : index
    %10 = vector.load %arg6[%c0_7, %c0_8] : memref<128x128xf32, #tpu.memory_space<vmem>>, vector<128x128xf32>
    tpu.vector_store %arg6[%c0_7, %c0_8], %9 {strides = array<i32>} : memref<128x128xf32, #tpu.memory_space<vmem>>, vector<128x128xf32>,
    %c0_i32_9 = arith.constant 0 : i32
    %11 = arith.cmpi eq, %arg1, %c0_i32_9 : i32
    %12 = arith.extui %11 : i1 to i32
    %c0_i32_10 = arith.constant 0 : i32
    %13 = arith.cmpi ne, %12, %c0_i32_10 : i32
    scf.if %13 {
      %c0_11 = arith.constant 0 : index
      %c0_12 = arith.constant 0 : index
      %14 = vector.load %arg6[%c0_11, %c0_12] : memref<128x128xf32, #tpu.memory_space<vmem>>, vector<128x128xf32>
      %c0_13 = arith.constant 0 : index
      %c0_14 = arith.constant 0 : index
      %15 = vector.load %arg5[%c0_13, %c0_14] : memref<128x128xf32, #tpu.memory_space<vmem>>, vector<128x128xf32>
      tpu.vector_store %arg5[%c0_13, %c0_14], %14 {strides = array<i32>} : memref<128x128xf32, #tpu.memory_space<vmem>>, vector<128x128xf32>,
    } else {
    }
    return
  }
  func.func @transform_0(%arg0: i32, %arg1: i32) -> (i32, i32) {
    %c0_i32 = arith.constant 0 : i32
    return %arg0, %arg1 : i32, i32
  }
  func.func @transform_1(%arg0: i32, %arg1: i32) -> (i32, i32) {
    %c0_i32 = arith.constant 0 : i32
    %c0_i32_0 = arith.constant 0 : i32
    return %arg1, %c0_i32 : i32, i32
  }
  func.func @transform_2(%arg0: i32, %arg1: i32) -> (i32, i32) {
    %c0_i32 = arith.constant 0 : i32
    %c0_i32_0 = arith.constant 0 : i32
    %c0_i32_1 = arith.constant 0 : i32
    return %c0_i32, %c0_i32_0 : i32, i32
  }
  func.func @transform_3(%arg0: i32, %arg1: i32) -> (i32, i32) {
    %c0_i32 = arith.constant 0 : i32
    %c0_i32_0 = arith.constant 0 : i32
    return %arg0, %c0_i32 : i32, i32
  }
}

module attributes {stable_mosaic.version = 11 : i64} {
  func.func @_bn_stats_kernel(%arg0: i32, %arg1: memref<512x128xf32, #tpu.memory_space<vmem>>, %arg2: memref<1x128xf32, #tpu.memory_space<vmem>>, %arg3: memref<1x128xf32, #tpu.memory_space<vmem>>, %arg4: memref<1x128xf32, #tpu.memory_space<vmem>>, %arg5: memref<1x128xf32, #tpu.memory_space<vmem>>, %arg6: memref<1x128xf32, #tpu.memory_space<vmem>>, %arg7: memref<1x128xf32, #tpu.memory_space<vmem>>) attributes {dimension_semantics = [#tpu.dimension_semantics<arbitrary>], iteration_bounds = array<i64: 1>, scalar_prefetch = 0 : i64, scratch_operands = 2 : i64, tpu.core_type = #tpu.core_type<tc>, window_params = [{transform_indices = @transform_0, window_bounds = array<i64: 512, 128>}, {pipeline_mode = #tpu.pipeline_mode<synchronous>, transform_indices = @transform_1, window_bounds = array<i64: 1, 128>}, {pipeline_mode = #tpu.pipeline_mode<synchronous>, transform_indices = @transform_2, window_bounds = array<i64: 1, 128>}, {pipeline_mode = #tpu.pipeline_mode<synchronous>, transform_indices = @transform_3, window_bounds = array<i64: 1, 128>}, {pipeline_mode = #tpu.pipeline_mode<synchronous>, transform_indices = @transform_4, window_bounds = array<i64: 1, 128>}]} {
    %c0_i32 = arith.constant 0 : i32
    %0 = arith.cmpi eq, %arg0, %c0_i32 : i32
    %1 = arith.extui %0 : i1 to i32
    %c0_i32_0 = arith.constant 0 : i32
    %2 = arith.cmpi ne, %1, %c0_i32_0 : i32
    scf.if %2 {
      %cst_13 = arith.constant 0.000000e+00 : f32
      %18 = vector.broadcast %cst_13 : f32 to vector<1x128xf32>
      %c0_14 = arith.constant 0 : index
      %c0_15 = arith.constant 0 : index
      %19 = vector.load %arg6[%c0_14, %c0_15] : memref<1x128xf32, #tpu.memory_space<vmem>>, vector<1x128xf32>
      tpu.vector_store %arg6[%c0_14, %c0_15], %18 {strides = array<i32>} : memref<1x128xf32, #tpu.memory_space<vmem>>, vector<1x128xf32>,
      %cst_16 = arith.constant 0.000000e+00 : f32
      %20 = vector.broadcast %cst_16 : f32 to vector<1x128xf32>
      %c0_17 = arith.constant 0 : index
      %c0_18 = arith.constant 0 : index
      %21 = vector.load %arg7[%c0_17, %c0_18] : memref<1x128xf32, #tpu.memory_space<vmem>>, vector<1x128xf32>
      tpu.vector_store %arg7[%c0_17, %c0_18], %20 {strides = array<i32>} : memref<1x128xf32, #tpu.memory_space<vmem>>, vector<1x128xf32>,
    } else {
    }
    %c0 = arith.constant 0 : index
    %c0_1 = arith.constant 0 : index
    %3 = vector.load %arg1[%c0, %c0_1] : memref<512x128xf32, #tpu.memory_space<vmem>>, vector<512x128xf32>
    %c0_2 = arith.constant 0 : index
    %c0_3 = arith.constant 0 : index
    %4 = vector.load %arg6[%c0_2, %c0_3] : memref<1x128xf32, #tpu.memory_space<vmem>>, vector<1x128xf32>
    %cst = arith.constant dense<0.000000e+00> : vector<128xf32>
    %5 = vector.multi_reduction <add>, %3, %cst [0] : vector<512x128xf32> to vector<128xf32>
    %6 = vector.shape_cast %5 : vector<128xf32> to vector<1x128xf32>
    %7 = arith.addf %4, %6 : vector<1x128xf32>
    %c0_4 = arith.constant 0 : index
    %c0_5 = arith.constant 0 : index
    %8 = vector.load %arg6[%c0_4, %c0_5] : memref<1x128xf32, #tpu.memory_space<vmem>>, vector<1x128xf32>
    tpu.vector_store %arg6[%c0_4, %c0_5], %7 {strides = array<i32>} : memref<1x128xf32, #tpu.memory_space<vmem>>, vector<1x128xf32>,
    %c0_6 = arith.constant 0 : index
    %c0_7 = arith.constant 0 : index
    %9 = vector.load %arg7[%c0_6, %c0_7] : memref<1x128xf32, #tpu.memory_space<vmem>>, vector<1x128xf32>
    %10 = arith.mulf %3, %3 : vector<512x128xf32>
    %cst_8 = arith.constant dense<0.000000e+00> : vector<128xf32>
    %11 = vector.multi_reduction <add>, %10, %cst_8 [0] : vector<512x128xf32> to vector<128xf32>
    %12 = vector.shape_cast %11 : vector<128xf32> to vector<1x128xf32>
    %13 = arith.addf %9, %12 : vector<1x128xf32>
    %c0_9 = arith.constant 0 : index
    %c0_10 = arith.constant 0 : index
    %14 = vector.load %arg7[%c0_9, %c0_10] : memref<1x128xf32, #tpu.memory_space<vmem>>, vector<1x128xf32>
    tpu.vector_store %arg7[%c0_9, %c0_10], %13 {strides = array<i32>} : memref<1x128xf32, #tpu.memory_space<vmem>>, vector<1x128xf32>,
    %c0_i32_11 = arith.constant 0 : i32
    %15 = arith.cmpi eq, %arg0, %c0_i32_11 : i32
    %16 = arith.extui %15 : i1 to i32
    %c0_i32_12 = arith.constant 0 : i32
    %17 = arith.cmpi ne, %16, %c0_i32_12 : i32
    scf.if %17 {
      %c0_13 = arith.constant 0 : index
      %c0_14 = arith.constant 0 : index
      %18 = vector.load %arg6[%c0_13, %c0_14] : memref<1x128xf32, #tpu.memory_space<vmem>>, vector<1x128xf32>
      %cst_15 = arith.constant 0.001953125 : f32
      %19 = vector.broadcast %cst_15 : f32 to vector<1x128xf32>
      %20 = arith.mulf %18, %19 : vector<1x128xf32>
      %c0_16 = arith.constant 0 : index
      %c0_17 = arith.constant 0 : index
      %21 = vector.load %arg7[%c0_16, %c0_17] : memref<1x128xf32, #tpu.memory_space<vmem>>, vector<1x128xf32>
      %cst_18 = arith.constant 0.001953125 : f32
      %22 = vector.broadcast %cst_18 : f32 to vector<1x128xf32>
      %23 = arith.mulf %21, %22 : vector<1x128xf32>
      %24 = arith.mulf %20, %20 : vector<1x128xf32>
      %25 = arith.subf %23, %24 : vector<1x128xf32>
      %c0_19 = arith.constant 0 : index
      %c0_20 = arith.constant 0 : index
      %26 = vector.load %arg2[%c0_19, %c0_20] : memref<1x128xf32, #tpu.memory_space<vmem>>, vector<1x128xf32>
      %cst_21 = arith.constant 9.99999974E-6 : f32
      %27 = vector.broadcast %cst_21 : f32 to vector<1x128xf32>
      %28 = arith.addf %25, %27 : vector<1x128xf32>
      %29 = math.rsqrt %28 : vector<1x128xf32>
      %30 = arith.mulf %26, %29 : vector<1x128xf32>
      %c0_22 = arith.constant 0 : index
      %c0_23 = arith.constant 0 : index
      %31 = vector.load %arg4[%c0_22, %c0_23] : memref<1x128xf32, #tpu.memory_space<vmem>>, vector<1x128xf32>
      tpu.vector_store %arg4[%c0_22, %c0_23], %30 {strides = array<i32>} : memref<1x128xf32, #tpu.memory_space<vmem>>, vector<1x128xf32>,
      %c0_24 = arith.constant 0 : index
      %c0_25 = arith.constant 0 : index
      %32 = vector.load %arg3[%c0_24, %c0_25] : memref<1x128xf32, #tpu.memory_space<vmem>>, vector<1x128xf32>
      %33 = arith.mulf %20, %30 : vector<1x128xf32>
      %34 = arith.subf %32, %33 : vector<1x128xf32>
      %c0_26 = arith.constant 0 : index
      %c0_27 = arith.constant 0 : index
      %35 = vector.load %arg5[%c0_26, %c0_27] : memref<1x128xf32, #tpu.memory_space<vmem>>, vector<1x128xf32>
      tpu.vector_store %arg5[%c0_26, %c0_27], %34 {strides = array<i32>} : memref<1x128xf32, #tpu.memory_space<vmem>>, vector<1x128xf32>,
    } else {
    }
    return
  }
  func.func @transform_0(%arg0: i32) -> (i32, i32) {
    %c0_i32 = arith.constant 0 : i32
    %c0_i32_0 = arith.constant 0 : i32
    return %arg0, %c0_i32 : i32, i32
  }
  func.func @transform_1(%arg0: i32) -> (i32, i32) {
    %c0_i32 = arith.constant 0 : i32
    %c0_i32_0 = arith.constant 0 : i32
    %c0_i32_1 = arith.constant 0 : i32
    return %c0_i32, %c0_i32_0 : i32, i32
  }
  func.func @transform_2(%arg0: i32) -> (i32, i32) {
    %c0_i32 = arith.constant 0 : i32
    %c0_i32_0 = arith.constant 0 : i32
    %c0_i32_1 = arith.constant 0 : i32
    return %c0_i32, %c0_i32_0 : i32, i32
  }
  func.func @transform_3(%arg0: i32) -> (i32, i32) {
    %c0_i32 = arith.constant 0 : i32
    %c0_i32_0 = arith.constant 0 : i32
    %c0_i32_1 = arith.constant 0 : i32
    return %c0_i32, %c0_i32_0 : i32, i32
  }
  func.func @transform_4(%arg0: i32) -> (i32, i32) {
    %c0_i32 = arith.constant 0 : i32
    %c0_i32_0 = arith.constant 0 : i32
    %c0_i32_1 = arith.constant 0 : i32
    return %c0_i32, %c0_i32_0 : i32, i32
  }
}

module attributes {stable_mosaic.version = 11 : i64} {
  func.func @_scale_shift_kernel(%arg0: i32, %arg1: memref<512x128xf32, #tpu.memory_space<vmem>>, %arg2: memref<1x128xf32, #tpu.memory_space<vmem>>, %arg3: memref<1x128xf32, #tpu.memory_space<vmem>>, %arg4: memref<512x128xf32, #tpu.memory_space<vmem>>) attributes {dimension_semantics = [#tpu.dimension_semantics<parallel>], iteration_bounds = array<i64: 1>, scalar_prefetch = 0 : i64, scratch_operands = 0 : i64, tpu.core_type = #tpu.core_type<tc>, window_params = [{transform_indices = @transform_0, window_bounds = array<i64: 512, 128>}, {pipeline_mode = #tpu.pipeline_mode<synchronous>, transform_indices = @transform_1, window_bounds = array<i64: 1, 128>}, {pipeline_mode = #tpu.pipeline_mode<synchronous>, transform_indices = @transform_2, window_bounds = array<i64: 1, 128>}, {transform_indices = @transform_3, window_bounds = array<i64: 512, 128>}]} {
    %c0 = arith.constant 0 : index
    %c0_0 = arith.constant 0 : index
    %0 = vector.load %arg1[%c0, %c0_0] : memref<512x128xf32, #tpu.memory_space<vmem>>, vector<512x128xf32>
    %c0_1 = arith.constant 0 : index
    %c0_2 = arith.constant 0 : index
    %1 = vector.load %arg2[%c0_1, %c0_2] : memref<1x128xf32, #tpu.memory_space<vmem>>, vector<1x128xf32>
    %2 = vector.broadcast %1 : vector<1x128xf32> to vector<512x128xf32>
    %3 = arith.mulf %0, %2 : vector<512x128xf32>
    %c0_3 = arith.constant 0 : index
    %c0_4 = arith.constant 0 : index
    %4 = vector.load %arg3[%c0_3, %c0_4] : memref<1x128xf32, #tpu.memory_space<vmem>>, vector<1x128xf32>
    %5 = vector.broadcast %4 : vector<1x128xf32> to vector<512x128xf32>
    %6 = arith.addf %3, %5 : vector<512x128xf32>
    %c0_5 = arith.constant 0 : index
    %c0_6 = arith.constant 0 : index
    %7 = vector.load %arg4[%c0_5, %c0_6] : memref<512x128xf32, #tpu.memory_space<vmem>>, vector<512x128xf32>
    tpu.vector_store %arg4[%c0_5, %c0_6], %6 {strides = array<i32>} : memref<512x128xf32, #tpu.memory_space<vmem>>, vector<512x128xf32>,
    return
  }
  func.func @transform_0(%arg0: i32) -> (i32, i32) {
    %c0_i32 = arith.constant 0 : i32
    %c0_i32_0 = arith.constant 0 : i32
    return %arg0, %c0_i32 : i32, i32
  }
  func.func @transform_1(%arg0: i32) -> (i32, i32) {
    %c0_i32 = arith.constant 0 : i32
    %c0_i32_0 = arith.constant 0 : i32
    %c0_i32_1 = arith.constant 0 : i32
    return %c0_i32, %c0_i32_0 : i32, i32
  }
  func.func @transform_2(%arg0: i32) -> (i32, i32) {
    %c0_i32 = arith.constant 0 : i32
    %c0_i32_0 = arith.constant 0 : i32
    %c0_i32_1 = arith.constant 0 : i32
    return %c0_i32, %c0_i32_0 : i32, i32
  }
  func.func @transform_3(%arg0: i32) -> (i32, i32) {
    %c0_i32 = arith.constant 0 : i32
    %c0_i32_0 = arith.constant 0 : i32
    return %arg0, %c0_i32 : i32, i32
  }
}

module attributes {stable_mosaic.version = 11 : i64} {
  func.func @_matmul_kernel(%arg0: i32, %arg1: i32, %arg2: memref<512x128xbf16, #tpu.memory_space<vmem>>, %arg3: memref<128x128xbf16, #tpu.memory_space<vmem>>, %arg4: memref<1x128xf32, #tpu.memory_space<vmem>>, %arg5: memref<512x128xf32, #tpu.memory_space<vmem>>, %arg6: memref<512x128xf32, #tpu.memory_space<vmem>>) attributes {dimension_semantics = [#tpu.dimension_semantics<parallel>, #tpu.dimension_semantics<arbitrary>], iteration_bounds = array<i64: 1, 1>, scalar_prefetch = 0 : i64, scratch_operands = 1 : i64, tpu.core_type = #tpu.core_type<tc>, window_params = [{transform_indices = @transform_0, window_bounds = array<i64: 512, 128>}, {transform_indices = @transform_1, window_bounds = array<i64: 128, 128>}, {pipeline_mode = #tpu.pipeline_mode<synchronous>, transform_indices = @transform_2, window_bounds = array<i64: 1, 128>}, {transform_indices = @transform_3, window_bounds = array<i64: 512, 128>}]} {
    %c0_i32 = arith.constant 0 : i32
    %0 = arith.cmpi eq, %arg1, %c0_i32 : i32
    %1 = arith.extui %0 : i1 to i32
    %c0_i32_0 = arith.constant 0 : i32
    %2 = arith.cmpi ne, %1, %c0_i32_0 : i32
    scf.if %2 {
      %cst_11 = arith.constant 0.000000e+00 : f32
      %14 = vector.broadcast %cst_11 : f32 to vector<512x128xf32>
      %c0_12 = arith.constant 0 : index
      %c0_13 = arith.constant 0 : index
      %15 = vector.load %arg6[%c0_12, %c0_13] : memref<512x128xf32, #tpu.memory_space<vmem>>, vector<512x128xf32>
      tpu.vector_store %arg6[%c0_12, %c0_13], %14 {strides = array<i32>} : memref<512x128xf32, #tpu.memory_space<vmem>>, vector<512x128xf32>,
    } else {
    }
    %c0 = arith.constant 0 : index
    %c0_1 = arith.constant 0 : index
    %3 = vector.load %arg2[%c0, %c0_1] : memref<512x128xbf16, #tpu.memory_space<vmem>>, vector<512x128xbf16>
    %cst = arith.constant 0.000000e+00 : bf16
    %4 = vector.broadcast %cst : bf16 to vector<512x128xbf16>
    %5 = arith.maximumf %3, %4 : vector<512x128xbf16>
    %c0_2 = arith.constant 0 : index
    %c0_3 = arith.constant 0 : index
    %6 = vector.load %arg6[%c0_2, %c0_3] : memref<512x128xf32, #tpu.memory_space<vmem>>, vector<512x128xf32>
    %c0_4 = arith.constant 0 : index
    %c0_5 = arith.constant 0 : index
    %7 = vector.load %arg3[%c0_4, %c0_5] : memref<128x128xbf16, #tpu.memory_space<vmem>>, vector<128x128xbf16>
    %cst_6 = arith.constant dense<0.000000e+00> : vector<512x128xf32>
    %8 = tpu.matmul %5, %7, %cst_6 {dimension_numbers = #tpu.dot_dimension_numbers<[1], [0], [0], [1], [0, 0, 1, 1], [], []>} : vector<512x128xbf16>, vector<128x128xbf16>, vector<512x128xf32> -> vector<512x128xf32>
    %9 = arith.addf %6, %8 : vector<512x128xf32>
    %c0_7 = arith.constant 0 : index
    %c0_8 = arith.constant 0 : index
    %10 = vector.load %arg6[%c0_7, %c0_8] : memref<512x128xf32, #tpu.memory_space<vmem>>, vector<512x128xf32>
    tpu.vector_store %arg6[%c0_7, %c0_8], %9 {strides = array<i32>} : memref<512x128xf32, #tpu.memory_space<vmem>>, vector<512x128xf32>,
    %c0_i32_9 = arith.constant 0 : i32
    %11 = arith.cmpi eq, %arg1, %c0_i32_9 : i32
    %12 = arith.extui %11 : i1 to i32
    %c0_i32_10 = arith.constant 0 : i32
    %13 = arith.cmpi ne, %12, %c0_i32_10 : i32
    scf.if %13 {
      %c0_11 = arith.constant 0 : index
      %c0_12 = arith.constant 0 : index
      %14 = vector.load %arg6[%c0_11, %c0_12] : memref<512x128xf32, #tpu.memory_space<vmem>>, vector<512x128xf32>
      %c0_13 = arith.constant 0 : index
      %c0_14 = arith.constant 0 : index
      %15 = vector.load %arg4[%c0_13, %c0_14] : memref<1x128xf32, #tpu.memory_space<vmem>>, vector<1x128xf32>
      %16 = vector.broadcast %15 : vector<1x128xf32> to vector<512x128xf32>
      %17 = arith.addf %14, %16 : vector<512x128xf32>
      %18 = math.tanh %17 : vector<512x128xf32>
      %c0_15 = arith.constant 0 : index
      %c0_16 = arith.constant 0 : index
      %19 = vector.load %arg5[%c0_15, %c0_16] : memref<512x128xf32, #tpu.memory_space<vmem>>, vector<512x128xf32>
      tpu.vector_store %arg5[%c0_15, %c0_16], %18 {strides = array<i32>} : memref<512x128xf32, #tpu.memory_space<vmem>>, vector<512x128xf32>,
    } else {
    }
    return
  }
  func.func @transform_0(%arg0: i32, %arg1: i32) -> (i32, i32) {
    %c0_i32 = arith.constant 0 : i32
    return %arg0, %arg1 : i32, i32
  }
  func.func @transform_1(%arg0: i32, %arg1: i32) -> (i32, i32) {
    %c0_i32 = arith.constant 0 : i32
    %c0_i32_0 = arith.constant 0 : i32
    return %arg1, %c0_i32 : i32, i32
  }
  func.func @transform_2(%arg0: i32, %arg1: i32) -> (i32, i32) {
    %c0_i32 = arith.constant 0 : i32
    %c0_i32_0 = arith.constant 0 : i32
    %c0_i32_1 = arith.constant 0 : i32
    return %c0_i32, %c0_i32_0 : i32, i32
  }
  func.func @transform_3(%arg0: i32, %arg1: i32) -> (i32, i32) {
    %c0_i32 = arith.constant 0 : i32
    %c0_i32_0 = arith.constant 0 : i32
    return %arg0, %c0_i32 : i32, i32
  }
}

</mosaic_0001>

<llo_original>
// kernel: _lambda_.21
$region0: #{_lambda_.21}
  #allocation0 [shape = 'u32[]', space=smem, size = 0x4, offset = 0x4, fixed_abs, tag = 'smem constant byte address 0x4 - core index']
  #allocation1 [shape = 'u32[144,128]{1,0:T(1,128)}', space=vmem, size = 0x12000, scoped, tag = 'internal scratch']
  #allocation2 [shape = 'f32[512,128]{1,0:T(8,128)}', space=vmem, size = 0x40000, scoped, tag = 'scratch operand']
  %s0 = inlined_call_operand.vmem [shape: bf16[512,128], index: 0, kind: input, shape index: {}]
  %s1 = inlined_call_operand.hbm [shape: bf16[128,128], index: 1, kind: input, shape index: {}]
  %s2 = inlined_call_operand.vmem [shape: f32[1,128], index: 2, kind: input, shape index: {}]
  %s3 = inlined_call_operand.vmem [shape: f32[512,128], index: 3, kind: output, shape index: {}]
  %s4 = sld [smem:[#allocation0]]
  $region34: #{_lambda_.21} parent=0
    _
  %s6 = ssub.s32 1, %s4
  %s7 = scalar_select 0, %s6, %s4
  $region1: #{_lambda_.21} parent=0
    #allocation3 [shape = 'u8[32768]{0}', space=vmem, size = 0x8000, scoped, tag = 'input window, operand 1, single buffered']
    #allocation4 [shape = 's32[1]{0}', space=sflag, size = 0x4, scoped, tag = 'scoped memory for _lambda_.21']
    %8 = vsyncpa [#allocation4], 0
    // Predicated region
    $region2: #{_lambda_.21} parent=1 // pred_check
      _
    $region3: #{_lambda_.21} parent=1 // pred_check_branch
      %10 = sbr.rel (0) target = $region5
    $region4: #{_lambda_.21} parent=1 // pred_region
      _
    $region5: #{_lambda_.21} parent=1 // pred_fallthru
      _
    // Predicated region
    $region6: #{_lambda_.21} parent=1 // pred_check
      _
    $region7: #{_lambda_.21} parent=1 // pred_check_branch
      %12 = sbr.rel (0) target = $region9
    $region8: #{_lambda_.21} parent=1 // pred_region
      %s14 = ssub.s32 1024, 1024
      %15 = vsyncadd [#allocation4], %s14
      %s16 = sshll.u32 [#allocation3], 4
      %s17 = int_to_ptr.vmem [resolvable:$true] %s16
      %22 = dma.hbm_to_vmem [thread:$0]  %s1, 1024, %s17, [#allocation4], 64, 64, 4
    $region9: #{_lambda_.21} parent=1 // pred_fallthru
      _
    // Predicated region
    $region10: #{_lambda_.21} parent=1 // pred_check
      _
    $region11: #{_lambda_.21} parent=1 // pred_check_branch
      %24 = sbr.rel (0) target = $region13
    $region12: #{_lambda_.21} parent=1 // pred_region
      _
    $region13: #{_lambda_.21} parent=1 // pred_fallthru
      _
    // Predicated region
    $region14: #{_lambda_.21} parent=1 // pred_check
      _
    $region15: #{_lambda_.21} parent=1 // pred_check_branch
      %26 = sbr.rel (0) target = $region17
    $region16: #{_lambda_.21} parent=1 // pred_region
      %27 = dma.done [#allocation4], 1024
    $region17: #{_lambda_.21} parent=1 // pred_fallthru
      _
    %p29 = scmp.eq.s32.totalorder 0, 0
    // Predicated region
    $region18: #{_lambda_.21} parent=1 // pred_check
      %p30 = pneg %p29
    $region19: #{_lambda_.21} parent=1 // pred_check_branch
      %32 = sbr.rel (%p30) target = $region21
    $region20: #{_lambda_.21} parent=1 // pred_region
      %33 = vst [vmem:[#allocation2] sm:$0xff] 0.0
      %34 = vst [vmem:[#allocation2 + $0x8] sm:$0xff] 0.0
      %35 = vst [vmem:[#allocation2 + $0x10] sm:$0xff] 0.0
      %36 = vst [vmem:[#allocation2 + $0x18] sm:$0xff] 0.0
      %37 = vst [vmem:[#allocation2 + $0x20] sm:$0xff] 0.0
      %38 = vst [vmem:[#allocation2 + $0x28] sm:$0xff] 0.0
      %39 = vst [vmem:[#allocation2 + $0x30] sm:$0xff] 0.0
      %40 = vst [vmem:[#allocation2 + $0x38] sm:$0xff] 0.0
      %41 = vst [vmem:[#allocation2 + $0x40] sm:$0xff] 0.0
      %42 = vst [vmem:[#allocation2 + $0x48] sm:$0xff] 0.0
      %43 = vst [vmem:[#allocation2 + $0x50] sm:$0xff] 0.0
      %44 = vst [vmem:[#allocation2 + $0x58] sm:$0xff] 0.0
      %45 = vst [vmem:[#allocation2 + $0x60] sm:$0xff] 0.0
      %46 = vst [vmem:[#allocation2 + $0x68] sm:$0xff] 0.0
      %47 = vst [vmem:[#allocation2 + $0x70] sm:$0xff] 0.0
      %48 = vst [vmem:[#allocation2 + $0x78] sm:$0xff] 0.0
      %49 = vst [vmem:[#allocation2 + $0x80] sm:$0xff] 0.0
      %50 = vst [vmem:[#allocation2 + $0x88] sm:$0xff] 0.0
      %51 = vst [vmem:[#allocation2 + $0x90] sm:$0xff] 0.0
      %52 = vst [vmem:[#allocation2 + $0x98] sm:$0xff] 0.0
      %53 = vst [vmem:[#allocation2 + $0xa0] sm:$0xff] 0.0
      %54 = vst [vmem:[#allocation2 + $0xa8] sm:$0xff] 0.0
      %55 = vst [vmem:[#allocation2 + $0xb0] sm:$0xff] 0.0
      %56 = vst [vmem:[#allocation2 + $0xb8] sm:$0xff] 0.0
      %57 = vst [vmem:[#allocation2 + $0xc0] sm:$0xff] 0.0
      %58 = vst [vmem:[#allocation2 + $0xc8] sm:$0xff] 0.0
      %59 = vst [vmem:[#allocation2 + $0xd0] sm:$0xff] 0.0
      %60 = vst [vmem:[#allocation2 + $0xd8] sm:$0xff] 0.0
      %61 = vst [vmem:[#allocation2 + $0xe0] sm:$0xff] 0.0
      %62 = vst [vmem:[#allocation2 + $0xe8] sm:$0xff] 0.0
      %63 = vst [vmem:[#allocation2 + $0xf0] sm:$0xff] 0.0
      %64 = vst [vmem:[#allocation2 + $0xf8] sm:$0xff] 0.0
      %65 = vst [vmem:[#allocation2 + $0x100] sm:$0xff] 0.0
      %66 = vst [vmem:[#allocation2 + $0x108] sm:$0xff] 0.0
      %67 = vst [vmem:[#allocation2 + $0x110] sm:$0xff] 0.0
      %68 = vst [vmem:[#allocation2 + $0x118] sm:$0xff] 0.0
      %69 = vst [vmem:[#allocation2 + $0x120] sm:$0xff] 0.0
      %70 = vst [vmem:[#allocation2 + $0x128] sm:$0xff] 0.0
      %71 = vst [vmem:[#allocation2 + $0x130] sm:$0xff] 0.0
      %72 = vst [vmem:[#allocation2 + $0x138] sm:$0xff] 0.0
      %73 = vst [vmem:[#allocation2 + $0x140] sm:$0xff] 0.0
      %74 = vst [vmem:[#allocation2 + $0x148] sm:$0xff] 0.0
      %75 = vst [vmem:[#allocation2 + $0x150] sm:$0xff] 0.0
      %76 = vst [vmem:[#allocation2 + $0x158] sm:$0xff] 0.0
      %77 = vst [vmem:[#allocation2 + $0x160] sm:$0xff] 0.0
      %78 = vst [vmem:[#allocation2 + $0x168] sm:$0xff] 0.0
      %79 = vst [vmem:[#allocation2 + $0x170] sm:$0xff] 0.0
      %80 = vst [vmem:[#allocation2 + $0x178] sm:$0xff] 0.0
      %81 = vst [vmem:[#allocation2 + $0x180] sm:$0xff] 0.0
      %82 = vst [vmem:[#allocation2 + $0x188] sm:$0xff] 0.0
      %83 = vst [vmem:[#allocation2 + $0x190] sm:$0xff] 0.0
      %84 = vst [vmem:[#allocation2 + $0x198] sm:$0xff] 0.0
      %85 = vst [vmem:[#allocation2 + $0x1a0] sm:$0xff] 0.0
      %86 = vst [vmem:[#allocation2 + $0x1a8] sm:$0xff] 0.0
      %87 = vst [vmem:[#allocation2 + $0x1b0] sm:$0xff] 0.0
      %88 = vst [vmem:[#allocation2 + $0x1b8] sm:$0xff] 0.0
      %89 = vst [vmem:[#allocation2 + $0x1c0] sm:$0xff] 0.0
      %90 = vst [vmem:[#allocation2 + $0x1c8] sm:$0xff] 0.0
      %91 = vst [vmem:[#allocation2 + $0x1d0] sm:$0xff] 0.0
      %92 = vst [vmem:[#allocation2 + $0x1d8] sm:$0xff] 0.0
      %93 = vst [vmem:[#allocation2 + $0x1e0] sm:$0xff] 0.0
      %94 = vst [vmem:[#allocation2 + $0x1e8] sm:$0xff] 0.0
      %95 = vst [vmem:[#allocation2 + $0x1f0] sm:$0xff] 0.0
      %96 = vst [vmem:[#allocation2 + $0x1f8] sm:$0xff] 0.0
    $region21: #{_lambda_.21} parent=1 // pred_fallthru
      _
    %v97 = vld [vmem:[%s0] sm:$0xf]
    %v98 = vld [vmem:[%s0 + $0x4] sm:$0xf]
    %v99 = vld [vmem:[%s0 + $0x8] sm:$0xf]
    %v100 = vld [vmem:[%s0 + $0xc] sm:$0xf]
    %v101 = vld [vmem:[%s0 + $0x10] sm:$0xf]
    %v102 = vld [vmem:[%s0 + $0x14] sm:$0xf]
    %v103 = vld [vmem:[%s0 + $0x18] sm:$0xf]
    %v104 = vld [vmem:[%s0 + $0x1c] sm:$0xf]
    %v105 = vld [vmem:[%s0 + $0x20] sm:$0xf]
    %v106 = vld [vmem:[%s0 + $0x24] sm:$0xf]
    %v107 = vld [vmem:[%s0 + $0x28] sm:$0xf]
    %v108 = vld [vmem:[%s0 + $0x2c] sm:$0xf]
    %v109 = vld [vmem:[%s0 + $0x30] sm:$0xf]
    %v110 = vld [vmem:[%s0 + $0x34] sm:$0xf]
    %v111 = vld [vmem:[%s0 + $0x38] sm:$0xf]
    %v112 = vld [vmem:[%s0 + $0x3c] sm:$0xf]
    %v113 = vld [vmem:[%s0 + $0x40] sm:$0xf]
    %v114 = vld [vmem:[%s0 + $0x44] sm:$0xf]
    %v115 = vld [vmem:[%s0 + $0x48] sm:$0xf]
    %v116 = vld [vmem:[%s0 + $0x4c] sm:$0xf]
    %v117 = vld [vmem:[%s0 + $0x50] sm:$0xf]
    %v118 = vld [vmem:[%s0 + $0x54] sm:$0xf]
    %v119 = vld [vmem:[%s0 + $0x58] sm:$0xf]
    %v120 = vld [vmem:[%s0 + $0x5c] sm:$0xf]
    %v121 = vld [vmem:[%s0 + $0x60] sm:$0xf]
    %v122 = vld [vmem:[%s0 + $0x64] sm:$0xf]
    %v123 = vld [vmem:[%s0 + $0x68] sm:$0xf]
    %v124 = vld [vmem:[%s0 + $0x6c] sm:$0xf]
    %v125 = vld [vmem:[%s0 + $0x70] sm:$0xf]
    %v126 = vld [vmem:[%s0 + $0x74] sm:$0xf]
    %v127 = vld [vmem:[%s0 + $0x78] sm:$0xf]
    %v128 = vld [vmem:[%s0 + $0x7c] sm:$0xf]
    %v129 = vld [vmem:[%s0 + $0x80] sm:$0xf]
    %v130 = vld [vmem:[%s0 + $0x84] sm:$0xf]
    %v131 = vld [vmem:[%s0 + $0x88] sm:$0xf]
    %v132 = vld [vmem:[%s0 + $0x8c] sm:$0xf]
    %v133 = vld [vmem:[%s0 + $0x90] sm:$0xf]
    %v134 = vld [vmem:[%s0 + $0x94] sm:$0xf]
    %v135 = vld [vmem:[%s0 + $0x98] sm:$0xf]
    %v136 = vld [vmem:[%s0 + $0x9c] sm:$0xf]
    %v137 = vld [vmem:[%s0 + $0xa0] sm:$0xf]
    %v138 = vld [vmem:[%s0 + $0xa4] sm:$0xf]
    %v139 = vld [vmem:[%s0 + $0xa8] sm:$0xf]
    %v140 = vld [vmem:[%s0 + $0xac] sm:$0xf]
    %v141 = vld [vmem:[%s0 + $0xb0] sm:$0xf]
    %v142 = vld [vmem:[%s0 + $0xb4] sm:$0xf]
    %v143 = vld [vmem:[%s0 + $0xb8] sm:$0xf]
    %v144 = vld [vmem:[%s0 + $0xbc] sm:$0xf]
    %v145 = vld [vmem:[%s0 + $0xc0] sm:$0xf]
    %v146 = vld [vmem:[%s0 + $0xc4] sm:$0xf]
    %v147 = vld [vmem:[%s0 + $0xc8] sm:$0xf]
    %v148 = vld [vmem:[%s0 + $0xcc] sm:$0xf]
    %v149 = vld [vmem:[%s0 + $0xd0] sm:$0xf]
    %v150 = vld [vmem:[%s0 + $0xd4] sm:$0xf]
    %v151 = vld [vmem:[%s0 + $0xd8] sm:$0xf]
    %v152 = vld [vmem:[%s0 + $0xdc] sm:$0xf]
    %v153 = vld [vmem:[%s0 + $0xe0] sm:$0xf]
    %v154 = vld [vmem:[%s0 + $0xe4] sm:$0xf]
    %v155 = vld [vmem:[%s0 + $0xe8] sm:$0xf]
    %v156 = vld [vmem:[%s0 + $0xec] sm:$0xf]
    %v157 = vld [vmem:[%s0 + $0xf0] sm:$0xf]
    %v158 = vld [vmem:[%s0 + $0xf4] sm:$0xf]
    %v159 = vld [vmem:[%s0 + $0xf8] sm:$0xf]
    %v160 = vld [vmem:[%s0 + $0xfc] sm:$0xf]
    %v161 = vld [vmem:[#allocation2] sm:$0xff]
    %v162 = vld [vmem:[#allocation2 + $0x8] sm:$0xff]
    %v163 = vld [vmem:[#allocation2 + $0x10] sm:$0xff]
    %v164 = vld [vmem:[#allocation2 + $0x18] sm:$0xff]
    %v165 = vld [vmem:[#allocation2 + $0x20] sm:$0xff]
    %v166 = vld [vmem:[#allocation2 + $0x28] sm:$0xff]
    %v167 = vld [vmem:[#allocation2 + $0x30] sm:$0xff]
    %v168 = vld [vmem:[#allocation2 + $0x38] sm:$0xff]
    %v169 = vld [vmem:[#allocation2 + $0x40] sm:$0xff]
    %v170 = vld [vmem:[#allocation2 + $0x48] sm:$0xff]
    %v171 = vld [vmem:[#allocation2 + $0x50] sm:$0xff]
    %v172 = vld [vmem:[#allocation2 + $0x58] sm:$0xff]
    %v173 = vld [vmem:[#allocation2 + $0x60] sm:$0xff]
    %v174 = vld [vmem:[#allocation2 + $0x68] sm:$0xff]
    %v175 = vld [vmem:[#allocation2 + $0x70] sm:$0xff]
    %v176 = vld [vmem:[#allocation2 + $0x78] sm:$0xff]
    %v177 = vld [vmem:[#allocation2 + $0x80] sm:$0xff]
    %v178 = vld [vmem:[#allocation2 + $0x88] sm:$0xff]
    %v179 = vld [vmem:[#allocation2 + $0x90] sm:$0xff]
    %v180 = vld [vmem:[#allocation2 + $0x98] sm:$0xff]
    %v181 = vld [vmem:[#allocation2 + $0xa0] sm:$0xff]
    %v182 = vld [vmem:[#allocation2 + $0xa8] sm:$0xff]
    %v183 = vld [vmem:[#allocation2 + $0xb0] sm:$0xff]
    %v184 = vld [vmem:[#allocation2 + $0xb8] sm:$0xff]
    %v185 = vld [vmem:[#allocation2 + $0xc0] sm:$0xff]
    %v186 = vld [vmem:[#allocation2 + $0xc8] sm:$0xff]
    %v187 = vld [vmem:[#allocation2 + $0xd0] sm:$0xff]
    %v188 = vld [vmem:[#allocation2 + $0xd8] sm:$0xff]
    %v189 = vld [vmem:[#allocation2 + $0xe0] sm:$0xff]
    %v190 = vld [vmem:[#allocation2 + $0xe8] sm:$0xff]
    %v191 = vld [vmem:[#allocation2 + $0xf0] sm:$0xff]
    %v192 = vld [vmem:[#allocation2 + $0xf8] sm:$0xff]
    %v193 = vld [vmem:[#allocation2 + $0x100] sm:$0xff]
    %v194 = vld [vmem:[#allocation2 + $0x108] sm:$0xff]
    %v195 = vld [vmem:[#allocation2 + $0x110] sm:$0xff]
    %v196 = vld [vmem:[#allocation2 + $0x118] sm:$0xff]
    %v197 = vld [vmem:[#allocation2 + $0x120] sm:$0xff]
    %v198 = vld [vmem:[#allocation2 + $0x128] sm:$0xff]
    %v199 = vld [vmem:[#allocation2 + $0x130] sm:$0xff]
    %v200 = vld [vmem:[#allocation2 + $0x138] sm:$0xff]
    %v201 = vld [vmem:[#allocation2 + $0x140] sm:$0xff]
    %v202 = vld [vmem:[#allocation2 + $0x148] sm:$0xff]
    %v203 = vld [vmem:[#allocation2 + $0x150] sm:$0xff]
    %v204 = vld [vmem:[#allocation2 + $0x158] sm:$0xff]
    %v205 = vld [vmem:[#allocation2 + $0x160] sm:$0xff]
    %v206 = vld [vmem:[#allocation2 + $0x168] sm:$0xff]
    %v207 = vld [vmem:[#allocation2 + $0x170] sm:$0xff]
    %v208 = vld [vmem:[#allocation2 + $0x178] sm:$0xff]
    %v209 = vld [vmem:[#allocation2 + $0x180] sm:$0xff]
    %v210 = vld [vmem:[#allocation2 + $0x188] sm:$0xff]
    %v211 = vld [vmem:[#allocation2 + $0x190] sm:$0xff]
    %v212 = vld [vmem:[#allocation2 + $0x198] sm:$0xff]
    %v213 = vld [vmem:[#allocation2 + $0x1a0] sm:$0xff]
    %v214 = vld [vmem:[#allocation2 + $0x1a8] sm:$0xff]
    %v215 = vld [vmem:[#allocation2 + $0x1b0] sm:$0xff]
    %v216 = vld [vmem:[#allocation2 + $0x1b8] sm:$0xff]
    %v217 = vld [vmem:[#allocation2 + $0x1c0] sm:$0xff]
    %v218 = vld [vmem:[#allocation2 + $0x1c8] sm:$0xff]
    %v219 = vld [vmem:[#allocation2 + $0x1d0] sm:$0xff]
    %v220 = vld [vmem:[#allocation2 + $0x1d8] sm:$0xff]
    %v221 = vld [vmem:[#allocation2 + $0x1e0] sm:$0xff]
    %v222 = vld [vmem:[#allocation2 + $0x1e8] sm:$0xff]
    %v223 = vld [vmem:[#allocation2 + $0x1f0] sm:$0xff]
    %v224 = vld [vmem:[#allocation2 + $0x1f8] sm:$0xff]
    %v225 = vld [vmem:[#allocation3] sm:$0xf]
    %v226 = vld [vmem:[#allocation3 + $0x4] sm:$0xf]
    %v227 = vld [vmem:[#allocation3 + $0x8] sm:$0xf]
    %v228 = vld [vmem:[#allocation3 + $0xc] sm:$0xf]
    %v229 = vld [vmem:[#allocation3 + $0x10] sm:$0xf]
    %v230 = vld [vmem:[#allocation3 + $0x14] sm:$0xf]
    %v231 = vld [vmem:[#allocation3 + $0x18] sm:$0xf]
    %v232 = vld [vmem:[#allocation3 + $0x1c] sm:$0xf]
    %v233 = vld [vmem:[#allocation3 + $0x20] sm:$0xf]
    %v234 = vld [vmem:[#allocation3 + $0x24] sm:$0xf]
    %v235 = vld [vmem:[#allocation3 + $0x28] sm:$0xf]
    %v236 = vld [vmem:[#allocation3 + $0x2c] sm:$0xf]
    %v237 = vld [vmem:[#allocation3 + $0x30] sm:$0xf]
    %v238 = vld [vmem:[#allocation3 + $0x34] sm:$0xf]
    %v239 = vld [vmem:[#allocation3 + $0x38] sm:$0xf]
    %v240 = vld [vmem:[#allocation3 + $0x3c] sm:$0xf]
    %v305 = vunpack.c.l.b16 %v97
    %v306 = vunpack.c.l.b16 %v98
    %v307 = vunpack.c.l.b16 %v99
    %v308 = vunpack.c.l.b16 %v100
    %v309 = vunpack.c.l.b16 %v101
    %v310 = vunpack.c.l.b16 %v102
    %v311 = vunpack.c.l.b16 %v103
    %v312 = vunpack.c.l.b16 %v104
    %v313 = vunpack.c.l.b16 %v105
    %v314 = vunpack.c.l.b16 %v106
    %v315 = vunpack.c.l.b16 %v107
    %v316 = vunpack.c.l.b16 %v108
    %v317 = vunpack.c.l.b16 %v109
    %v318 = vunpack.c.l.b16 %v110
    %v319 = vunpack.c.l.b16 %v111
    %v320 = vunpack.c.l.b16 %v112
    %v321 = vunpack.c.l.b16 %v113
    %v322 = vunpack.c.l.b16 %v114
    %v323 = vunpack.c.l.b16 %v115
    %v324 = vunpack.c.l.b16 %v116
    %v325 = vunpack.c.l.b16 %v117
    %v326 = vunpack.c.l.b16 %v118
    %v327 = vunpack.c.l.b16 %v119
    %v328 = vunpack.c.l.b16 %v120
    %v329 = vunpack.c.l.b16 %v121
    %v330 = vunpack.c.l.b16 %v122
    %v331 = vunpack.c.l.b16 %v123
    %v332 = vunpack.c.l.b16 %v124
    %v333 = vunpack.c.l.b16 %v125
    %v334 = vunpack.c.l.b16 %v126
    %v335 = vunpack.c.l.b16 %v127
    %v336 = vunpack.c.l.b16 %v128
    %v337 = vunpack.c.l.b16 %v129
    %v338 = vunpack.c.l.b16 %v130
    %v339 = vunpack.c.l.b16 %v131
    %v340 = vunpack.c.l.b16 %v132
    %v341 = vunpack.c.l.b16 %v133
    %v342 = vunpack.c.l.b16 %v134
    %v343 = vunpack.c.l.b16 %v135
    %v344 = vunpack.c.l.b16 %v136
    %v345 = vunpack.c.l.b16 %v137
    %v346 = vunpack.c.l.b16 %v138
    %v347 = vunpack.c.l.b16 %v139
    %v348 = vunpack.c.l.b16 %v140
    %v349 = vunpack.c.l.b16 %v141
    %v350 = vunpack.c.l.b16 %v142
    %v351 = vunpack.c.l.b16 %v143
    %v352 = vunpack.c.l.b16 %v144
    %v353 = vunpack.c.l.b16 %v145
    %v354 = vunpack.c.l.b16 %v146
    %v355 = vunpack.c.l.b16 %v147
    %v356 = vunpack.c.l.b16 %v148
    %v357 = vunpack.c.l.b16 %v149
    %v358 = vunpack.c.l.b16 %v150
    %v359 = vunpack.c.l.b16 %v151
    %v360 = vunpack.c.l.b16 %v152
    %v361 = vunpack.c.l.b16 %v153
    %v362 = vunpack.c.l.b16 %v154
    %v363 = vunpack.c.l.b16 %v155
    %v364 = vunpack.c.l.b16 %v156
    %v365 = vunpack.c.l.b16 %v157
    %v366 = vunpack.c.l.b16 %v158
    %v367 = vunpack.c.l.b16 %v159
    %v368 = vunpack.c.l.b16 %v160
    %v369 = vpack.c.b16 %v306, %v305
    %v370 = vpack.c.b16 %v308, %v307
    %v371 = vpack.c.b16 %v310, %v309
    %v372 = vpack.c.b16 %v312, %v311
    %v373 = vpack.c.b16 %v314, %v313
    %v374 = vpack.c.b16 %v316, %v315
    %v375 = vpack.c.b16 %v318, %v317
    %v376 = vpack.c.b16 %v320, %v319
    %v377 = vpack.c.b16 %v322, %v321
    %v378 = vpack.c.b16 %v324, %v323
    %v379 = vpack.c.b16 %v326, %v325
    %v380 = vpack.c.b16 %v328, %v327
    %v381 = vpack.c.b16 %v330, %v329
    %v382 = vpack.c.b16 %v332, %v331
    %v383 = vpack.c.b16 %v334, %v333
    %v384 = vpack.c.b16 %v336, %v335
    %v385 = vpack.c.b16 %v338, %v337
    %v386 = vpack.c.b16 %v340, %v339
    %v387 = vpack.c.b16 %v342, %v341
    %v388 = vpack.c.b16 %v344, %v343
    %v389 = vpack.c.b16 %v346, %v345
    %v390 = vpack.c.b16 %v348, %v347
    %v391 = vpack.c.b16 %v350, %v349
    %v392 = vpack.c.b16 %v352, %v351
    %v393 = vpack.c.b16 %v354, %v353
    %v394 = vpack.c.b16 %v356, %v355
    %v395 = vpack.c.b16 %v358, %v357
    %v396 = vpack.c.b16 %v360, %v359
    %v397 = vpack.c.b16 %v362, %v361
    %v398 = vpack.c.b16 %v364, %v363
    %v399 = vpack.c.b16 %v366, %v365
    %v400 = vpack.c.b16 %v368, %v367
    %v449 = vunpack.c.l.b16 %v225
    %v450 = vunpack.c.l.b16 %v226
    %v451 = vunpack.c.l.b16 %v227
    %v452 = vunpack.c.l.b16 %v228
    %v453 = vunpack.c.l.b16 %v229
    %v454 = vunpack.c.l.b16 %v230
    %v455 = vunpack.c.l.b16 %v231
    %v456 = vunpack.c.l.b16 %v232
    %v457 = vunpack.c.l.b16 %v233
    %v458 = vunpack.c.l.b16 %v234
    %v459 = vunpack.c.l.b16 %v235
    %v460 = vunpack.c.l.b16 %v236
    %v461 = vunpack.c.l.b16 %v237
    %v462 = vunpack.c.l.b16 %v238
    %v463 = vunpack.c.l.b16 %v239
    %v464 = vunpack.c.l.b16 %v240
    %v465 = vpack.c.b16 %v450, %v449
    %v466 = vpack.c.b16 %v452, %v451
    %v467 = vpack.c.b16 %v454, %v453
    %v468 = vpack.c.b16 %v456, %v455
    %v469 = vpack.c.b16 %v458, %v457
    %v470 = vpack.c.b16 %v460, %v459
    %v471 = vpack.c.b16 %v462, %v461
    %v472 = vpack.c.b16 %v464, %v463
    %481 = vmatprep.subr.bf16.mxu0 0
    %482 = vmatpush1.bf16.msra.mxu0 %v465
    %483 = vmatprep.subr.bf16.mxu0 0
    %484 = vmatpush1.bf16.msra.mxu0 %v466
    %485 = vmatprep.subr.bf16.mxu0 0
    %486 = vmatpush1.bf16.msra.mxu0 %v467
    %487 = vmatprep.subr.bf16.mxu0 0
    %488 = vmatpush1.bf16.msra.mxu0 %v468
    %489 = vmatprep.subr.bf16.mxu0 0
    %490 = vmatpush1.bf16.msra.mxu0 %v469
    %491 = vmatprep.subr.bf16.mxu0 0
    %492 = vmatpush1.bf16.msra.mxu0 %v470
    %493 = vmatprep.subr.bf16.mxu0 0
    %494 = vmatpush1.bf16.msra.mxu0 %v471
    %495 = vmatprep.subr.bf16.mxu0 0
    %496 = vmatpush1.bf16.msra.mxu0 %v472
    %497 = vmatprep.subr.bf16.mxu0 0
    %498 = vmatpush1.bf16.msra.mxu0 0
    %499 = vmatprep.subr.bf16.mxu0 0
    %500 = vmatpush1.bf16.msra.mxu0 0
    %501 = vmatprep.subr.bf16.mxu0 0
    %502 = vmatpush1.bf16.msra.mxu0 0
    %503 = vmatprep.subr.bf16.mxu0 0
    %504 = vmatpush1.bf16.msra.mxu0 0
    %505 = vmatprep.subr.bf16.mxu0 0
    %506 = vmatpush1.bf16.msra.mxu0 0
    %507 = vmatprep.subr.bf16.mxu0 0
    %508 = vmatpush1.bf16.msra.mxu0 0
    %509 = vmatprep.subr.bf16.mxu0 0
    %510 = vmatpush1.bf16.msra.mxu0 0
    %511 = vmatprep.subr.bf16.mxu0 0
    %512 = vmatpush1.bf16.msra.mxu0 0
    %513 = vmatprep.mubr.bf16.mxu0 0
    %514 = vmatmul.mubr.bf16.gmra.mrb[0].mxu0 %v369
    %v515 = vpop.f32.mrb[0].mxu0
    %v516 = vadd.f32 0.0, %v515
    %v517 = vpop.f32.mrb[0].mxu0
    %v518 = vpop.f32.mrb[0].mxu0
    %v519 = vadd.f32 0.0, %v518
    %v520 = vpop.f32.mrb[0].mxu0
    %521 = vmatprep.mubr.bf16.mxu0 0
    %522 = vmatmul.mubr.bf16.gmra.mrb[0].mxu0 %v370
    %v523 = vpop.f32.mrb[0].mxu0
    %v524 = vadd.f32 0.0, %v523
    %v525 = vpop.f32.mrb[0].mxu0
    %v526 = vpop.f32.mrb[0].mxu0
    %v527 = vadd.f32 0.0, %v526
    %v528 = vpop.f32.mrb[0].mxu0
    %529 = vmatprep.mubr.bf16.mxu0 0
    %530 = vmatmul.mubr.bf16.gmra.mrb[0].mxu0 %v371
    %v531 = vpop.f32.mrb[0].mxu0
    %v532 = vadd.f32 0.0, %v531
    %v533 = vpop.f32.mrb[0].mxu0
    %v534 = vpop.f32.mrb[0].mxu0
    %v535 = vadd.f32 0.0, %v534
    %v536 = vpop.f32.mrb[0].mxu0
    %537 = vmatprep.mubr.bf16.mxu0 0
    %538 = vmatmul.mubr.bf16.gmra.mrb[0].mxu0 %v372
    %v539 = vpop.f32.mrb[0].mxu0
    %v540 = vadd.f32 0.0, %v539
    %v541 = vpop.f32.mrb[0].mxu0
    %v542 = vpop.f32.mrb[0].mxu0
    %v543 = vadd.f32 0.0, %v542
    %v544 = vpop.f32.mrb[0].mxu0
    %545 = vmatprep.mubr.bf16.mxu0 0
    %546 = vmatmul.mubr.bf16.gmra.mrb[0].mxu0 %v373
    %v547 = vpop.f32.mrb[0].mxu0
    %v548 = vadd.f32 0.0, %v547
    %v549 = vpop.f32.mrb[0].mxu0
    %v550 = vpop.f32.mrb[0].mxu0
    %v551 = vadd.f32 0.0, %v550
    %v552 = vpop.f32.mrb[0].mxu0
    %553 = vmatprep.mubr.bf16.mxu0 0
    %554 = vmatmul.mubr.bf16.gmra.mrb[0].mxu0 %v374
    %v555 = vpop.f32.mrb[0].mxu0
    %v556 = vadd.f32 0.0, %v555
    %v557 = vpop.f32.mrb[0].mxu0
    %v558 = vpop.f32.mrb[0].mxu0
    %v559 = vadd.f32 0.0, %v558
    %v560 = vpop.f32.mrb[0].mxu0
    %561 = vmatprep.mubr.bf16.mxu0 0
    %562 = vmatmul.mubr.bf16.gmra.mrb[0].mxu0 %v375
    %v563 = vpop.f32.mrb[0].mxu0
    %v564 = vadd.f32 0.0, %v563
    %v565 = vpop.f32.mrb[0].mxu0
    %v566 = vpop.f32.mrb[0].mxu0
    %v567 = vadd.f32 0.0, %v566
    %v568 = vpop.f32.mrb[0].mxu0
    %569 = vmatprep.mubr.bf16.mxu0 0
    %570 = vmatmul.mubr.bf16.gmra.mrb[0].mxu0 %v376
    %v571 = vpop.f32.mrb[0].mxu0
    %v572 = vadd.f32 0.0, %v571
    %v573 = vpop.f32.mrb[0].mxu0
    %v574 = vpop.f32.mrb[0].mxu0
    %v575 = vadd.f32 0.0, %v574
    %v576 = vpop.f32.mrb[0].mxu0
    %577 = vmatprep.mubr.bf16.mxu0 0
    %578 = vmatmul.mubr.bf16.gmra.mrb[0].mxu0 %v377
    %v579 = vpop.f32.mrb[0].mxu0
    %v580 = vadd.f32 0.0, %v579
    %v581 = vpop.f32.mrb[0].mxu0
    %v582 = vpop.f32.mrb[0].mxu0
    %v583 = vadd.f32 0.0, %v582
    %v584 = vpop.f32.mrb[0].mxu0
    %585 = vmatprep.mubr.bf16.mxu0 0
    %586 = vmatmul.mubr.bf16.gmra.mrb[0].mxu0 %v378
    %v587 = vpop.f32.mrb[0].mxu0
    %v588 = vadd.f32 0.0, %v587
    %v589 = vpop.f32.mrb[0].mxu0
    %v590 = vpop.f32.mrb[0].mxu0
    %v591 = vadd.f32 0.0, %v590
    %v592 = vpop.f32.mrb[0].mxu0
    %593 = vmatprep.mubr.bf16.mxu0 0
    %594 = vmatmul.mubr.bf16.gmra.mrb[0].mxu0 %v379
    %v595 = vpop.f32.mrb[0].mxu0
    %v596 = vadd.f32 0.0, %v595
    %v597 = vpop.f32.mrb[0].mxu0
    %v598 = vpop.f32.mrb[0].mxu0
    %v599 = vadd.f32 0.0, %v598
    %v600 = vpop.f32.mrb[0].mxu0
    %601 = vmatprep.mubr.bf16.mxu0 0
    %602 = vmatmul.mubr.bf16.gmra.mrb[0].mxu0 %v380
    %v603 = vpop.f32.mrb[0].mxu0
    %v604 = vadd.f32 0.0, %v603
    %v605 = vpop.f32.mrb[0].mxu0
    %v606 = vpop.f32.mrb[0].mxu0
    %v607 = vadd.f32 0.0, %v606
    %v608 = vpop.f32.mrb[0].mxu0
    %609 = vmatprep.mubr.bf16.mxu0 0
    %610 = vmatmul.mubr.bf16.gmra.mrb[0].mxu0 %v381
    %v611 = vpop.f32.mrb[0].mxu0
    %v612 = vadd.f32 0.0, %v611
    %v613 = vpop.f32.mrb[0].mxu0
    %v614 = vpop.f32.mrb[0].mxu0
    %v615 = vadd.f32 0.0, %v614
    %v616 = vpop.f32.mrb[0].mxu0
    %617 = vmatprep.mubr.bf16.mxu0 0
    %618 = vmatmul.mubr.bf16.gmra.mrb[0].mxu0 %v382
    %v619 = vpop.f32.mrb[0].mxu0
    %v620 = vadd.f32 0.0, %v619
    %v621 = vpop.f32.mrb[0].mxu0
    %v622 = vpop.f32.mrb[0].mxu0
    %v623 = vadd.f32 0.0, %v622
    %v624 = vpop.f32.mrb[0].mxu0
    %625 = vmatprep.mubr.bf16.mxu0 0
    %626 = vmatmul.mubr.bf16.gmra.mrb[0].mxu0 %v383
    %v627 = vpop.f32.mrb[0].mxu0
    %v628 = vadd.f32 0.0, %v627
    %v629 = vpop.f32.mrb[0].mxu0
    %v630 = vpop.f32.mrb[0].mxu0
    %v631 = vadd.f32 0.0, %v630
    %v632 = vpop.f32.mrb[0].mxu0
    %633 = vmatprep.mubr.bf16.mxu0 0
    %634 = vmatmul.mubr.bf16.gmra.mrb[0].mxu0 %v384
    %v635 = vpop.f32.mrb[0].mxu0
    %v636 = vadd.f32 0.0, %v635
    %v637 = vpop.f32.mrb[0].mxu0
    %v638 = vpop.f32.mrb[0].mxu0
    %v639 = vadd.f32 0.0, %v638
    %v640 = vpop.f32.mrb[0].mxu0
    %641 = vmatprep.mubr.bf16.mxu0 0
    %642 = vmatmul.mubr.bf16.gmra.mrb[0].mxu0 %v385
    %v643 = vpop.f32.mrb[0].mxu0
    %v644 = vadd.f32 0.0, %v643
    %v645 = vpop.f32.mrb[0].mxu0
    %v646 = vpop.f32.mrb[0].mxu0
    %v647 = vadd.f32 0.0, %v646
    %v648 = vpop.f32.mrb[0].mxu0
    %649 = vmatprep.mubr.bf16.mxu0 0
    %650 = vmatmul.mubr.bf16.gmra.mrb[0].mxu0 %v386
    %v651 = vpop.f32.mrb[0].mxu0
    %v652 = vadd.f32 0.0, %v651
    %v653 = vpop.f32.mrb[0].mxu0
    %v654 = vpop.f32.mrb[0].mxu0
    %v655 = vadd.f32 0.0, %v654
    %v656 = vpop.f32.mrb[0].mxu0
    %657 = vmatprep.mubr.bf16.mxu0 0
    %658 = vmatmul.mubr.bf16.gmra.mrb[0].mxu0 %v387
    %v659 = vpop.f32.mrb[0].mxu0
    %v660 = vadd.f32 0.0, %v659
    %v661 = vpop.f32.mrb[0].mxu0
    %v662 = vpop.f32.mrb[0].mxu0
    %v663 = vadd.f32 0.0, %v662
    %v664 = vpop.f32.mrb[0].mxu0
    %665 = vmatprep.mubr.bf16.mxu0 0
    %666 = vmatmul.mubr.bf16.gmra.mrb[0].mxu0 %v388
    %v667 = vpop.f32.mrb[0].mxu0
    %v668 = vadd.f32 0.0, %v667
    %v669 = vpop.f32.mrb[0].mxu0
    %v670 = vpop.f32.mrb[0].mxu0
    %v671 = vadd.f32 0.0, %v670
    %v672 = vpop.f32.mrb[0].mxu0
    %673 = vmatprep.mubr.bf16.mxu0 0
    %674 = vmatmul.mubr.bf16.gmra.mrb[0].mxu0 %v389
    %v675 = vpop.f32.mrb[0].mxu0
    %v676 = vadd.f32 0.0, %v675
    %v677 = vpop.f32.mrb[0].mxu0
    %v678 = vpop.f32.mrb[0].mxu0
    %v679 = vadd.f32 0.0, %v678
    %v680 = vpop.f32.mrb[0].mxu0
    %681 = vmatprep.mubr.bf16.mxu0 0
    %682 = vmatmul.mubr.bf16.gmra.mrb[0].mxu0 %v390
    %v683 = vpop.f32.mrb[0].mxu0
    %v684 = vadd.f32 0.0, %v683
    %v685 = vpop.f32.mrb[0].mxu0
    %v686 = vpop.f32.mrb[0].mxu0
    %v687 = vadd.f32 0.0, %v686
    %v688 = vpop.f32.mrb[0].mxu0
    %689 = vmatprep.mubr.bf16.mxu0 0
    %690 = vmatmul.mubr.bf16.gmra.mrb[0].mxu0 %v391
    %v691 = vpop.f32.mrb[0].mxu0
    %v692 = vadd.f32 0.0, %v691
    %v693 = vpop.f32.mrb[0].mxu0
    %v694 = vpop.f32.mrb[0].mxu0
    %v695 = vadd.f32 0.0, %v694
    %v696 = vpop.f32.mrb[0].mxu0
    %697 = vmatprep.mubr.bf16.mxu0 0
    %698 = vmatmul.mubr.bf16.gmra.mrb[0].mxu0 %v392
    %v699 = vpop.f32.mrb[0].mxu0
    %v700 = vadd.f32 0.0, %v699
    %v701 = vpop.f32.mrb[0].mxu0
    %v702 = vpop.f32.mrb[0].mxu0
    %v703 = vadd.f32 0.0, %v702
    %v704 = vpop.f32.mrb[0].mxu0
    %705 = vmatprep.mubr.bf16.mxu0 0
    %706 = vmatmul.mubr.bf16.gmra.mrb[0].mxu0 %v393
    %v707 = vpop.f32.mrb[0].mxu0
    %v708 = vadd.f32 0.0, %v707
    %v709 = vpop.f32.mrb[0].mxu0
    %v710 = vpop.f32.mrb[0].mxu0
    %v711 = vadd.f32 0.0, %v710
    %v712 = vpop.f32.mrb[0].mxu0
    %713 = vmatprep.mubr.bf16.mxu0 0
    %714 = vmatmul.mubr.bf16.gmra.mrb[0].mxu0 %v394
    %v715 = vpop.f32.mrb[0].mxu0
    %v716 = vadd.f32 0.0, %v715
    %v717 = vpop.f32.mrb[0].mxu0
    %v718 = vpop.f32.mrb[0].mxu0
    %v719 = vadd.f32 0.0, %v718
    %v720 = vpop.f32.mrb[0].mxu0
    %721 = vmatprep.mubr.bf16.mxu0 0
    %722 = vmatmul.mubr.bf16.gmra.mrb[0].mxu0 %v395
    %v723 = vpop.f32.mrb[0].mxu0
    %v724 = vadd.f32 0.0, %v723
    %v725 = vpop.f32.mrb[0].mxu0
    %v726 = vpop.f32.mrb[0].mxu0
    %v727 = vadd.f32 0.0, %v726
    %v728 = vpop.f32.mrb[0].mxu0
    %729 = vmatprep.mubr.bf16.mxu0 0
    %730 = vmatmul.mubr.bf16.gmra.mrb[0].mxu0 %v396
    %v731 = vpop.f32.mrb[0].mxu0
    %v732 = vadd.f32 0.0, %v731
    %v733 = vpop.f32.mrb[0].mxu0
    %v734 = vpop.f32.mrb[0].mxu0
    %v735 = vadd.f32 0.0, %v734
    %v736 = vpop.f32.mrb[0].mxu0
    %737 = vmatprep.mubr.bf16.mxu0 0
    %738 = vmatmul.mubr.bf16.gmra.mrb[0].mxu0 %v397
    %v739 = vpop.f32.mrb[0].mxu0
    %v740 = vadd.f32 0.0, %v739
    %v741 = vpop.f32.mrb[0].mxu0
    %v742 = vpop.f32.mrb[0].mxu0
    %v743 = vadd.f32 0.0, %v742
    %v744 = vpop.f32.mrb[0].mxu0
    %745 = vmatprep.mubr.bf16.mxu0 0
    %746 = vmatmul.mubr.bf16.gmra.mrb[0].mxu0 %v398
    %v747 = vpop.f32.mrb[0].mxu0
    %v748 = vadd.f32 0.0, %v747
    %v749 = vpop.f32.mrb[0].mxu0
    %v750 = vpop.f32.mrb[0].mxu0
    %v751 = vadd.f32 0.0, %v750
    %v752 = vpop.f32.mrb[0].mxu0
    %753 = vmatprep.mubr.bf16.mxu0 0
    %754 = vmatmul.mubr.bf16.gmra.mrb[0].mxu0 %v399
    %v755 = vpop.f32.mrb[0].mxu0
    %v756 = vadd.f32 0.0, %v755
    %v757 = vpop.f32.mrb[0].mxu0
    %v758 = vpop.f32.mrb[0].mxu0
    %v759 = vadd.f32 0.0, %v758
    %v760 = vpop.f32.mrb[0].mxu0
    %761 = vmatprep.mubr.bf16.mxu0 0
    %762 = vmatmul.mubr.bf16.gmra.mrb[0].mxu0 %v400
    %v763 = vpop.f32.mrb[0].mxu0
    %v764 = vadd.f32 0.0, %v763
    %v765 = vpop.f32.mrb[0].mxu0
    %v766 = vpop.f32.mrb[0].mxu0
    %v767 = vadd.f32 0.0, %v766
    %v768 = vpop.f32.mrb[0].mxu0
    %769 = vdwg.mxu0
    %v770 = vadd.f32 %v161, %v516
    %v771 = vadd.f32 %v162, %v519
    %v772 = vadd.f32 %v163, %v524
    %v773 = vadd.f32 %v164, %v527
    %v774 = vadd.f32 %v165, %v532
    %v775 = vadd.f32 %v166, %v535
    %v776 = vadd.f32 %v167, %v540
    %v777 = vadd.f32 %v168, %v543
    %v778 = vadd.f32 %v169, %v548
    %v779 = vadd.f32 %v170, %v551
    %v780 = vadd.f32 %v171, %v556
    %v781 = vadd.f32 %v172, %v559
    %v782 = vadd.f32 %v173, %v564
    %v783 = vadd.f32 %v174, %v567
    %v784 = vadd.f32 %v175, %v572
    %v785 = vadd.f32 %v176, %v575
    %v786 = vadd.f32 %v177, %v580
    %v787 = vadd.f32 %v178, %v583
    %v788 = vadd.f32 %v179, %v588
    %v789 = vadd.f32 %v180, %v591
    %v790 = vadd.f32 %v181, %v596
    %v791 = vadd.f32 %v182, %v599
    %v792 = vadd.f32 %v183, %v604
    %v793 = vadd.f32 %v184, %v607
    %v794 = vadd.f32 %v185, %v612
    %v795 = vadd.f32 %v186, %v615
    %v796 = vadd.f32 %v187, %v620
    %v797 = vadd.f32 %v188, %v623
    %v798 = vadd.f32 %v189, %v628
    %v799 = vadd.f32 %v190, %v631
    %v800 = vadd.f32 %v191, %v636
    %v801 = vadd.f32 %v192, %v639
    %v802 = vadd.f32 %v193, %v644
    %v803 = vadd.f32 %v194, %v647
    %v804 = vadd.f32 %v195, %v652
    %v805 = vadd.f32 %v196, %v655
    %v806 = vadd.f32 %v197, %v660
    %v807 = vadd.f32 %v198, %v663
    %v808 = vadd.f32 %v199, %v668
    %v809 = vadd.f32 %v200, %v671
    %v810 = vadd.f32 %v201, %v676
    %v811 = vadd.f32 %v202, %v679
    %v812 = vadd.f32 %v203, %v684
    %v813 = vadd.f32 %v204, %v687
    %v814 = vadd.f32 %v205, %v692
    %v815 = vadd.f32 %v206, %v695
    %v816 = vadd.f32 %v207, %v700
    %v817 = vadd.f32 %v208, %v703
    %v818 = vadd.f32 %v209, %v708
    %v819 = vadd.f32 %v210, %v711
    %v820 = vadd.f32 %v211, %v716
    %v821 = vadd.f32 %v212, %v719
    %v822 = vadd.f32 %v213, %v724
    %v823 = vadd.f32 %v214, %v727
    %v824 = vadd.f32 %v215, %v732
    %v825 = vadd.f32 %v216, %v735
    %v826 = vadd.f32 %v217, %v740
    %v827 = vadd.f32 %v218, %v743
    %v828 = vadd.f32 %v219, %v748
    %v829 = vadd.f32 %v220, %v751
    %v830 = vadd.f32 %v221, %v756
    %v831 = vadd.f32 %v222, %v759
    %v832 = vadd.f32 %v223, %v764
    %v833 = vadd.f32 %v224, %v767
    %834 = vst [vmem:[#allocation2] sm:$0xff] %v770
    %835 = vst [vmem:[#allocation2 + $0x8] sm:$0xff] %v771
    %836 = vst [vmem:[#allocation2 + $0x10] sm:$0xff] %v772
    %837 = vst [vmem:[#allocation2 + $0x18] sm:$0xff] %v773
    %838 = vst [vmem:[#allocation2 + $0x20] sm:$0xff] %v774
    %839 = vst [vmem:[#allocation2 + $0x28] sm:$0xff] %v775
    %840 = vst [vmem:[#allocation2 + $0x30] sm:$0xff] %v776
    %841 = vst [vmem:[#allocation2 + $0x38] sm:$0xff] %v777
    %842 = vst [vmem:[#allocation2 + $0x40] sm:$0xff] %v778
    %843 = vst [vmem:[#allocation2 + $0x48] sm:$0xff] %v779
    %844 = vst [vmem:[#allocation2 + $0x50] sm:$0xff] %v780
    %845 = vst [vmem:[#allocation2 + $0x58] sm:$0xff] %v781
    %846 = vst [vmem:[#allocation2 + $0x60] sm:$0xff] %v782
    %847 = vst [vmem:[#allocation2 + $0x68] sm:$0xff] %v783
    %848 = vst [vmem:[#allocation2 + $0x70] sm:$0xff] %v784
    %849 = vst [vmem:[#allocation2 + $0x78] sm:$0xff] %v785
    %850 = vst [vmem:[#allocation2 + $0x80] sm:$0xff] %v786
    %851 = vst [vmem:[#allocation2 + $0x88] sm:$0xff] %v787
    %852 = vst [vmem:[#allocation2 + $0x90] sm:$0xff] %v788
    %853 = vst [vmem:[#allocation2 + $0x98] sm:$0xff] %v789
    %854 = vst [vmem:[#allocation2 + $0xa0] sm:$0xff] %v790
    %855 = vst [vmem:[#allocation2 + $0xa8] sm:$0xff] %v791
    %856 = vst [vmem:[#allocation2 + $0xb0] sm:$0xff] %v792
    %857 = vst [vmem:[#allocation2 + $0xb8] sm:$0xff] %v793
    %858 = vst [vmem:[#allocation2 + $0xc0] sm:$0xff] %v794
    %859 = vst [vmem:[#allocation2 + $0xc8] sm:$0xff] %v795
    %860 = vst [vmem:[#allocation2 + $0xd0] sm:$0xff] %v796
    %861 = vst [vmem:[#allocation2 + $0xd8] sm:$0xff] %v797
    %862 = vst [vmem:[#allocation2 + $0xe0] sm:$0xff] %v798
    %863 = vst [vmem:[#allocation2 + $0xe8] sm:$0xff] %v799
    %864 = vst [vmem:[#allocation2 + $0xf0] sm:$0xff] %v800
    %865 = vst [vmem:[#allocation2 + $0xf8] sm:$0xff] %v801
    %866 = vst [vmem:[#allocation2 + $0x100] sm:$0xff] %v802
    %867 = vst [vmem:[#allocation2 + $0x108] sm:$0xff] %v803
    %868 = vst [vmem:[#allocation2 + $0x110] sm:$0xff] %v804
    %869 = vst [vmem:[#allocation2 + $0x118] sm:$0xff] %v805
    %870 = vst [vmem:[#allocation2 + $0x120] sm:$0xff] %v806
    %871 = vst [vmem:[#allocation2 + $0x128] sm:$0xff] %v807
    %872 = vst [vmem:[#allocation2 + $0x130] sm:$0xff] %v808
    %873 = vst [vmem:[#allocation2 + $0x138] sm:$0xff] %v809
    %874 = vst [vmem:[#allocation2 + $0x140] sm:$0xff] %v810
    %875 = vst [vmem:[#allocation2 + $0x148] sm:$0xff] %v811
    %876 = vst [vmem:[#allocation2 + $0x150] sm:$0xff] %v812
    %877 = vst [vmem:[#allocation2 + $0x158] sm:$0xff] %v813
    %878 = vst [vmem:[#allocation2 + $0x160] sm:$0xff] %v814
    %879 = vst [vmem:[#allocation2 + $0x168] sm:$0xff] %v815
    %880 = vst [vmem:[#allocation2 + $0x170] sm:$0xff] %v816
    %881 = vst [vmem:[#allocation2 + $0x178] sm:$0xff] %v817
    %882 = vst [vmem:[#allocation2 + $0x180] sm:$0xff] %v818
    %883 = vst [vmem:[#allocation2 + $0x188] sm:$0xff] %v819
    %884 = vst [vmem:[#allocation2 + $0x190] sm:$0xff] %v820
    %885 = vst [vmem:[#allocation2 + $0x198] sm:$0xff] %v821
    %886 = vst [vmem:[#allocation2 + $0x1a0] sm:$0xff] %v822
    %887 = vst [vmem:[#allocation2 + $0x1a8] sm:$0xff] %v823
    %888 = vst [vmem:[#allocation2 + $0x1b0] sm:$0xff] %v824
    %889 = vst [vmem:[#allocation2 + $0x1b8] sm:$0xff] %v825
    %890 = vst [vmem:[#allocation2 + $0x1c0] sm:$0xff] %v826
    %891 = vst [vmem:[#allocation2 + $0x1c8] sm:$0xff] %v827
    %892 = vst [vmem:[#allocation2 + $0x1d0] sm:$0xff] %v828
    %893 = vst [vmem:[#allocation2 + $0x1d8] sm:$0xff] %v829
    %894 = vst [vmem:[#allocation2 + $0x1e0] sm:$0xff] %v830
    %895 = vst [vmem:[#allocation2 + $0x1e8] sm:$0xff] %v831
    %896 = vst [vmem:[#allocation2 + $0x1f0] sm:$0xff] %v832
    %897 = vst [vmem:[#allocation2 + $0x1f8] sm:$0xff] %v833
    // Predicated region
    $region22: #{_lambda_.21} parent=1 // pred_check
      %p898 = pneg %p29
    $region23: #{_lambda_.21} parent=1 // pred_check_branch
      %900 = sbr.rel (%p898) target = $region25
    $region24: #{_lambda_.21} parent=1 // pred_region
      %v901 = vld [vmem:[#allocation2] sm:$0xff]
      %v902 = vld [vmem:[#allocation2 + $0x8] sm:$0xff]
      %v903 = vld [vmem:[#allocation2 + $0x10] sm:$0xff]
      %v904 = vld [vmem:[#allocation2 + $0x18] sm:$0xff]
      %v905 = vld [vmem:[#allocation2 + $0x20] sm:$0xff]
      %v906 = vld [vmem:[#allocation2 + $0x28] sm:$0xff]
      %v907 = vld [vmem:[#allocation2 + $0x30] sm:$0xff]
      %v908 = vld [vmem:[#allocation2 + $0x38] sm:$0xff]
      %v909 = vld [vmem:[#allocation2 + $0x40] sm:$0xff]
      %v910 = vld [vmem:[#allocation2 + $0x48] sm:$0xff]
      %v911 = vld [vmem:[#allocation2 + $0x50] sm:$0xff]
      %v912 = vld [vmem:[#allocation2 + $0x58] sm:$0xff]
      %v913 = vld [vmem:[#allocation2 + $0x60] sm:$0xff]
      %v914 = vld [vmem:[#allocation2 + $0x68] sm:$0xff]
      %v915 = vld [vmem:[#allocation2 + $0x70] sm:$0xff]
      %v916 = vld [vmem:[#allocation2 + $0x78] sm:$0xff]
      %v917 = vld [vmem:[#allocation2 + $0x80] sm:$0xff]
      %v918 = vld [vmem:[#allocation2 + $0x88] sm:$0xff]
      %v919 = vld [vmem:[#allocation2 + $0x90] sm:$0xff]
      %v920 = vld [vmem:[#allocation2 + $0x98] sm:$0xff]
      %v921 = vld [vmem:[#allocation2 + $0xa0] sm:$0xff]
      %v922 = vld [vmem:[#allocation2 + $0xa8] sm:$0xff]
      %v923 = vld [vmem:[#allocation2 + $0xb0] sm:$0xff]
      %v924 = vld [vmem:[#allocation2 + $0xb8] sm:$0xff]
      %v925 = vld [vmem:[#allocation2 + $0xc0] sm:$0xff]
      %v926 = vld [vmem:[#allocation2 + $0xc8] sm:$0xff]
      %v927 = vld [vmem:[#allocation2 + $0xd0] sm:$0xff]
      %v928 = vld [vmem:[#allocation2 + $0xd8] sm:$0xff]
      %v929 = vld [vmem:[#allocation2 + $0xe0] sm:$0xff]
      %v930 = vld [vmem:[#allocation2 + $0xe8] sm:$0xff]
      %v931 = vld [vmem:[#allocation2 + $0xf0] sm:$0xff]
      %v932 = vld [vmem:[#allocation2 + $0xf8] sm:$0xff]
      %v933 = vld [vmem:[#allocation2 + $0x100] sm:$0xff]
      %v934 = vld [vmem:[#allocation2 + $0x108] sm:$0xff]
      %v935 = vld [vmem:[#allocation2 + $0x110] sm:$0xff]
      %v936 = vld [vmem:[#allocation2 + $0x118] sm:$0xff]
      %v937 = vld [vmem:[#allocation2 + $0x120] sm:$0xff]
      %v938 = vld [vmem:[#allocation2 + $0x128] sm:$0xff]
      %v939 = vld [vmem:[#allocation2 + $0x130] sm:$0xff]
      %v940 = vld [vmem:[#allocation2 + $0x138] sm:$0xff]
      %v941 = vld [vmem:[#allocation2 + $0x140] sm:$0xff]
      %v942 = vld [vmem:[#allocation2 + $0x148] sm:$0xff]
      %v943 = vld [vmem:[#allocation2 + $0x150] sm:$0xff]
      %v944 = vld [vmem:[#allocation2 + $0x158] sm:$0xff]
      %v945 = vld [vmem:[#allocation2 + $0x160] sm:$0xff]
      %v946 = vld [vmem:[#allocation2 + $0x168] sm:$0xff]
      %v947 = vld [vmem:[#allocation2 + $0x170] sm:$0xff]
      %v948 = vld [vmem:[#allocation2 + $0x178] sm:$0xff]
      %v949 = vld [vmem:[#allocation2 + $0x180] sm:$0xff]
      %v950 = vld [vmem:[#allocation2 + $0x188] sm:$0xff]
      %v951 = vld [vmem:[#allocation2 + $0x190] sm:$0xff]
      %v952 = vld [vmem:[#allocation2 + $0x198] sm:$0xff]
      %v953 = vld [vmem:[#allocation2 + $0x1a0] sm:$0xff]
      %v954 = vld [vmem:[#allocation2 + $0x1a8] sm:$0xff]
      %v955 = vld [vmem:[#allocation2 + $0x1b0] sm:$0xff]
      %v956 = vld [vmem:[#allocation2 + $0x1b8] sm:$0xff]
      %v957 = vld [vmem:[#allocation2 + $0x1c0] sm:$0xff]
      %v958 = vld [vmem:[#allocation2 + $0x1c8] sm:$0xff]
      %v959 = vld [vmem:[#allocation2 + $0x1d0] sm:$0xff]
      %v960 = vld [vmem:[#allocation2 + $0x1d8] sm:$0xff]
      %v961 = vld [vmem:[#allocation2 + $0x1e0] sm:$0xff]
      %v962 = vld [vmem:[#allocation2 + $0x1e8] sm:$0xff]
      %v963 = vld [vmem:[#allocation2 + $0x1f0] sm:$0xff]
      %v964 = vld [vmem:[#allocation2 + $0x1f8] sm:$0xff]
      %965 = vst [vmem:[%s3] sm:$0xff] %v901
      %966 = vst [vmem:[%s3 + $0x8] sm:$0xff] %v902
      %967 = vst [vmem:[%s3 + $0x10] sm:$0xff] %v903
      %968 = vst [vmem:[%s3 + $0x18] sm:$0xff] %v904
      %969 = vst [vmem:[%s3 + $0x20] sm:$0xff] %v905
      %970 = vst [vmem:[%s3 + $0x28] sm:$0xff] %v906
      %971 = vst [vmem:[%s3 + $0x30] sm:$0xff] %v907
      %972 = vst [vmem:[%s3 + $0x38] sm:$0xff] %v908
      %973 = vst [vmem:[%s3 + $0x40] sm:$0xff] %v909
      %974 = vst [vmem:[%s3 + $0x48] sm:$0xff] %v910
      %975 = vst [vmem:[%s3 + $0x50] sm:$0xff] %v911
      %976 = vst [vmem:[%s3 + $0x58] sm:$0xff] %v912
      %977 = vst [vmem:[%s3 + $0x60] sm:$0xff] %v913
      %978 = vst [vmem:[%s3 + $0x68] sm:$0xff] %v914
      %979 = vst [vmem:[%s3 + $0x70] sm:$0xff] %v915
      %980 = vst [vmem:[%s3 + $0x78] sm:$0xff] %v916
      %981 = vst [vmem:[%s3 + $0x80] sm:$0xff] %v917
      %982 = vst [vmem:[%s3 + $0x88] sm:$0xff] %v918
      %983 = vst [vmem:[%s3 + $0x90] sm:$0xff] %v919
      %984 = vst [vmem:[%s3 + $0x98] sm:$0xff] %v920
      %985 = vst [vmem:[%s3 + $0xa0] sm:$0xff] %v921
      %986 = vst [vmem:[%s3 + $0xa8] sm:$0xff] %v922
      %987 = vst [vmem:[%s3 + $0xb0] sm:$0xff] %v923
      %988 = vst [vmem:[%s3 + $0xb8] sm:$0xff] %v924
      %989 = vst [vmem:[%s3 + $0xc0] sm:$0xff] %v925
      %990 = vst [vmem:[%s3 + $0xc8] sm:$0xff] %v926
      %991 = vst [vmem:[%s3 + $0xd0] sm:$0xff] %v927
      %992 = vst [vmem:[%s3 + $0xd8] sm:$0xff] %v928
      %993 = vst [vmem:[%s3 + $0xe0] sm:$0xff] %v929
      %994 = vst [vmem:[%s3 + $0xe8] sm:$0xff] %v930
      %995 = vst [vmem:[%s3 + $0xf0] sm:$0xff] %v931
      %996 = vst [vmem:[%s3 + $0xf8] sm:$0xff] %v932
      %997 = vst [vmem:[%s3 + $0x100] sm:$0xff] %v933
      %998 = vst [vmem:[%s3 + $0x108] sm:$0xff] %v934
      %999 = vst [vmem:[%s3 + $0x110] sm:$0xff] %v935
      %1000 = vst [vmem:[%s3 + $0x118] sm:$0xff] %v936
      %1001 = vst [vmem:[%s3 + $0x120] sm:$0xff] %v937
      %1002 = vst [vmem:[%s3 + $0x128] sm:$0xff] %v938
      %1003 = vst [vmem:[%s3 + $0x130] sm:$0xff] %v939
      %1004 = vst [vmem:[%s3 + $0x138] sm:$0xff] %v940
      %1005 = vst [vmem:[%s3 + $0x140] sm:$0xff] %v941
      %1006 = vst [vmem:[%s3 + $0x148] sm:$0xff] %v942
      %1007 = vst [vmem:[%s3 + $0x150] sm:$0xff] %v943
      %1008 = vst [vmem:[%s3 + $0x158] sm:$0xff] %v944
      %1009 = vst [vmem:[%s3 + $0x160] sm:$0xff] %v945
      %1010 = vst [vmem:[%s3 + $0x168] sm:$0xff] %v946
      %1011 = vst [vmem:[%s3 + $0x170] sm:$0xff] %v947
      %1012 = vst [vmem:[%s3 + $0x178] sm:$0xff] %v948
      %1013 = vst [vmem:[%s3 + $0x180] sm:$0xff] %v949
      %1014 = vst [vmem:[%s3 + $0x188] sm:$0xff] %v950
      %1015 = vst [vmem:[%s3 + $0x190] sm:$0xff] %v951
      %1016 = vst [vmem:[%s3 + $0x198] sm:$0xff] %v952
      %1017 = vst [vmem:[%s3 + $0x1a0] sm:$0xff] %v953
      %1018 = vst [vmem:[%s3 + $0x1a8] sm:$0xff] %v954
      %1019 = vst [vmem:[%s3 + $0x1b0] sm:$0xff] %v955
      %1020 = vst [vmem:[%s3 + $0x1b8] sm:$0xff] %v956
      %1021 = vst [vmem:[%s3 + $0x1c0] sm:$0xff] %v957
      %1022 = vst [vmem:[%s3 + $0x1c8] sm:$0xff] %v958
      %1023 = vst [vmem:[%s3 + $0x1d0] sm:$0xff] %v959
      %1024 = vst [vmem:[%s3 + $0x1d8] sm:$0xff] %v960
      %1025 = vst [vmem:[%s3 + $0x1e0] sm:$0xff] %v961
      %1026 = vst [vmem:[%s3 + $0x1e8] sm:$0xff] %v962
      %1027 = vst [vmem:[%s3 + $0x1f0] sm:$0xff] %v963
      %1028 = vst [vmem:[%s3 + $0x1f8] sm:$0xff] %v964
    $region25: #{_lambda_.21} parent=1 // pred_fallthru
      _
    // Predicated region
    $region26: #{_lambda_.21} parent=1 // pred_check
      _
    $region27: #{_lambda_.21} parent=1 // pred_check_branch
      %1030 = sbr.rel (0) target = $region29
    $region28: #{_lambda_.21} parent=1 // pred_region
      _
    $region29: #{_lambda_.21} parent=1 // pred_fallthru
      _
    // Predicated region
    $region30: #{_lambda_.21} parent=1 // pred_check
      _
    $region31: #{_lambda_.21} parent=1 // pred_check_branch
      %1032 = sbr.rel (0) target = $region33
    $region32: #{_lambda_.21} parent=1 // pred_region
      _
    $region33: #{_lambda_.21} parent=1 // pred_fallthru
      _
    %1033 = vsyncpa [#allocation4], 1

// kernel: _lambda_.22
$region0: #{_lambda_.22}
  #allocation0 [shape = 'u32[]', space=smem, size = 0x4, offset = 0x4, fixed_abs, tag = 'smem constant byte address 0x4 - core index']
  #allocation1 [shape = 'u32[144,128]{1,0:T(1,128)}', space=vmem, size = 0x12000, scoped, tag = 'internal scratch']
  #allocation2 [shape = 'f32[128,128]{1,0:T(8,128)}', space=vmem, size = 0x10000, scoped, tag = 'scratch operand']
  %s0 = inlined_call_operand.vmem [shape: bf16[128,128], index: 0, kind: input, shape index: {}]
  %s1 = inlined_call_operand.vmem [shape: bf16[128,128], index: 1, kind: input, shape index: {}]
  %s2 = inlined_call_operand.vmem [shape: f32[1,128], index: 2, kind: input, shape index: {}]
  %s3 = inlined_call_operand.vmem [shape: f32[128,128], index: 3, kind: output, shape index: {}]
  %s4 = sld [smem:[#allocation0]]
  $region30: #{_lambda_.22} parent=0
    _
  %s6 = ssub.s32 1, %s4
  %s7 = scalar_select 0, %s6, %s4
  // Predicated region
  $region2: #{_lambda_.22} parent=0 // pred_check
    _
  $region3: #{_lambda_.22} parent=0 // pred_check_branch
    %9 = sbr.rel (0) target = $region5
  $region4: #{_lambda_.22} parent=0 // pred_region
    _
  $region5: #{_lambda_.22} parent=0 // pred_fallthru
    _
  // Predicated region
  $region6: #{_lambda_.22} parent=0 // pred_check
    _
  $region7: #{_lambda_.22} parent=0 // pred_check_branch
    %11 = sbr.rel (0) target = $region9
  $region8: #{_lambda_.22} parent=0 // pred_region
    _
  $region9: #{_lambda_.22} parent=0 // pred_fallthru
    _
  // Predicated region
  $region10: #{_lambda_.22} parent=0 // pred_check
    _
  $region11: #{_lambda_.22} parent=0 // pred_check_branch
    %13 = sbr.rel (0) target = $region13
  $region12: #{_lambda_.22} parent=0 // pred_region
    _
  $region13: #{_lambda_.22} parent=0 // pred_fallthru
    _
  %p16 = scmp.eq.s32.totalorder 0, 0
  // Predicated region
  $region14: #{_lambda_.22} parent=0 // pred_check
    %p17 = pneg %p16
  $region15: #{_lambda_.22} parent=0 // pred_check_branch
    %19 = sbr.rel (%p17) target = $region17
  $region16: #{_lambda_.22} parent=0 // pred_region
    %20 = vst [vmem:[#allocation2] sm:$0xff] 0.0
    %21 = vst [vmem:[#allocation2 + $0x8] sm:$0xff] 0.0
    %22 = vst [vmem:[#allocation2 + $0x10] sm:$0xff] 0.0
    %23 = vst [vmem:[#allocation2 + $0x18] sm:$0xff] 0.0
    %24 = vst [vmem:[#allocation2 + $0x20] sm:$0xff] 0.0
    %25 = vst [vmem:[#allocation2 + $0x28] sm:$0xff] 0.0
    %26 = vst [vmem:[#allocation2 + $0x30] sm:$0xff] 0.0
    %27 = vst [vmem:[#allocation2 + $0x38] sm:$0xff] 0.0
    %28 = vst [vmem:[#allocation2 + $0x40] sm:$0xff] 0.0
    %29 = vst [vmem:[#allocation2 + $0x48] sm:$0xff] 0.0
    %30 = vst [vmem:[#allocation2 + $0x50] sm:$0xff] 0.0
    %31 = vst [vmem:[#allocation2 + $0x58] sm:$0xff] 0.0
    %32 = vst [vmem:[#allocation2 + $0x60] sm:$0xff] 0.0
    %33 = vst [vmem:[#allocation2 + $0x68] sm:$0xff] 0.0
    %34 = vst [vmem:[#allocation2 + $0x70] sm:$0xff] 0.0
    %35 = vst [vmem:[#allocation2 + $0x78] sm:$0xff] 0.0
  $region17: #{_lambda_.22} parent=0 // pred_fallthru
    _
  %v36 = vld [vmem:[%s0] sm:$0xf]
  %v37 = vld [vmem:[%s0 + $0x4] sm:$0xf]
  %v38 = vld [vmem:[%s0 + $0x8] sm:$0xf]
  %v39 = vld [vmem:[%s0 + $0xc] sm:$0xf]
  %v40 = vld [vmem:[%s0 + $0x10] sm:$0xf]
  %v41 = vld [vmem:[%s0 + $0x14] sm:$0xf]
  %v42 = vld [vmem:[%s0 + $0x18] sm:$0xf]
  %v43 = vld [vmem:[%s0 + $0x1c] sm:$0xf]
  %v44 = vld [vmem:[%s0 + $0x20] sm:$0xf]
  %v45 = vld [vmem:[%s0 + $0x24] sm:$0xf]
  %v46 = vld [vmem:[%s0 + $0x28] sm:$0xf]
  %v47 = vld [vmem:[%s0 + $0x2c] sm:$0xf]
  %v48 = vld [vmem:[%s0 + $0x30] sm:$0xf]
  %v49 = vld [vmem:[%s0 + $0x34] sm:$0xf]
  %v50 = vld [vmem:[%s0 + $0x38] sm:$0xf]
  %v51 = vld [vmem:[%s0 + $0x3c] sm:$0xf]
  %vm52 = vcmp.ge.bf16.partialorder %v36, 0
  %vm53 = vcmp.ge.bf16.partialorder %v37, 0
  %vm54 = vcmp.ge.bf16.partialorder %v38, 0
  %vm55 = vcmp.ge.bf16.partialorder %v39, 0
  %vm56 = vcmp.ge.bf16.partialorder %v40, 0
  %vm57 = vcmp.ge.bf16.partialorder %v41, 0
  %vm58 = vcmp.ge.bf16.partialorder %v42, 0
  %vm59 = vcmp.ge.bf16.partialorder %v43, 0
  %vm60 = vcmp.ge.bf16.partialorder %v44, 0
  %vm61 = vcmp.ge.bf16.partialorder %v45, 0
  %vm62 = vcmp.ge.bf16.partialorder %v46, 0
  %vm63 = vcmp.ge.bf16.partialorder %v47, 0
  %vm64 = vcmp.ge.bf16.partialorder %v48, 0
  %vm65 = vcmp.ge.bf16.partialorder %v49, 0
  %vm66 = vcmp.ge.bf16.partialorder %v50, 0
  %vm67 = vcmp.ge.bf16.partialorder %v51, 0
  %v68 = vmul.bf16 %v36, 1045249613
  %v69 = vmul.bf16 %v37, 1045249613
  %v70 = vmul.bf16 %v38, 1045249613
  %v71 = vmul.bf16 %v39, 1045249613
  %v72 = vmul.bf16 %v40, 1045249613
  %v73 = vmul.bf16 %v41, 1045249613
  %v74 = vmul.bf16 %v42, 1045249613
  %v75 = vmul.bf16 %v43, 1045249613
  %v76 = vmul.bf16 %v44, 1045249613
  %v77 = vmul.bf16 %v45, 1045249613
  %v78 = vmul.bf16 %v46, 1045249613
  %v79 = vmul.bf16 %v47, 1045249613
  %v80 = vmul.bf16 %v48, 1045249613
  %v81 = vmul.bf16 %v49, 1045249613
  %v82 = vmul.bf16 %v50, 1045249613
  %v83 = vmul.bf16 %v51, 1045249613
  %v84 = vsel %vm52, %v36, %v68
  %v85 = vsel %vm53, %v37, %v69
  %v86 = vsel %vm54, %v38, %v70
  %v87 = vsel %vm55, %v39, %v71
  %v88 = vsel %vm56, %v40, %v72
  %v89 = vsel %vm57, %v41, %v73
  %v90 = vsel %vm58, %v42, %v74
  %v91 = vsel %vm59, %v43, %v75
  %v92 = vsel %vm60, %v44, %v76
  %v93 = vsel %vm61, %v45, %v77
  %v94 = vsel %vm62, %v46, %v78
  %v95 = vsel %vm63, %v47, %v79
  %v96 = vsel %vm64, %v48, %v80
  %v97 = vsel %vm65, %v49, %v81
  %v98 = vsel %vm66, %v50, %v82
  %v99 = vsel %vm67, %v51, %v83
  %v100 = vld [vmem:[#allocation2] sm:$0xff]
  %v101 = vld [vmem:[#allocation2 + $0x8] sm:$0xff]
  %v102 = vld [vmem:[#allocation2 + $0x10] sm:$0xff]
  %v103 = vld [vmem:[#allocation2 + $0x18] sm:$0xff]
  %v104 = vld [vmem:[#allocation2 + $0x20] sm:$0xff]
  %v105 = vld [vmem:[#allocation2 + $0x28] sm:$0xff]
  %v106 = vld [vmem:[#allocation2 + $0x30] sm:$0xff]
  %v107 = vld [vmem:[#allocation2 + $0x38] sm:$0xff]
  %v108 = vld [vmem:[#allocation2 + $0x40] sm:$0xff]
  %v109 = vld [vmem:[#allocation2 + $0x48] sm:$0xff]
  %v110 = vld [vmem:[#allocation2 + $0x50] sm:$0xff]
  %v111 = vld [vmem:[#allocation2 + $0x58] sm:$0xff]
  %v112 = vld [vmem:[#allocation2 + $0x60] sm:$0xff]
  %v113 = vld [vmem:[#allocation2 + $0x68] sm:$0xff]
  %v114 = vld [vmem:[#allocation2 + $0x70] sm:$0xff]
  %v115 = vld [vmem:[#allocation2 + $0x78] sm:$0xff]
  %v116 = vld [vmem:[%s1] sm:$0xf]
  %v117 = vld [vmem:[%s1 + $0x4] sm:$0xf]
  %v118 = vld [vmem:[%s1 + $0x8] sm:$0xf]
  %v119 = vld [vmem:[%s1 + $0xc] sm:$0xf]
  %v120 = vld [vmem:[%s1 + $0x10] sm:$0xf]
  %v121 = vld [vmem:[%s1 + $0x14] sm:$0xf]
  %v122 = vld [vmem:[%s1 + $0x18] sm:$0xf]
  %v123 = vld [vmem:[%s1 + $0x1c] sm:$0xf]
  %v124 = vld [vmem:[%s1 + $0x20] sm:$0xf]
  %v125 = vld [vmem:[%s1 + $0x24] sm:$0xf]
  %v126 = vld [vmem:[%s1 + $0x28] sm:$0xf]
  %v127 = vld [vmem:[%s1 + $0x2c] sm:$0xf]
  %v128 = vld [vmem:[%s1 + $0x30] sm:$0xf]
  %v129 = vld [vmem:[%s1 + $0x34] sm:$0xf]
  %v130 = vld [vmem:[%s1 + $0x38] sm:$0xf]
  %v131 = vld [vmem:[%s1 + $0x3c] sm:$0xf]
  %v148 = vunpack.c.l.b16 %v84
  %v149 = vunpack.c.l.b16 %v85
  %v150 = vunpack.c.l.b16 %v86
  %v151 = vunpack.c.l.b16 %v87
  %v152 = vunpack.c.l.b16 %v88
  %v153 = vunpack.c.l.b16 %v89
  %v154 = vunpack.c.l.b16 %v90
  %v155 = vunpack.c.l.b16 %v91
  %v156 = vunpack.c.l.b16 %v92
  %v157 = vunpack.c.l.b16 %v93
  %v158 = vunpack.c.l.b16 %v94
  %v159 = vunpack.c.l.b16 %v95
  %v160 = vunpack.c.l.b16 %v96
  %v161 = vunpack.c.l.b16 %v97
  %v162 = vunpack.c.l.b16 %v98
  %v163 = vunpack.c.l.b16 %v99
  %v164 = vpack.c.b16 %v149, %v148
  %v165 = vpack.c.b16 %v151, %v150
  %v166 = vpack.c.b16 %v153, %v152
  %v167 = vpack.c.b16 %v155, %v154
  %v168 = vpack.c.b16 %v157, %v156
  %v169 = vpack.c.b16 %v159, %v158
  %v170 = vpack.c.b16 %v161, %v160
  %v171 = vpack.c.b16 %v163, %v162
  %v196 = vunpack.c.l.b16 %v116
  %v197 = vunpack.c.l.b16 %v117
  %v198 = vunpack.c.l.b16 %v118
  %v199 = vunpack.c.l.b16 %v119
  %v200 = vunpack.c.l.b16 %v120
  %v201 = vunpack.c.l.b16 %v121
  %v202 = vunpack.c.l.b16 %v122
  %v203 = vunpack.c.l.b16 %v123
  %v204 = vunpack.c.l.b16 %v124
  %v205 = vunpack.c.l.b16 %v125
  %v206 = vunpack.c.l.b16 %v126
  %v207 = vunpack.c.l.b16 %v127
  %v208 = vunpack.c.l.b16 %v128
  %v209 = vunpack.c.l.b16 %v129
  %v210 = vunpack.c.l.b16 %v130
  %v211 = vunpack.c.l.b16 %v131
  %v212 = vpack.c.b16 %v197, %v196
  %v213 = vpack.c.b16 %v199, %v198
  %v214 = vpack.c.b16 %v201, %v200
  %v215 = vpack.c.b16 %v203, %v202
  %v216 = vpack.c.b16 %v205, %v204
  %v217 = vpack.c.b16 %v207, %v206
  %v218 = vpack.c.b16 %v209, %v208
  %v219 = vpack.c.b16 %v211, %v210
  %228 = vmatprep.subr.bf16.mxu0 0
  %229 = vmatpush1.bf16.msra.mxu0 %v212
  %230 = vmatprep.subr.bf16.mxu0 0
  %231 = vmatpush1.bf16.msra.mxu0 %v213
  %232 = vmatprep.subr.bf16.mxu0 0
  %233 = vmatpush1.bf16.msra.mxu0 %v214
  %234 = vmatprep.subr.bf16.mxu0 0
  %235 = vmatpush1.bf16.msra.mxu0 %v215
  %236 = vmatprep.subr.bf16.mxu0 0
  %237 = vmatpush1.bf16.msra.mxu0 %v216
  %238 = vmatprep.subr.bf16.mxu0 0
  %239 = vmatpush1.bf16.msra.mxu0 %v217
  %240 = vmatprep.subr.bf16.mxu0 0
  %241 = vmatpush1.bf16.msra.mxu0 %v218
  %242 = vmatprep.subr.bf16.mxu0 0
  %243 = vmatpush1.bf16.msra.mxu0 %v219
  %244 = vmatprep.subr.bf16.mxu0 0
  %245 = vmatpush1.bf16.msra.mxu0 0
  %246 = vmatprep.subr.bf16.mxu0 0
  %247 = vmatpush1.bf16.msra.mxu0 0
  %248 = vmatprep.subr.bf16.mxu0 0
  %249 = vmatpush1.bf16.msra.mxu0 0
  %250 = vmatprep.subr.bf16.mxu0 0
  %251 = vmatpush1.bf16.msra.mxu0 0
  %252 = vmatprep.subr.bf16.mxu0 0
  %253 = vmatpush1.bf16.msra.mxu0 0
  %254 = vmatprep.subr.bf16.mxu0 0
  %255 = vmatpush1.bf16.msra.mxu0 0
  %256 = vmatprep.subr.bf16.mxu0 0
  %257 = vmatpush1.bf16.msra.mxu0 0
  %258 = vmatprep.subr.bf16.mxu0 0
  %259 = vmatpush1.bf16.msra.mxu0 0
  %260 = vmatprep.mubr.bf16.mxu0 0
  %261 = vmatmul.mubr.bf16.gmra.mrb[0].mxu0 %v164
  %v262 = vpop.f32.mrb[0].mxu0
  %v263 = vadd.f32 0.0, %v262
  %v264 = vpop.f32.mrb[0].mxu0
  %v265 = vpop.f32.mrb[0].mxu0
  %v266 = vadd.f32 0.0, %v265
  %v267 = vpop.f32.mrb[0].mxu0
  %268 = vmatprep.mubr.bf16.mxu0 0
  %269 = vmatmul.mubr.bf16.gmra.mrb[0].mxu0 %v165
  %v270 = vpop.f32.mrb[0].mxu0
  %v271 = vadd.f32 0.0, %v270
  %v272 = vpop.f32.mrb[0].mxu0
  %v273 = vpop.f32.mrb[0].mxu0
  %v274 = vadd.f32 0.0, %v273
  %v275 = vpop.f32.mrb[0].mxu0
  %276 = vmatprep.mubr.bf16.mxu0 0
  %277 = vmatmul.mubr.bf16.gmra.mrb[0].mxu0 %v166
  %v278 = vpop.f32.mrb[0].mxu0
  %v279 = vadd.f32 0.0, %v278
  %v280 = vpop.f32.mrb[0].mxu0
  %v281 = vpop.f32.mrb[0].mxu0
  %v282 = vadd.f32 0.0, %v281
  %v283 = vpop.f32.mrb[0].mxu0
  %284 = vmatprep.mubr.bf16.mxu0 0
  %285 = vmatmul.mubr.bf16.gmra.mrb[0].mxu0 %v167
  %v286 = vpop.f32.mrb[0].mxu0
  %v287 = vadd.f32 0.0, %v286
  %v288 = vpop.f32.mrb[0].mxu0
  %v289 = vpop.f32.mrb[0].mxu0
  %v290 = vadd.f32 0.0, %v289
  %v291 = vpop.f32.mrb[0].mxu0
  %292 = vmatprep.mubr.bf16.mxu0 0
  %293 = vmatmul.mubr.bf16.gmra.mrb[0].mxu0 %v168
  %v294 = vpop.f32.mrb[0].mxu0
  %v295 = vadd.f32 0.0, %v294
  %v296 = vpop.f32.mrb[0].mxu0
  %v297 = vpop.f32.mrb[0].mxu0
  %v298 = vadd.f32 0.0, %v297
  %v299 = vpop.f32.mrb[0].mxu0
  %300 = vmatprep.mubr.bf16.mxu0 0
  %301 = vmatmul.mubr.bf16.gmra.mrb[0].mxu0 %v169
  %v302 = vpop.f32.mrb[0].mxu0
  %v303 = vadd.f32 0.0, %v302
  %v304 = vpop.f32.mrb[0].mxu0
  %v305 = vpop.f32.mrb[0].mxu0
  %v306 = vadd.f32 0.0, %v305
  %v307 = vpop.f32.mrb[0].mxu0
  %308 = vmatprep.mubr.bf16.mxu0 0
  %309 = vmatmul.mubr.bf16.gmra.mrb[0].mxu0 %v170
  %v310 = vpop.f32.mrb[0].mxu0
  %v311 = vadd.f32 0.0, %v310
  %v312 = vpop.f32.mrb[0].mxu0
  %v313 = vpop.f32.mrb[0].mxu0
  %v314 = vadd.f32 0.0, %v313
  %v315 = vpop.f32.mrb[0].mxu0
  %316 = vmatprep.mubr.bf16.mxu0 0
  %317 = vmatmul.mubr.bf16.gmra.mrb[0].mxu0 %v171
  %v318 = vpop.f32.mrb[0].mxu0
  %v319 = vadd.f32 0.0, %v318
  %v320 = vpop.f32.mrb[0].mxu0
  %v321 = vpop.f32.mrb[0].mxu0
  %v322 = vadd.f32 0.0, %v321
  %v323 = vpop.f32.mrb[0].mxu0
  %324 = vdwg.mxu0
  %v325 = vadd.f32 %v100, %v263
  %v326 = vadd.f32 %v101, %v266
  %v327 = vadd.f32 %v102, %v271
  %v328 = vadd.f32 %v103, %v274
  %v329 = vadd.f32 %v104, %v279
  %v330 = vadd.f32 %v105, %v282
  %v331 = vadd.f32 %v106, %v287
  %v332 = vadd.f32 %v107, %v290
  %v333 = vadd.f32 %v108, %v295
  %v334 = vadd.f32 %v109, %v298
  %v335 = vadd.f32 %v110, %v303
  %v336 = vadd.f32 %v111, %v306
  %v337 = vadd.f32 %v112, %v311
  %v338 = vadd.f32 %v113, %v314
  %v339 = vadd.f32 %v114, %v319
  %v340 = vadd.f32 %v115, %v322
  %341 = vst [vmem:[#allocation2] sm:$0xff] %v325
  %342 = vst [vmem:[#allocation2 + $0x8] sm:$0xff] %v326
  %343 = vst [vmem:[#allocation2 + $0x10] sm:$0xff] %v327
  %344 = vst [vmem:[#allocation2 + $0x18] sm:$0xff] %v328
  %345 = vst [vmem:[#allocation2 + $0x20] sm:$0xff] %v329
  %346 = vst [vmem:[#allocation2 + $0x28] sm:$0xff] %v330
  %347 = vst [vmem:[#allocation2 + $0x30] sm:$0xff] %v331
  %348 = vst [vmem:[#allocation2 + $0x38] sm:$0xff] %v332
  %349 = vst [vmem:[#allocation2 + $0x40] sm:$0xff] %v333
  %350 = vst [vmem:[#allocation2 + $0x48] sm:$0xff] %v334
  %351 = vst [vmem:[#allocation2 + $0x50] sm:$0xff] %v335
  %352 = vst [vmem:[#allocation2 + $0x58] sm:$0xff] %v336
  %353 = vst [vmem:[#allocation2 + $0x60] sm:$0xff] %v337
  %354 = vst [vmem:[#allocation2 + $0x68] sm:$0xff] %v338
  %355 = vst [vmem:[#allocation2 + $0x70] sm:$0xff] %v339
  %356 = vst [vmem:[#allocation2 + $0x78] sm:$0xff] %v340
  // Predicated region
  $region18: #{_lambda_.22} parent=0 // pred_check
    %p357 = pneg %p16
  $region19: #{_lambda_.22} parent=0 // pred_check_branch
    %359 = sbr.rel (%p357) target = $region21
  $region20: #{_lambda_.22} parent=0 // pred_region
    %v360 = vld [vmem:[#allocation2] sm:$0xff]
    %v361 = vld [vmem:[#allocation2 + $0x8] sm:$0xff]
    %v362 = vld [vmem:[#allocation2 + $0x10] sm:$0xff]
    %v363 = vld [vmem:[#allocation2 + $0x18] sm:$0xff]
    %v364 = vld [vmem:[#allocation2 + $0x20] sm:$0xff]
    %v365 = vld [vmem:[#allocation2 + $0x28] sm:$0xff]
    %v366 = vld [vmem:[#allocation2 + $0x30] sm:$0xff]
    %v367 = vld [vmem:[#allocation2 + $0x38] sm:$0xff]
    %v368 = vld [vmem:[#allocation2 + $0x40] sm:$0xff]
    %v369 = vld [vmem:[#allocation2 + $0x48] sm:$0xff]
    %v370 = vld [vmem:[#allocation2 + $0x50] sm:$0xff]
    %v371 = vld [vmem:[#allocation2 + $0x58] sm:$0xff]
    %v372 = vld [vmem:[#allocation2 + $0x60] sm:$0xff]
    %v373 = vld [vmem:[#allocation2 + $0x68] sm:$0xff]
    %v374 = vld [vmem:[#allocation2 + $0x70] sm:$0xff]
    %v375 = vld [vmem:[#allocation2 + $0x78] sm:$0xff]
    %376 = vst [vmem:[%s3] sm:$0xff] %v360
    %377 = vst [vmem:[%s3 + $0x8] sm:$0xff] %v361
    %378 = vst [vmem:[%s3 + $0x10] sm:$0xff] %v362
    %379 = vst [vmem:[%s3 + $0x18] sm:$0xff] %v363
    %380 = vst [vmem:[%s3 + $0x20] sm:$0xff] %v364
    %381 = vst [vmem:[%s3 + $0x28] sm:$0xff] %v365
    %382 = vst [vmem:[%s3 + $0x30] sm:$0xff] %v366
    %383 = vst [vmem:[%s3 + $0x38] sm:$0xff] %v367
    %384 = vst [vmem:[%s3 + $0x40] sm:$0xff] %v368
    %385 = vst [vmem:[%s3 + $0x48] sm:$0xff] %v369
    %386 = vst [vmem:[%s3 + $0x50] sm:$0xff] %v370
    %387 = vst [vmem:[%s3 + $0x58] sm:$0xff] %v371
    %388 = vst [vmem:[%s3 + $0x60] sm:$0xff] %v372
    %389 = vst [vmem:[%s3 + $0x68] sm:$0xff] %v373
    %390 = vst [vmem:[%s3 + $0x70] sm:$0xff] %v374
    %391 = vst [vmem:[%s3 + $0x78] sm:$0xff] %v375
  $region21: #{_lambda_.22} parent=0 // pred_fallthru
    _
  // Predicated region
  $region22: #{_lambda_.22} parent=0 // pred_check
    _
  $region23: #{_lambda_.22} parent=0 // pred_check_branch
    %393 = sbr.rel (0) target = $region25
  $region24: #{_lambda_.22} parent=0 // pred_region
    _
  $region25: #{_lambda_.22} parent=0 // pred_fallthru
    _
  // Predicated region
  $region26: #{_lambda_.22} parent=0 // pred_check
    _
  $region27: #{_lambda_.22} parent=0 // pred_check_branch
    %395 = sbr.rel (0) target = $region29
  $region28: #{_lambda_.22} parent=0 // pred_region
    _
  $region29: #{_lambda_.22} parent=0 // pred_fallthru
    _

// kernel: _lambda_.23
$region0: #{_lambda_.23}
  #allocation0 [shape = 'u32[]', space=smem, size = 0x4, offset = 0x4, fixed_abs, tag = 'smem constant byte address 0x4 - core index']
  #allocation1 [shape = 'u32[144,128]{1,0:T(1,128)}', space=vmem, size = 0x12000, scoped, tag = 'internal scratch']
  #allocation2 [shape = 'f32[1,128]{1,0:T(1,128)}', space=vmem, size = 0x200, scoped, tag = 'scratch operand']
  #allocation3 [shape = 'f32[1,128]{1,0:T(1,128)}', space=vmem, size = 0x200, scoped, tag = 'scratch operand']
  %s0 = inlined_call_operand.vmem [shape: f32[128,128], index: 0, kind: input, shape index: {}]
  %s1 = inlined_call_operand.vmem [shape: f32[1,128], index: 1, kind: input, shape index: {}]
  %s2 = inlined_call_operand.vmem [shape: f32[1,128], index: 2, kind: input, shape index: {}]
  %s3 = inlined_call_operand.vmem [shape: f32[1,128], index: 3, kind: output, shape index: {0}]
  %s4 = inlined_call_operand.vmem [shape: f32[1,128], index: 4, kind: output, shape index: {1}]
  %5 = xla_tuple %s3, %s4
  %s6 = sld [smem:[#allocation0]]
  $region38: #{_lambda_.23} parent=0
    _
  %s8 = ssub.s32 1, %s6
  %s9 = scalar_select 0, %s8, %s6
  // Predicated region
  $region2: #{_lambda_.23} parent=0 // pred_check
    _
  $region3: #{_lambda_.23} parent=0 // pred_check_branch
    %11 = sbr.rel (0) target = $region5
  $region4: #{_lambda_.23} parent=0 // pred_region
    _
  $region5: #{_lambda_.23} parent=0 // pred_fallthru
    _
  // Predicated region
  $region6: #{_lambda_.23} parent=0 // pred_check
    _
  $region7: #{_lambda_.23} parent=0 // pred_check_branch
    %13 = sbr.rel (0) target = $region9
  $region8: #{_lambda_.23} parent=0 // pred_region
    _
  $region9: #{_lambda_.23} parent=0 // pred_fallthru
    _
  // Predicated region
  $region10: #{_lambda_.23} parent=0 // pred_check
    _
  $region11: #{_lambda_.23} parent=0 // pred_check_branch
    %15 = sbr.rel (0) target = $region13
  $region12: #{_lambda_.23} parent=0 // pred_region
    _
  $region13: #{_lambda_.23} parent=0 // pred_fallthru
    _
  %p16 = scmp.eq.s32.totalorder 0, 0
  // Predicated region
  $region14: #{_lambda_.23} parent=0 // pred_check
    %p17 = pneg %p16
  $region15: #{_lambda_.23} parent=0 // pred_check_branch
    %19 = sbr.rel (%p17) target = $region17
  $region16: #{_lambda_.23} parent=0 // pred_region
    %20 = vst [vmem:[#allocation2] sm:$0x1] 0.0
    %21 = vst [vmem:[#allocation3] sm:$0x1] 0.0
  $region17: #{_lambda_.23} parent=0 // pred_fallthru
    _
  %v22 = vld [vmem:[%s0] sm:$0xff]
  %v23 = vld [vmem:[%s0 + $0x8] sm:$0xff]
  %v24 = vld [vmem:[%s0 + $0x10] sm:$0xff]
  %v25 = vld [vmem:[%s0 + $0x18] sm:$0xff]
  %v26 = vld [vmem:[%s0 + $0x20] sm:$0xff]
  %v27 = vld [vmem:[%s0 + $0x28] sm:$0xff]
  %v28 = vld [vmem:[%s0 + $0x30] sm:$0xff]
  %v29 = vld [vmem:[%s0 + $0x38] sm:$0xff]
  %v30 = vld [vmem:[%s0 + $0x40] sm:$0xff]
  %v31 = vld [vmem:[%s0 + $0x48] sm:$0xff]
  %v32 = vld [vmem:[%s0 + $0x50] sm:$0xff]
  %v33 = vld [vmem:[%s0 + $0x58] sm:$0xff]
  %v34 = vld [vmem:[%s0 + $0x60] sm:$0xff]
  %v35 = vld [vmem:[%s0 + $0x68] sm:$0xff]
  %v36 = vld [vmem:[%s0 + $0x70] sm:$0xff]
  %v37 = vld [vmem:[%s0 + $0x78] sm:$0xff]
  %v38 = vld [vmem:[#allocation2] sm:$0x1]
  %v39 = vadd.f32 %v22, %v23
  %v40 = vadd.f32 %v39, %v24
  %v41 = vadd.f32 %v40, %v25
  %v42 = vadd.f32 %v41, %v26
  %v43 = vadd.f32 %v42, %v27
  %v44 = vadd.f32 %v43, %v28
  %v45 = vadd.f32 %v44, %v29
  %v46 = vadd.f32 %v45, %v30
  %v47 = vadd.f32 %v46, %v31
  %v48 = vadd.f32 %v47, %v32
  %v49 = vadd.f32 %v48, %v33
  %v50 = vadd.f32 %v49, %v34
  %v51 = vadd.f32 %v50, %v35
  %v52 = vadd.f32 %v51, %v36
  %v53 = vadd.f32 %v52, %v37
  %v54 = vrot.slane %v53, 4
  %v55 = vadd.f32 %v53, %v54
  %v56 = vrot.slane %v55, 2
  %v57 = vadd.f32 %v55, %v56
  %v58 = vrot.slane %v57, 1
  %v59 = vadd.f32 %v57, %v58
  %v60 = vadd.f32 %v38, %v59
  %61 = vst [vmem:[#allocation2] sm:$0x1] %v60
  %v62 = vld [vmem:[#allocation3] sm:$0x1]
  %v63 = vmul.f32 %v22, %v22
  %v64 = vmul.f32 %v23, %v23
  %v65 = vmul.f32 %v24, %v24
  %v66 = vmul.f32 %v25, %v25
  %v67 = vmul.f32 %v26, %v26
  %v68 = vmul.f32 %v27, %v27
  %v69 = vmul.f32 %v28, %v28
  %v70 = vmul.f32 %v29, %v29
  %v71 = vmul.f32 %v30, %v30
  %v72 = vmul.f32 %v31, %v31
  %v73 = vmul.f32 %v32, %v32
  %v74 = vmul.f32 %v33, %v33
  %v75 = vmul.f32 %v34, %v34
  %v76 = vmul.f32 %v35, %v35
  %v77 = vmul.f32 %v36, %v36
  %v78 = vmul.f32 %v37, %v37
  %v79 = vadd.f32 %v63, %v64
  %v80 = vadd.f32 %v79, %v65
  %v81 = vadd.f32 %v80, %v66
  %v82 = vadd.f32 %v81, %v67
  %v83 = vadd.f32 %v82, %v68
  %v84 = vadd.f32 %v83, %v69
  %v85 = vadd.f32 %v84, %v70
  %v86 = vadd.f32 %v85, %v71
  %v87 = vadd.f32 %v86, %v72
  %v88 = vadd.f32 %v87, %v73
  %v89 = vadd.f32 %v88, %v74
  %v90 = vadd.f32 %v89, %v75
  %v91 = vadd.f32 %v90, %v76
  %v92 = vadd.f32 %v91, %v77
  %v93 = vadd.f32 %v92, %v78
  %v94 = vrot.slane %v93, 4
  %v95 = vadd.f32 %v93, %v94
  %v96 = vrot.slane %v95, 2
  %v97 = vadd.f32 %v95, %v96
  %v98 = vrot.slane %v97, 1
  %v99 = vadd.f32 %v97, %v98
  %v100 = vadd.f32 %v62, %v99
  %101 = vst [vmem:[#allocation3] sm:$0x1] %v100
  // Predicated region
  $region18: #{_lambda_.23} parent=0 // pred_check
    %p102 = pneg %p16
  $region19: #{_lambda_.23} parent=0 // pred_check_branch
    %104 = sbr.rel (%p102) target = $region21
  $region20: #{_lambda_.23} parent=0 // pred_region
    %v105 = vld [vmem:[#allocation2] sm:$0x1]
    %v106 = vmul.f32 %v105, 0.0078125
    %v107 = vld [vmem:[#allocation3] sm:$0x1]
    %v108 = vmul.f32 %v107, 0.0078125
    %v109 = vmul.f32 %v106, %v106
    %v110 = vsub.f32 %v108, %v109
    %v111 = vld [vmem:[%s1] sm:$0x1]
    %v112 = vadd.f32 %v110, 1e-05
    %v113 = vrsqrt.pop %v112
    %v114 = vmul.f32 %v111, %v113
    %115 = vst [vmem:[%s3] sm:$0x1] %v114
    %v116 = vld [vmem:[%s2] sm:$0x1]
    %v117 = vmul.f32 %v106, %v114
    %v118 = vsub.f32 %v116, %v117
    %119 = vst [vmem:[%s4] sm:$0x1] %v118
  $region21: #{_lambda_.23} parent=0 // pred_fallthru
    _
  // Predicated region
  $region22: #{_lambda_.23} parent=0 // pred_check
    _
  $region23: #{_lambda_.23} parent=0 // pred_check_branch
    %121 = sbr.rel (0) target = $region25
  $region24: #{_lambda_.23} parent=0 // pred_region
    _
  $region25: #{_lambda_.23} parent=0 // pred_fallthru
    _
  // Predicated region
  $region26: #{_lambda_.23} parent=0 // pred_check
    _
  $region27: #{_lambda_.23} parent=0 // pred_check_branch
    %123 = sbr.rel (0) target = $region29
  $region28: #{_lambda_.23} parent=0 // pred_region
    _
  $region29: #{_lambda_.23} parent=0 // pred_fallthru
    _
  // Predicated region
  $region30: #{_lambda_.23} parent=0 // pred_check
    _
  $region31: #{_lambda_.23} parent=0 // pred_check_branch
    %125 = sbr.rel (0) target = $region33
  $region32: #{_lambda_.23} parent=0 // pred_region
    _
  $region33: #{_lambda_.23} parent=0 // pred_fallthru
    _
  // Predicated region
  $region34: #{_lambda_.23} parent=0 // pred_check
    _
  $region35: #{_lambda_.23} parent=0 // pred_check_branch
    %127 = sbr.rel (0) target = $region37
  $region36: #{_lambda_.23} parent=0 // pred_region
    _
  $region37: #{_lambda_.23} parent=0 // pred_fallthru
    _

// kernel: _lambda_.24
$region0: #{_lambda_.24}
  #allocation0 [shape = 'u32[]', space=smem, size = 0x4, offset = 0x4, fixed_abs, tag = 'smem constant byte address 0x4 - core index']
  #allocation1 [shape = 'u32[144,128]{1,0:T(1,128)}', space=vmem, size = 0x12000, scoped, tag = 'internal scratch']
  %s0 = inlined_call_operand.vmem [shape: f32[128,128], index: 0, kind: input, shape index: {}]
  %s1 = inlined_call_operand.vmem [shape: f32[1,128], index: 1, kind: input, shape index: {}]
  %s2 = inlined_call_operand.vmem [shape: f32[1,128], index: 2, kind: input, shape index: {}]
  %s3 = inlined_call_operand.vmem [shape: f32[128,128], index: 3, kind: output, shape index: {}]
  %s4 = sld [smem:[#allocation0]]
  $region22: #{_lambda_.24} parent=0
    _
  %s6 = ssub.s32 1, %s4
  %s7 = scalar_select 0, %s6, %s4
  // Predicated region
  $region2: #{_lambda_.24} parent=0 // pred_check
    _
  $region3: #{_lambda_.24} parent=0 // pred_check_branch
    %9 = sbr.rel (0) target = $region5
  $region4: #{_lambda_.24} parent=0 // pred_region
    _
  $region5: #{_lambda_.24} parent=0 // pred_fallthru
    _
  // Predicated region
  $region6: #{_lambda_.24} parent=0 // pred_check
    _
  $region7: #{_lambda_.24} parent=0 // pred_check_branch
    %11 = sbr.rel (0) target = $region9
  $region8: #{_lambda_.24} parent=0 // pred_region
    _
  $region9: #{_lambda_.24} parent=0 // pred_fallthru
    _
  // Predicated region
  $region10: #{_lambda_.24} parent=0 // pred_check
    _
  $region11: #{_lambda_.24} parent=0 // pred_check_branch
    %13 = sbr.rel (0) target = $region13
  $region12: #{_lambda_.24} parent=0 // pred_region
    _
  $region13: #{_lambda_.24} parent=0 // pred_fallthru
    _
  %v14 = vld [vmem:[%s0] sm:$0xff]
  %v15 = vld [vmem:[%s0 + $0x8] sm:$0xff]
  %v16 = vld [vmem:[%s0 + $0x10] sm:$0xff]
  %v17 = vld [vmem:[%s0 + $0x18] sm:$0xff]
  %v18 = vld [vmem:[%s0 + $0x20] sm:$0xff]
  %v19 = vld [vmem:[%s0 + $0x28] sm:$0xff]
  %v20 = vld [vmem:[%s0 + $0x30] sm:$0xff]
  %v21 = vld [vmem:[%s0 + $0x38] sm:$0xff]
  %v22 = vld [vmem:[%s0 + $0x40] sm:$0xff]
  %v23 = vld [vmem:[%s0 + $0x48] sm:$0xff]
  %v24 = vld [vmem:[%s0 + $0x50] sm:$0xff]
  %v25 = vld [vmem:[%s0 + $0x58] sm:$0xff]
  %v26 = vld [vmem:[%s0 + $0x60] sm:$0xff]
  %v27 = vld [vmem:[%s0 + $0x68] sm:$0xff]
  %v28 = vld [vmem:[%s0 + $0x70] sm:$0xff]
  %v29 = vld [vmem:[%s0 + $0x78] sm:$0xff]
  %v30 = vld [vmem:[%s1] sm:$0x1]
  %v32 = vlaneseq
  %v33 = vshrl.u32 %v32, 7
  %v34 = vsub.s32 0, %v33
  %v35 = vrot.slane %v30, %v34
  %v37 = vmul.f32 %v14, %v35
  %v38 = vmul.f32 %v15, %v35
  %v39 = vmul.f32 %v16, %v35
  %v40 = vmul.f32 %v17, %v35
  %v41 = vmul.f32 %v18, %v35
  %v42 = vmul.f32 %v19, %v35
  %v43 = vmul.f32 %v20, %v35
  %v44 = vmul.f32 %v21, %v35
  %v45 = vmul.f32 %v22, %v35
  %v46 = vmul.f32 %v23, %v35
  %v47 = vmul.f32 %v24, %v35
  %v48 = vmul.f32 %v25, %v35
  %v49 = vmul.f32 %v26, %v35
  %v50 = vmul.f32 %v27, %v35
  %v51 = vmul.f32 %v28, %v35
  %v52 = vmul.f32 %v29, %v35
  %v53 = vld [vmem:[%s2] sm:$0x1]
  %v55 = vlaneseq
  %v56 = vshrl.u32 %v55, 7
  %v57 = vsub.s32 0, %v56
  %v58 = vrot.slane %v53, %v57
  %v60 = vadd.f32 %v37, %v58
  %v61 = vadd.f32 %v38, %v58
  %v62 = vadd.f32 %v39, %v58
  %v63 = vadd.f32 %v40, %v58
  %v64 = vadd.f32 %v41, %v58
  %v65 = vadd.f32 %v42, %v58
  %v66 = vadd.f32 %v43, %v58
  %v67 = vadd.f32 %v44, %v58
  %v68 = vadd.f32 %v45, %v58
  %v69 = vadd.f32 %v46, %v58
  %v70 = vadd.f32 %v47, %v58
  %v71 = vadd.f32 %v48, %v58
  %v72 = vadd.f32 %v49, %v58
  %v73 = vadd.f32 %v50, %v58
  %v74 = vadd.f32 %v51, %v58
  %v75 = vadd.f32 %v52, %v58
  %76 = vst [vmem:[%s3] sm:$0xff] %v60
  %77 = vst [vmem:[%s3 + $0x8] sm:$0xff] %v61
  %78 = vst [vmem:[%s3 + $0x10] sm:$0xff] %v62
  %79 = vst [vmem:[%s3 + $0x18] sm:$0xff] %v63
  %80 = vst [vmem:[%s3 + $0x20] sm:$0xff] %v64
  %81 = vst [vmem:[%s3 + $0x28] sm:$0xff] %v65
  %82 = vst [vmem:[%s3 + $0x30] sm:$0xff] %v66
  %83 = vst [vmem:[%s3 + $0x38] sm:$0xff] %v67
  %84 = vst [vmem:[%s3 + $0x40] sm:$0xff] %v68
  %85 = vst [vmem:[%s3 + $0x48] sm:$0xff] %v69
  %86 = vst [vmem:[%s3 + $0x50] sm:$0xff] %v70
  %87 = vst [vmem:[%s3 + $0x58] sm:$0xff] %v71
  %88 = vst [vmem:[%s3 + $0x60] sm:$0xff] %v72
  %89 = vst [vmem:[%s3 + $0x68] sm:$0xff] %v73
  %90 = vst [vmem:[%s3 + $0x70] sm:$0xff] %v74
  %91 = vst [vmem:[%s3 + $0x78] sm:$0xff] %v75
  // Predicated region
  $region14: #{_lambda_.24} parent=0 // pred_check
    _
  $region15: #{_lambda_.24} parent=0 // pred_check_branch
    %93 = sbr.rel (0) target = $region17
  $region16: #{_lambda_.24} parent=0 // pred_region
    _
  $region17: #{_lambda_.24} parent=0 // pred_fallthru
    _
  // Predicated region
  $region18: #{_lambda_.24} parent=0 // pred_check
    _
  $region19: #{_lambda_.24} parent=0 // pred_check_branch
    %95 = sbr.rel (0) target = $region21
  $region20: #{_lambda_.24} parent=0 // pred_region
    _
  $region21: #{_lambda_.24} parent=0 // pred_fallthru
    _

// kernel: _lambda_.25
$region0: #{_lambda_.25}
  #allocation0 [shape = 'u32[]', space=smem, size = 0x4, offset = 0x4, fixed_abs, tag = 'smem constant byte address 0x4 - core index']
  #allocation1 [shape = 'u32[144,128]{1,0:T(1,128)}', space=vmem, size = 0x12000, scoped, tag = 'internal scratch']
  #allocation2 [shape = 'f32[32,128]{1,0:T(8,128)}', space=vmem, size = 0x4000, scoped, tag = 'scratch operand']
  %s0 = inlined_call_operand.vmem [shape: bf16[32,256], index: 0, kind: input, shape index: {}]
  %s1 = inlined_call_operand.vmem [shape: bf16[256,128], index: 1, kind: input, shape index: {}]
  %s2 = inlined_call_operand.vmem [shape: f32[1,128], index: 2, kind: input, shape index: {}]
  %s3 = inlined_call_operand.vmem [shape: f32[32,128], index: 3, kind: output, shape index: {}]
  %s4 = sld [smem:[#allocation0]]
  $region30: #{_lambda_.25} parent=0
    _
  %s6 = ssub.s32 1, %s4
  %s7 = scalar_select 0, %s6, %s4
  // Predicated region
  $region2: #{_lambda_.25} parent=0 // pred_check
    _
  $region3: #{_lambda_.25} parent=0 // pred_check_branch
    %9 = sbr.rel (0) target = $region5
  $region4: #{_lambda_.25} parent=0 // pred_region
    _
  $region5: #{_lambda_.25} parent=0 // pred_fallthru
    _
  // Predicated region
  $region6: #{_lambda_.25} parent=0 // pred_check
    _
  $region7: #{_lambda_.25} parent=0 // pred_check_branch
    %11 = sbr.rel (0) target = $region9
  $region8: #{_lambda_.25} parent=0 // pred_region
    _
  $region9: #{_lambda_.25} parent=0 // pred_fallthru
    _
  // Predicated region
  $region10: #{_lambda_.25} parent=0 // pred_check
    _
  $region11: #{_lambda_.25} parent=0 // pred_check_branch
    %13 = sbr.rel (0) target = $region13
  $region12: #{_lambda_.25} parent=0 // pred_region
    _
  $region13: #{_lambda_.25} parent=0 // pred_fallthru
    _
  %p16 = scmp.eq.s32.totalorder 0, 0
  // Predicated region
  $region14: #{_lambda_.25} parent=0 // pred_check
    %p17 = pneg %p16
  $region15: #{_lambda_.25} parent=0 // pred_check_branch
    %19 = sbr.rel (%p17) target = $region17
  $region16: #{_lambda_.25} parent=0 // pred_region
    %20 = vst [vmem:[#allocation2] sm:$0xff] 0.0
    %21 = vst [vmem:[#allocation2 + $0x8] sm:$0xff] 0.0
    %22 = vst [vmem:[#allocation2 + $0x10] sm:$0xff] 0.0
    %23 = vst [vmem:[#allocation2 + $0x18] sm:$0xff] 0.0
  $region17: #{_lambda_.25} parent=0 // pred_fallthru
    _
  %v24 = vld [vmem:[%s0] sm:$0xff]
  %v25 = vld [vmem:[%s0 + $0x8] sm:$0xff]
  %v26 = vld [vmem:[%s0 + $0x10] sm:$0xff]
  %v27 = vld [vmem:[%s0 + $0x18] sm:$0xff]
  %vm28 = vcmp.ge.bf16.partialorder %v24, 0
  %vm29 = vcmp.ge.bf16.partialorder %v25, 0
  %vm30 = vcmp.ge.bf16.partialorder %v26, 0
  %vm31 = vcmp.ge.bf16.partialorder %v27, 0
  %v32 = vmul.bf16 %v24, 1045249613
  %v33 = vmul.bf16 %v25, 1045249613
  %v34 = vmul.bf16 %v26, 1045249613
  %v35 = vmul.bf16 %v27, 1045249613
  %v36 = vsel %vm28, %v24, %v32
  %v37 = vsel %vm29, %v25, %v33
  %v38 = vsel %vm30, %v26, %v34
  %v39 = vsel %vm31, %v27, %v35
  %v40 = vld [vmem:[#allocation2] sm:$0xff]
  %v41 = vld [vmem:[#allocation2 + $0x8] sm:$0xff]
  %v42 = vld [vmem:[#allocation2 + $0x10] sm:$0xff]
  %v43 = vld [vmem:[#allocation2 + $0x18] sm:$0xff]
  %v44 = vld [vmem:[%s1] sm:$0xf]
  %v45 = vld [vmem:[%s1 + $0x4] sm:$0xf]
  %v46 = vld [vmem:[%s1 + $0x8] sm:$0xf]
  %v47 = vld [vmem:[%s1 + $0xc] sm:$0xf]
  %v48 = vld [vmem:[%s1 + $0x10] sm:$0xf]
  %v49 = vld [vmem:[%s1 + $0x14] sm:$0xf]
  %v50 = vld [vmem:[%s1 + $0x18] sm:$0xf]
  %v51 = vld [vmem:[%s1 + $0x1c] sm:$0xf]
  %v52 = vld [vmem:[%s1 + $0x20] sm:$0xf]
  %v53 = vld [vmem:[%s1 + $0x24] sm:$0xf]
  %v54 = vld [vmem:[%s1 + $0x28] sm:$0xf]
  %v55 = vld [vmem:[%s1 + $0x2c] sm:$0xf]
  %v56 = vld [vmem:[%s1 + $0x30] sm:$0xf]
  %v57 = vld [vmem:[%s1 + $0x34] sm:$0xf]
  %v58 = vld [vmem:[%s1 + $0x38] sm:$0xf]
  %v59 = vld [vmem:[%s1 + $0x3c] sm:$0xf]
  %v60 = vld [vmem:[%s1 + $0x40] sm:$0xf]
  %v61 = vld [vmem:[%s1 + $0x44] sm:$0xf]
  %v62 = vld [vmem:[%s1 + $0x48] sm:$0xf]
  %v63 = vld [vmem:[%s1 + $0x4c] sm:$0xf]
  %v64 = vld [vmem:[%s1 + $0x50] sm:$0xf]
  %v65 = vld [vmem:[%s1 + $0x54] sm:$0xf]
  %v66 = vld [vmem:[%s1 + $0x58] sm:$0xf]
  %v67 = vld [vmem:[%s1 + $0x5c] sm:$0xf]
  %v68 = vld [vmem:[%s1 + $0x60] sm:$0xf]
  %v69 = vld [vmem:[%s1 + $0x64] sm:$0xf]
  %v70 = vld [vmem:[%s1 + $0x68] sm:$0xf]
  %v71 = vld [vmem:[%s1 + $0x6c] sm:$0xf]
  %v72 = vld [vmem:[%s1 + $0x70] sm:$0xf]
  %v73 = vld [vmem:[%s1 + $0x74] sm:$0xf]
  %v74 = vld [vmem:[%s1 + $0x78] sm:$0xf]
  %v75 = vld [vmem:[%s1 + $0x7c] sm:$0xf]
  %v80 = vunpack.c.l.b16 %v36
  %v81 = vunpack.c.h.b16 %v36
  %v82 = vunpack.c.l.b16 %v37
  %v83 = vunpack.c.h.b16 %v37
  %v84 = vunpack.c.l.b16 %v38
  %v85 = vunpack.c.h.b16 %v38
  %v86 = vunpack.c.l.b16 %v39
  %v87 = vunpack.c.h.b16 %v39
  %v88 = vpack.c.b16 %v82, %v80
  %v89 = vpack.c.b16 %v83, %v81
  %v90 = vpack.c.b16 %v86, %v84
  %v91 = vpack.c.b16 %v87, %v85
  %v128 = vunpack.c.l.b16 %v44
  %v129 = vunpack.c.l.b16 %v45
  %v130 = vunpack.c.l.b16 %v46
  %v131 = vunpack.c.l.b16 %v47
  %v132 = vunpack.c.l.b16 %v48
  %v133 = vunpack.c.l.b16 %v49
  %v134 = vunpack.c.l.b16 %v50
  %v135 = vunpack.c.l.b16 %v51
  %v136 = vunpack.c.l.b16 %v52
  %v137 = vunpack.c.l.b16 %v53
  %v138 = vunpack.c.l.b16 %v54
  %v139 = vunpack.c.l.b16 %v55
  %v140 = vunpack.c.l.b16 %v56
  %v141 = vunpack.c.l.b16 %v57
  %v142 = vunpack.c.l.b16 %v58
  %v143 = vunpack.c.l.b16 %v59
  %v144 = vunpack.c.l.b16 %v60
  %v145 = vunpack.c.l.b16 %v61
  %v146 = vunpack.c.l.b16 %v62
  %v147 = vunpack.c.l.b16 %v63
  %v148 = vunpack.c.l.b16 %v64
  %v149 = vunpack.c.l.b16 %v65
  %v150 = vunpack.c.l.b16 %v66
  %v151 = vunpack.c.l.b16 %v67
  %v152 = vunpack.c.l.b16 %v68
  %v153 = vunpack.c.l.b16 %v69
  %v154 = vunpack.c.l.b16 %v70
  %v155 = vunpack.c.l.b16 %v71
  %v156 = vunpack.c.l.b16 %v72
  %v157 = vunpack.c.l.b16 %v73
  %v158 = vunpack.c.l.b16 %v74
  %v159 = vunpack.c.l.b16 %v75
  %v160 = vpack.c.b16 %v129, %v128
  %v161 = vpack.c.b16 %v131, %v130
  %v162 = vpack.c.b16 %v133, %v132
  %v163 = vpack.c.b16 %v135, %v134
  %v164 = vpack.c.b16 %v137, %v136
  %v165 = vpack.c.b16 %v139, %v138
  %v166 = vpack.c.b16 %v141, %v140
  %v167 = vpack.c.b16 %v143, %v142
  %v168 = vpack.c.b16 %v145, %v144
  %v169 = vpack.c.b16 %v147, %v146
  %v170 = vpack.c.b16 %v149, %v148
  %v171 = vpack.c.b16 %v151, %v150
  %v172 = vpack.c.b16 %v153, %v152
  %v173 = vpack.c.b16 %v155, %v154
  %v174 = vpack.c.b16 %v157, %v156
  %v175 = vpack.c.b16 %v159, %v158
  %192 = vmatprep.subr.bf16.mxu0 0
  %193 = vmatpush1.bf16.msra.mxu0 %v160
  %194 = vmatprep.subr.bf16.mxu0 0
  %195 = vmatpush1.bf16.msra.mxu0 %v161
  %196 = vmatprep.subr.bf16.mxu0 0
  %197 = vmatpush1.bf16.msra.mxu0 %v162
  %198 = vmatprep.subr.bf16.mxu0 0
  %199 = vmatpush1.bf16.msra.mxu0 %v163
  %200 = vmatprep.subr.bf16.mxu0 0
  %201 = vmatpush1.bf16.msra.mxu0 %v164
  %202 = vmatprep.subr.bf16.mxu0 0
  %203 = vmatpush1.bf16.msra.mxu0 %v165
  %204 = vmatprep.subr.bf16.mxu0 0
  %205 = vmatpush1.bf16.msra.mxu0 %v166
  %206 = vmatprep.subr.bf16.mxu0 0
  %207 = vmatpush1.bf16.msra.mxu0 %v167
  %208 = vmatprep.subr.bf16.mxu0 0
  %209 = vmatpush1.bf16.msra.mxu0 %v168
  %210 = vmatprep.subr.bf16.mxu0 0
  %211 = vmatpush1.bf16.msra.mxu0 %v169
  %212 = vmatprep.subr.bf16.mxu0 0
  %213 = vmatpush1.bf16.msra.mxu0 %v170
  %214 = vmatprep.subr.bf16.mxu0 0
  %215 = vmatpush1.bf16.msra.mxu0 %v171
  %216 = vmatprep.subr.bf16.mxu0 0
  %217 = vmatpush1.bf16.msra.mxu0 %v172
  %218 = vmatprep.subr.bf16.mxu0 0
  %219 = vmatpush1.bf16.msra.mxu0 %v173
  %220 = vmatprep.subr.bf16.mxu0 0
  %221 = vmatpush1.bf16.msra.mxu0 %v174
  %222 = vmatprep.subr.bf16.mxu0 0
  %223 = vmatpush1.bf16.msra.mxu0 %v175
  %224 = vmatprep.mubr.bf16.mxu0 %v89
  %225 = vmatmul.mubr.bf16.gmra.mrb[0].mxu0 %v88
  %v226 = vpop.f32.mrb[0].mxu0
  %v227 = vadd.f32 0.0, %v226
  %v228 = vpop.f32.mrb[0].mxu0
  %v229 = vpop.f32.mrb[0].mxu0
  %v230 = vadd.f32 0.0, %v229
  %v231 = vpop.f32.mrb[0].mxu0
  %232 = vmatprep.mubr.bf16.mxu0 %v91
  %233 = vmatmul.mubr.bf16.gmra.mrb[0].mxu0 %v90
  %v234 = vpop.f32.mrb[0].mxu0
  %v235 = vadd.f32 0.0, %v234
  %v236 = vpop.f32.mrb[0].mxu0
  %v237 = vpop.f32.mrb[0].mxu0
  %v238 = vadd.f32 0.0, %v237
  %v239 = vpop.f32.mrb[0].mxu0
  %240 = vdwg.mxu0
  %v241 = vadd.f32 %v40, %v227
  %v242 = vadd.f32 %v41, %v230
  %v243 = vadd.f32 %v42, %v235
  %v244 = vadd.f32 %v43, %v238
  %245 = vst [vmem:[#allocation2] sm:$0xff] %v241
  %246 = vst [vmem:[#allocation2 + $0x8] sm:$0xff] %v242
  %247 = vst [vmem:[#allocation2 + $0x10] sm:$0xff] %v243
  %248 = vst [vmem:[#allocation2 + $0x18] sm:$0xff] %v244
  // Predicated region
  $region18: #{_lambda_.25} parent=0 // pred_check
    %p249 = pneg %p16
  $region19: #{_lambda_.25} parent=0 // pred_check_branch
    %251 = sbr.rel (%p249) target = $region21
  $region20: #{_lambda_.25} parent=0 // pred_region
    %v252 = vld [vmem:[#allocation2] sm:$0xff]
    %v253 = vld [vmem:[#allocation2 + $0x8] sm:$0xff]
    %v254 = vld [vmem:[#allocation2 + $0x10] sm:$0xff]
    %v255 = vld [vmem:[#allocation2 + $0x18] sm:$0xff]
    %256 = vst [vmem:[%s3] sm:$0xff] %v252
    %257 = vst [vmem:[%s3 + $0x8] sm:$0xff] %v253
    %258 = vst [vmem:[%s3 + $0x10] sm:$0xff] %v254
    %259 = vst [vmem:[%s3 + $0x18] sm:$0xff] %v255
  $region21: #{_lambda_.25} parent=0 // pred_fallthru
    _
  // Predicated region
  $region22: #{_lambda_.25} parent=0 // pred_check
    _
  $region23: #{_lambda_.25} parent=0 // pred_check_branch
    %261 = sbr.rel (0) target = $region25
  $region24: #{_lambda_.25} parent=0 // pred_region
    _
  $region25: #{_lambda_.25} parent=0 // pred_fallthru
    _
  // Predicated region
  $region26: #{_lambda_.25} parent=0 // pred_check
    _
  $region27: #{_lambda_.25} parent=0 // pred_check_branch
    %263 = sbr.rel (0) target = $region29
  $region28: #{_lambda_.25} parent=0 // pred_region
    _
  $region29: #{_lambda_.25} parent=0 // pred_fallthru
    _

// kernel: _lambda_.26
$region0: #{_lambda_.26}
  #allocation0 [shape = 'u32[]', space=smem, size = 0x4, offset = 0x4, fixed_abs, tag = 'smem constant byte address 0x4 - core index']
  #allocation1 [shape = 'u32[144,128]{1,0:T(1,128)}', space=vmem, size = 0x12000, scoped, tag = 'internal scratch']
  #allocation2 [shape = 'f32[32,128]{1,0:T(8,128)}', space=vmem, size = 0x4000, scoped, tag = 'scratch operand']
  %s0 = inlined_call_operand.vmem [shape: bf16[32,128], index: 0, kind: input, shape index: {}]
  %s1 = inlined_call_operand.vmem [shape: bf16[128,128], index: 1, kind: input, shape index: {}]
  %s2 = inlined_call_operand.vmem [shape: f32[1,128], index: 2, kind: input, shape index: {}]
  %s3 = inlined_call_operand.vmem [shape: f32[32,128], index: 3, kind: output, shape index: {}]
  %s4 = sld [smem:[#allocation0]]
  $region30: #{_lambda_.26} parent=0
    _
  %s6 = ssub.s32 1, %s4
  %s7 = scalar_select 0, %s6, %s4
  // Predicated region
  $region2: #{_lambda_.26} parent=0 // pred_check
    _
  $region3: #{_lambda_.26} parent=0 // pred_check_branch
    %9 = sbr.rel (0) target = $region5
  $region4: #{_lambda_.26} parent=0 // pred_region
    _
  $region5: #{_lambda_.26} parent=0 // pred_fallthru
    _
  // Predicated region
  $region6: #{_lambda_.26} parent=0 // pred_check
    _
  $region7: #{_lambda_.26} parent=0 // pred_check_branch
    %11 = sbr.rel (0) target = $region9
  $region8: #{_lambda_.26} parent=0 // pred_region
    _
  $region9: #{_lambda_.26} parent=0 // pred_fallthru
    _
  // Predicated region
  $region10: #{_lambda_.26} parent=0 // pred_check
    _
  $region11: #{_lambda_.26} parent=0 // pred_check_branch
    %13 = sbr.rel (0) target = $region13
  $region12: #{_lambda_.26} parent=0 // pred_region
    _
  $region13: #{_lambda_.26} parent=0 // pred_fallthru
    _
  %p15 = scmp.eq.s32.totalorder 0, 0
  // Predicated region
  $region14: #{_lambda_.26} parent=0 // pred_check
    %p16 = pneg %p15
  $region15: #{_lambda_.26} parent=0 // pred_check_branch
    %18 = sbr.rel (%p16) target = $region17
  $region16: #{_lambda_.26} parent=0 // pred_region
    %19 = vst [vmem:[#allocation2] sm:$0xff] 0.0
    %20 = vst [vmem:[#allocation2 + $0x8] sm:$0xff] 0.0
    %21 = vst [vmem:[#allocation2 + $0x10] sm:$0xff] 0.0
    %22 = vst [vmem:[#allocation2 + $0x18] sm:$0xff] 0.0
  $region17: #{_lambda_.26} parent=0 // pred_fallthru
    _
  %v23 = vld [vmem:[%s0] sm:$0xf]
  %v24 = vld [vmem:[%s0 + $0x4] sm:$0xf]
  %v25 = vld [vmem:[%s0 + $0x8] sm:$0xf]
  %v26 = vld [vmem:[%s0 + $0xc] sm:$0xf]
  %v27 = vmax.bf16 %v23, 0
  %v28 = vmax.bf16 %v24, 0
  %v29 = vmax.bf16 %v25, 0
  %v30 = vmax.bf16 %v26, 0
  %v31 = vld [vmem:[#allocation2] sm:$0xff]
  %v32 = vld [vmem:[#allocation2 + $0x8] sm:$0xff]
  %v33 = vld [vmem:[#allocation2 + $0x10] sm:$0xff]
  %v34 = vld [vmem:[#allocation2 + $0x18] sm:$0xff]
  %v35 = vld [vmem:[%s1] sm:$0xf]
  %v36 = vld [vmem:[%s1 + $0x4] sm:$0xf]
  %v37 = vld [vmem:[%s1 + $0x8] sm:$0xf]
  %v38 = vld [vmem:[%s1 + $0xc] sm:$0xf]
  %v39 = vld [vmem:[%s1 + $0x10] sm:$0xf]
  %v40 = vld [vmem:[%s1 + $0x14] sm:$0xf]
  %v41 = vld [vmem:[%s1 + $0x18] sm:$0xf]
  %v42 = vld [vmem:[%s1 + $0x1c] sm:$0xf]
  %v43 = vld [vmem:[%s1 + $0x20] sm:$0xf]
  %v44 = vld [vmem:[%s1 + $0x24] sm:$0xf]
  %v45 = vld [vmem:[%s1 + $0x28] sm:$0xf]
  %v46 = vld [vmem:[%s1 + $0x2c] sm:$0xf]
  %v47 = vld [vmem:[%s1 + $0x30] sm:$0xf]
  %v48 = vld [vmem:[%s1 + $0x34] sm:$0xf]
  %v49 = vld [vmem:[%s1 + $0x38] sm:$0xf]
  %v50 = vld [vmem:[%s1 + $0x3c] sm:$0xf]
  %v55 = vunpack.c.l.b16 %v27
  %v56 = vunpack.c.l.b16 %v28
  %v57 = vunpack.c.l.b16 %v29
  %v58 = vunpack.c.l.b16 %v30
  %v59 = vpack.c.b16 %v56, %v55
  %v60 = vpack.c.b16 %v58, %v57
  %v79 = vunpack.c.l.b16 %v35
  %v80 = vunpack.c.l.b16 %v36
  %v81 = vunpack.c.l.b16 %v37
  %v82 = vunpack.c.l.b16 %v38
  %v83 = vunpack.c.l.b16 %v39
  %v84 = vunpack.c.l.b16 %v40
  %v85 = vunpack.c.l.b16 %v41
  %v86 = vunpack.c.l.b16 %v42
  %v87 = vunpack.c.l.b16 %v43
  %v88 = vunpack.c.l.b16 %v44
  %v89 = vunpack.c.l.b16 %v45
  %v90 = vunpack.c.l.b16 %v46
  %v91 = vunpack.c.l.b16 %v47
  %v92 = vunpack.c.l.b16 %v48
  %v93 = vunpack.c.l.b16 %v49
  %v94 = vunpack.c.l.b16 %v50
  %v95 = vpack.c.b16 %v80, %v79
  %v96 = vpack.c.b16 %v82, %v81
  %v97 = vpack.c.b16 %v84, %v83
  %v98 = vpack.c.b16 %v86, %v85
  %v99 = vpack.c.b16 %v88, %v87
  %v100 = vpack.c.b16 %v90, %v89
  %v101 = vpack.c.b16 %v92, %v91
  %v102 = vpack.c.b16 %v94, %v93
  %111 = vmatprep.subr.bf16.mxu0 0
  %112 = vmatpush1.bf16.msra.mxu0 %v95
  %113 = vmatprep.subr.bf16.mxu0 0
  %114 = vmatpush1.bf16.msra.mxu0 %v96
  %115 = vmatprep.subr.bf16.mxu0 0
  %116 = vmatpush1.bf16.msra.mxu0 %v97
  %117 = vmatprep.subr.bf16.mxu0 0
  %118 = vmatpush1.bf16.msra.mxu0 %v98
  %119 = vmatprep.subr.bf16.mxu0 0
  %120 = vmatpush1.bf16.msra.mxu0 %v99
  %121 = vmatprep.subr.bf16.mxu0 0
  %122 = vmatpush1.bf16.msra.mxu0 %v100
  %123 = vmatprep.subr.bf16.mxu0 0
  %124 = vmatpush1.bf16.msra.mxu0 %v101
  %125 = vmatprep.subr.bf16.mxu0 0
  %126 = vmatpush1.bf16.msra.mxu0 %v102
  %127 = vmatprep.subr.bf16.mxu0 0
  %128 = vmatpush1.bf16.msra.mxu0 0
  %129 = vmatprep.subr.bf16.mxu0 0
  %130 = vmatpush1.bf16.msra.mxu0 0
  %131 = vmatprep.subr.bf16.mxu0 0
  %132 = vmatpush1.bf16.msra.mxu0 0
  %133 = vmatprep.subr.bf16.mxu0 0
  %134 = vmatpush1.bf16.msra.mxu0 0
  %135 = vmatprep.subr.bf16.mxu0 0
  %136 = vmatpush1.bf16.msra.mxu0 0
  %137 = vmatprep.subr.bf16.mxu0 0
  %138 = vmatpush1.bf16.msra.mxu0 0
  %139 = vmatprep.subr.bf16.mxu0 0
  %140 = vmatpush1.bf16.msra.mxu0 0
  %141 = vmatprep.subr.bf16.mxu0 0
  %142 = vmatpush1.bf16.msra.mxu0 0
  %143 = vmatprep.mubr.bf16.mxu0 0
  %144 = vmatmul.mubr.bf16.gmra.mrb[0].mxu0 %v59
  %v145 = vpop.f32.mrb[0].mxu0
  %v146 = vadd.f32 0.0, %v145
  %v147 = vpop.f32.mrb[0].mxu0
  %v148 = vpop.f32.mrb[0].mxu0
  %v149 = vadd.f32 0.0, %v148
  %v150 = vpop.f32.mrb[0].mxu0
  %151 = vmatprep.mubr.bf16.mxu0 0
  %152 = vmatmul.mubr.bf16.gmra.mrb[0].mxu0 %v60
  %v153 = vpop.f32.mrb[0].mxu0
  %v154 = vadd.f32 0.0, %v153
  %v155 = vpop.f32.mrb[0].mxu0
  %v156 = vpop.f32.mrb[0].mxu0
  %v157 = vadd.f32 0.0, %v156
  %v158 = vpop.f32.mrb[0].mxu0
  %159 = vdwg.mxu0
  %v160 = vadd.f32 %v31, %v146
  %v161 = vadd.f32 %v32, %v149
  %v162 = vadd.f32 %v33, %v154
  %v163 = vadd.f32 %v34, %v157
  %164 = vst [vmem:[#allocation2] sm:$0xff] %v160
  %165 = vst [vmem:[#allocation2 + $0x8] sm:$0xff] %v161
  %166 = vst [vmem:[#allocation2 + $0x10] sm:$0xff] %v162
  %167 = vst [vmem:[#allocation2 + $0x18] sm:$0xff] %v163
  // Predicated region
  $region18: #{_lambda_.26} parent=0 // pred_check
    %p168 = pneg %p15
  $region19: #{_lambda_.26} parent=0 // pred_check_branch
    %170 = sbr.rel (%p168) target = $region21
  $region20: #{_lambda_.26} parent=0 // pred_region
    %v171 = vld [vmem:[#allocation2] sm:$0xff]
    %v172 = vld [vmem:[#allocation2 + $0x8] sm:$0xff]
    %v173 = vld [vmem:[#allocation2 + $0x10] sm:$0xff]
    %v174 = vld [vmem:[#allocation2 + $0x18] sm:$0xff]
    %175 = vst [vmem:[%s3] sm:$0xff] %v171
    %176 = vst [vmem:[%s3 + $0x8] sm:$0xff] %v172
    %177 = vst [vmem:[%s3 + $0x10] sm:$0xff] %v173
    %178 = vst [vmem:[%s3 + $0x18] sm:$0xff] %v174
  $region21: #{_lambda_.26} parent=0 // pred_fallthru
    _
  // Predicated region
  $region22: #{_lambda_.26} parent=0 // pred_check
    _
  $region23: #{_lambda_.26} parent=0 // pred_check_branch
    %180 = sbr.rel (0) target = $region25
  $region24: #{_lambda_.26} parent=0 // pred_region
    _
  $region25: #{_lambda_.26} parent=0 // pred_fallthru
    _
  // Predicated region
  $region26: #{_lambda_.26} parent=0 // pred_check
    _
  $region27: #{_lambda_.26} parent=0 // pred_check_branch
    %182 = sbr.rel (0) target = $region29
  $region28: #{_lambda_.26} parent=0 // pred_region
    _
  $region29: #{_lambda_.26} parent=0 // pred_fallthru
    _

// kernel: _lambda_.35
$region0: #{_lambda_.35}
  #allocation0 [shape = 'u32[]', space=smem, size = 0x4, offset = 0x4, fixed_abs, tag = 'smem constant byte address 0x4 - core index']
  #allocation1 [shape = 'u32[144,128]{1,0:T(1,128)}', space=vmem, size = 0x12000, scoped, tag = 'internal scratch']
  #allocation2 [shape = 'f32[128,128]{1,0:T(8,128)}', space=vmem, size = 0x10000, scoped, tag = 'scratch operand']
  %s0 = inlined_call_operand.vmem [shape: bf16[128,128], index: 0, kind: input, shape index: {}]
  %s1 = inlined_call_operand.vmem [shape: bf16[128,128], index: 1, kind: input, shape index: {}]
  %s2 = inlined_call_operand.vmem [shape: f32[1,128], index: 2, kind: input, shape index: {}]
  %s3 = inlined_call_operand.vmem [shape: f32[128,128], index: 3, kind: output, shape index: {}]
  %s4 = sld [smem:[#allocation0]]
  $region30: #{_lambda_.35} parent=0
    _
  %s6 = ssub.s32 1, %s4
  %s7 = scalar_select 0, %s6, %s4
  // Predicated region
  $region2: #{_lambda_.35} parent=0 // pred_check
    _
  $region3: #{_lambda_.35} parent=0 // pred_check_branch
    %9 = sbr.rel (0) target = $region5
  $region4: #{_lambda_.35} parent=0 // pred_region
    _
  $region5: #{_lambda_.35} parent=0 // pred_fallthru
    _
  // Predicated region
  $region6: #{_lambda_.35} parent=0 // pred_check
    _
  $region7: #{_lambda_.35} parent=0 // pred_check_branch
    %11 = sbr.rel (0) target = $region9
  $region8: #{_lambda_.35} parent=0 // pred_region
    _
  $region9: #{_lambda_.35} parent=0 // pred_fallthru
    _
  // Predicated region
  $region10: #{_lambda_.35} parent=0 // pred_check
    _
  $region11: #{_lambda_.35} parent=0 // pred_check_branch
    %13 = sbr.rel (0) target = $region13
  $region12: #{_lambda_.35} parent=0 // pred_region
    _
  $region13: #{_lambda_.35} parent=0 // pred_fallthru
    _
  %p15 = scmp.eq.s32.totalorder 0, 0
  // Predicated region
  $region14: #{_lambda_.35} parent=0 // pred_check
    %p16 = pneg %p15
  $region15: #{_lambda_.35} parent=0 // pred_check_branch
    %18 = sbr.rel (%p16) target = $region17
  $region16: #{_lambda_.35} parent=0 // pred_region
    %19 = vst [vmem:[#allocation2] sm:$0xff] 0.0
    %20 = vst [vmem:[#allocation2 + $0x8] sm:$0xff] 0.0
    %21 = vst [vmem:[#allocation2 + $0x10] sm:$0xff] 0.0
    %22 = vst [vmem:[#allocation2 + $0x18] sm:$0xff] 0.0
    %23 = vst [vmem:[#allocation2 + $0x20] sm:$0xff] 0.0
    %24 = vst [vmem:[#allocation2 + $0x28] sm:$0xff] 0.0
    %25 = vst [vmem:[#allocation2 + $0x30] sm:$0xff] 0.0
    %26 = vst [vmem:[#allocation2 + $0x38] sm:$0xff] 0.0
    %27 = vst [vmem:[#allocation2 + $0x40] sm:$0xff] 0.0
    %28 = vst [vmem:[#allocation2 + $0x48] sm:$0xff] 0.0
    %29 = vst [vmem:[#allocation2 + $0x50] sm:$0xff] 0.0
    %30 = vst [vmem:[#allocation2 + $0x58] sm:$0xff] 0.0
    %31 = vst [vmem:[#allocation2 + $0x60] sm:$0xff] 0.0
    %32 = vst [vmem:[#allocation2 + $0x68] sm:$0xff] 0.0
    %33 = vst [vmem:[#allocation2 + $0x70] sm:$0xff] 0.0
    %34 = vst [vmem:[#allocation2 + $0x78] sm:$0xff] 0.0
  $region17: #{_lambda_.35} parent=0 // pred_fallthru
    _
  %v35 = vld [vmem:[%s0] sm:$0xf]
  %v36 = vld [vmem:[%s0 + $0x4] sm:$0xf]
  %v37 = vld [vmem:[%s0 + $0x8] sm:$0xf]
  %v38 = vld [vmem:[%s0 + $0xc] sm:$0xf]
  %v39 = vld [vmem:[%s0 + $0x10] sm:$0xf]
  %v40 = vld [vmem:[%s0 + $0x14] sm:$0xf]
  %v41 = vld [vmem:[%s0 + $0x18] sm:$0xf]
  %v42 = vld [vmem:[%s0 + $0x1c] sm:$0xf]
  %v43 = vld [vmem:[%s0 + $0x20] sm:$0xf]
  %v44 = vld [vmem:[%s0 + $0x24] sm:$0xf]
  %v45 = vld [vmem:[%s0 + $0x28] sm:$0xf]
  %v46 = vld [vmem:[%s0 + $0x2c] sm:$0xf]
  %v47 = vld [vmem:[%s0 + $0x30] sm:$0xf]
  %v48 = vld [vmem:[%s0 + $0x34] sm:$0xf]
  %v49 = vld [vmem:[%s0 + $0x38] sm:$0xf]
  %v50 = vld [vmem:[%s0 + $0x3c] sm:$0xf]
  %v51 = vmax.bf16 %v35, 0
  %v52 = vmax.bf16 %v36, 0
  %v53 = vmax.bf16 %v37, 0
  %v54 = vmax.bf16 %v38, 0
  %v55 = vmax.bf16 %v39, 0
  %v56 = vmax.bf16 %v40, 0
  %v57 = vmax.bf16 %v41, 0
  %v58 = vmax.bf16 %v42, 0
  %v59 = vmax.bf16 %v43, 0
  %v60 = vmax.bf16 %v44, 0
  %v61 = vmax.bf16 %v45, 0
  %v62 = vmax.bf16 %v46, 0
  %v63 = vmax.bf16 %v47, 0
  %v64 = vmax.bf16 %v48, 0
  %v65 = vmax.bf16 %v49, 0
  %v66 = vmax.bf16 %v50, 0
  %v67 = vld [vmem:[#allocation2] sm:$0xff]
  %v68 = vld [vmem:[#allocation2 + $0x8] sm:$0xff]
  %v69 = vld [vmem:[#allocation2 + $0x10] sm:$0xff]
  %v70 = vld [vmem:[#allocation2 + $0x18] sm:$0xff]
  %v71 = vld [vmem:[#allocation2 + $0x20] sm:$0xff]
  %v72 = vld [vmem:[#allocation2 + $0x28] sm:$0xff]
  %v73 = vld [vmem:[#allocation2 + $0x30] sm:$0xff]
  %v74 = vld [vmem:[#allocation2 + $0x38] sm:$0xff]
  %v75 = vld [vmem:[#allocation2 + $0x40] sm:$0xff]
  %v76 = vld [vmem:[#allocation2 + $0x48] sm:$0xff]
  %v77 = vld [vmem:[#allocation2 + $0x50] sm:$0xff]
  %v78 = vld [vmem:[#allocation2 + $0x58] sm:$0xff]
  %v79 = vld [vmem:[#allocation2 + $0x60] sm:$0xff]
  %v80 = vld [vmem:[#allocation2 + $0x68] sm:$0xff]
  %v81 = vld [vmem:[#allocation2 + $0x70] sm:$0xff]
  %v82 = vld [vmem:[#allocation2 + $0x78] sm:$0xff]
  %v83 = vld [vmem:[%s1] sm:$0xf]
  %v84 = vld [vmem:[%s1 + $0x4] sm:$0xf]
  %v85 = vld [vmem:[%s1 + $0x8] sm:$0xf]
  %v86 = vld [vmem:[%s1 + $0xc] sm:$0xf]
  %v87 = vld [vmem:[%s1 + $0x10] sm:$0xf]
  %v88 = vld [vmem:[%s1 + $0x14] sm:$0xf]
  %v89 = vld [vmem:[%s1 + $0x18] sm:$0xf]
  %v90 = vld [vmem:[%s1 + $0x1c] sm:$0xf]
  %v91 = vld [vmem:[%s1 + $0x20] sm:$0xf]
  %v92 = vld [vmem:[%s1 + $0x24] sm:$0xf]
  %v93 = vld [vmem:[%s1 + $0x28] sm:$0xf]
  %v94 = vld [vmem:[%s1 + $0x2c] sm:$0xf]
  %v95 = vld [vmem:[%s1 + $0x30] sm:$0xf]
  %v96 = vld [vmem:[%s1 + $0x34] sm:$0xf]
  %v97 = vld [vmem:[%s1 + $0x38] sm:$0xf]
  %v98 = vld [vmem:[%s1 + $0x3c] sm:$0xf]
  %v115 = vunpack.c.l.b16 %v51
  %v116 = vunpack.c.l.b16 %v52
  %v117 = vunpack.c.l.b16 %v53
  %v118 = vunpack.c.l.b16 %v54
  %v119 = vunpack.c.l.b16 %v55
  %v120 = vunpack.c.l.b16 %v56
  %v121 = vunpack.c.l.b16 %v57
  %v122 = vunpack.c.l.b16 %v58
  %v123 = vunpack.c.l.b16 %v59
  %v124 = vunpack.c.l.b16 %v60
  %v125 = vunpack.c.l.b16 %v61
  %v126 = vunpack.c.l.b16 %v62
  %v127 = vunpack.c.l.b16 %v63
  %v128 = vunpack.c.l.b16 %v64
  %v129 = vunpack.c.l.b16 %v65
  %v130 = vunpack.c.l.b16 %v66
  %v131 = vpack.c.b16 %v116, %v115
  %v132 = vpack.c.b16 %v118, %v117
  %v133 = vpack.c.b16 %v120, %v119
  %v134 = vpack.c.b16 %v122, %v121
  %v135 = vpack.c.b16 %v124, %v123
  %v136 = vpack.c.b16 %v126, %v125
  %v137 = vpack.c.b16 %v128, %v127
  %v138 = vpack.c.b16 %v130, %v129
  %v163 = vunpack.c.l.b16 %v83
  %v164 = vunpack.c.l.b16 %v84
  %v165 = vunpack.c.l.b16 %v85
  %v166 = vunpack.c.l.b16 %v86
  %v167 = vunpack.c.l.b16 %v87
  %v168 = vunpack.c.l.b16 %v88
  %v169 = vunpack.c.l.b16 %v89
  %v170 = vunpack.c.l.b16 %v90
  %v171 = vunpack.c.l.b16 %v91
  %v172 = vunpack.c.l.b16 %v92
  %v173 = vunpack.c.l.b16 %v93
  %v174 = vunpack.c.l.b16 %v94
  %v175 = vunpack.c.l.b16 %v95
  %v176 = vunpack.c.l.b16 %v96
  %v177 = vunpack.c.l.b16 %v97
  %v178 = vunpack.c.l.b16 %v98
  %v179 = vpack.c.b16 %v164, %v163
  %v180 = vpack.c.b16 %v166, %v165
  %v181 = vpack.c.b16 %v168, %v167
  %v182 = vpack.c.b16 %v170, %v169
  %v183 = vpack.c.b16 %v172, %v171
  %v184 = vpack.c.b16 %v174, %v173
  %v185 = vpack.c.b16 %v176, %v175
  %v186 = vpack.c.b16 %v178, %v177
  %195 = vmatprep.subr.bf16.mxu0 0
  %196 = vmatpush1.bf16.msra.mxu0 %v179
  %197 = vmatprep.subr.bf16.mxu0 0
  %198 = vmatpush1.bf16.msra.mxu0 %v180
  %199 = vmatprep.subr.bf16.mxu0 0
  %200 = vmatpush1.bf16.msra.mxu0 %v181
  %201 = vmatprep.subr.bf16.mxu0 0
  %202 = vmatpush1.bf16.msra.mxu0 %v182
  %203 = vmatprep.subr.bf16.mxu0 0
  %204 = vmatpush1.bf16.msra.mxu0 %v183
  %205 = vmatprep.subr.bf16.mxu0 0
  %206 = vmatpush1.bf16.msra.mxu0 %v184
  %207 = vmatprep.subr.bf16.mxu0 0
  %208 = vmatpush1.bf16.msra.mxu0 %v185
  %209 = vmatprep.subr.bf16.mxu0 0
  %210 = vmatpush1.bf16.msra.mxu0 %v186
  %211 = vmatprep.subr.bf16.mxu0 0
  %212 = vmatpush1.bf16.msra.mxu0 0
  %213 = vmatprep.subr.bf16.mxu0 0
  %214 = vmatpush1.bf16.msra.mxu0 0
  %215 = vmatprep.subr.bf16.mxu0 0
  %216 = vmatpush1.bf16.msra.mxu0 0
  %217 = vmatprep.subr.bf16.mxu0 0
  %218 = vmatpush1.bf16.msra.mxu0 0
  %219 = vmatprep.subr.bf16.mxu0 0
  %220 = vmatpush1.bf16.msra.mxu0 0
  %221 = vmatprep.subr.bf16.mxu0 0
  %222 = vmatpush1.bf16.msra.mxu0 0
  %223 = vmatprep.subr.bf16.mxu0 0
  %224 = vmatpush1.bf16.msra.mxu0 0
  %225 = vmatprep.subr.bf16.mxu0 0
  %226 = vmatpush1.bf16.msra.mxu0 0
  %227 = vmatprep.mubr.bf16.mxu0 0
  %228 = vmatmul.mubr.bf16.gmra.mrb[0].mxu0 %v131
  %v229 = vpop.f32.mrb[0].mxu0
  %v230 = vadd.f32 0.0, %v229
  %v231 = vpop.f32.mrb[0].mxu0
  %v232 = vpop.f32.mrb[0].mxu0
  %v233 = vadd.f32 0.0, %v232
  %v234 = vpop.f32.mrb[0].mxu0
  %235 = vmatprep.mubr.bf16.mxu0 0
  %236 = vmatmul.mubr.bf16.gmra.mrb[0].mxu0 %v132
  %v237 = vpop.f32.mrb[0].mxu0
  %v238 = vadd.f32 0.0, %v237
  %v239 = vpop.f32.mrb[0].mxu0
  %v240 = vpop.f32.mrb[0].mxu0
  %v241 = vadd.f32 0.0, %v240
  %v242 = vpop.f32.mrb[0].mxu0
  %243 = vmatprep.mubr.bf16.mxu0 0
  %244 = vmatmul.mubr.bf16.gmra.mrb[0].mxu0 %v133
  %v245 = vpop.f32.mrb[0].mxu0
  %v246 = vadd.f32 0.0, %v245
  %v247 = vpop.f32.mrb[0].mxu0
  %v248 = vpop.f32.mrb[0].mxu0
  %v249 = vadd.f32 0.0, %v248
  %v250 = vpop.f32.mrb[0].mxu0
  %251 = vmatprep.mubr.bf16.mxu0 0
  %252 = vmatmul.mubr.bf16.gmra.mrb[0].mxu0 %v134
  %v253 = vpop.f32.mrb[0].mxu0
  %v254 = vadd.f32 0.0, %v253
  %v255 = vpop.f32.mrb[0].mxu0
  %v256 = vpop.f32.mrb[0].mxu0
  %v257 = vadd.f32 0.0, %v256
  %v258 = vpop.f32.mrb[0].mxu0
  %259 = vmatprep.mubr.bf16.mxu0 0
  %260 = vmatmul.mubr.bf16.gmra.mrb[0].mxu0 %v135
  %v261 = vpop.f32.mrb[0].mxu0
  %v262 = vadd.f32 0.0, %v261
  %v263 = vpop.f32.mrb[0].mxu0
  %v264 = vpop.f32.mrb[0].mxu0
  %v265 = vadd.f32 0.0, %v264
  %v266 = vpop.f32.mrb[0].mxu0
  %267 = vmatprep.mubr.bf16.mxu0 0
  %268 = vmatmul.mubr.bf16.gmra.mrb[0].mxu0 %v136
  %v269 = vpop.f32.mrb[0].mxu0
  %v270 = vadd.f32 0.0, %v269
  %v271 = vpop.f32.mrb[0].mxu0
  %v272 = vpop.f32.mrb[0].mxu0
  %v273 = vadd.f32 0.0, %v272
  %v274 = vpop.f32.mrb[0].mxu0
  %275 = vmatprep.mubr.bf16.mxu0 0
  %276 = vmatmul.mubr.bf16.gmra.mrb[0].mxu0 %v137
  %v277 = vpop.f32.mrb[0].mxu0
  %v278 = vadd.f32 0.0, %v277
  %v279 = vpop.f32.mrb[0].mxu0
  %v280 = vpop.f32.mrb[0].mxu0
  %v281 = vadd.f32 0.0, %v280
  %v282 = vpop.f32.mrb[0].mxu0
  %283 = vmatprep.mubr.bf16.mxu0 0
  %284 = vmatmul.mubr.bf16.gmra.mrb[0].mxu0 %v138
  %v285 = vpop.f32.mrb[0].mxu0
  %v286 = vadd.f32 0.0, %v285
  %v287 = vpop.f32.mrb[0].mxu0
  %v288 = vpop.f32.mrb[0].mxu0
  %v289 = vadd.f32 0.0, %v288
  %v290 = vpop.f32.mrb[0].mxu0
  %291 = vdwg.mxu0
  %v292 = vadd.f32 %v67, %v230
  %v293 = vadd.f32 %v68, %v233
  %v294 = vadd.f32 %v69, %v238
  %v295 = vadd.f32 %v70, %v241
  %v296 = vadd.f32 %v71, %v246
  %v297 = vadd.f32 %v72, %v249
  %v298 = vadd.f32 %v73, %v254
  %v299 = vadd.f32 %v74, %v257
  %v300 = vadd.f32 %v75, %v262
  %v301 = vadd.f32 %v76, %v265
  %v302 = vadd.f32 %v77, %v270
  %v303 = vadd.f32 %v78, %v273
  %v304 = vadd.f32 %v79, %v278
  %v305 = vadd.f32 %v80, %v281
  %v306 = vadd.f32 %v81, %v286
  %v307 = vadd.f32 %v82, %v289
  %308 = vst [vmem:[#allocation2] sm:$0xff] %v292
  %309 = vst [vmem:[#allocation2 + $0x8] sm:$0xff] %v293
  %310 = vst [vmem:[#allocation2 + $0x10] sm:$0xff] %v294
  %311 = vst [vmem:[#allocation2 + $0x18] sm:$0xff] %v295
  %312 = vst [vmem:[#allocation2 + $0x20] sm:$0xff] %v296
  %313 = vst [vmem:[#allocation2 + $0x28] sm:$0xff] %v297
  %314 = vst [vmem:[#allocation2 + $0x30] sm:$0xff] %v298
  %315 = vst [vmem:[#allocation2 + $0x38] sm:$0xff] %v299
  %316 = vst [vmem:[#allocation2 + $0x40] sm:$0xff] %v300
  %317 = vst [vmem:[#allocation2 + $0x48] sm:$0xff] %v301
  %318 = vst [vmem:[#allocation2 + $0x50] sm:$0xff] %v302
  %319 = vst [vmem:[#allocation2 + $0x58] sm:$0xff] %v303
  %320 = vst [vmem:[#allocation2 + $0x60] sm:$0xff] %v304
  %321 = vst [vmem:[#allocation2 + $0x68] sm:$0xff] %v305
  %322 = vst [vmem:[#allocation2 + $0x70] sm:$0xff] %v306
  %323 = vst [vmem:[#allocation2 + $0x78] sm:$0xff] %v307
  // Predicated region
  $region18: #{_lambda_.35} parent=0 // pred_check
    %p324 = pneg %p15
  $region19: #{_lambda_.35} parent=0 // pred_check_branch
    %326 = sbr.rel (%p324) target = $region21
  $region20: #{_lambda_.35} parent=0 // pred_region
    %v327 = vld [vmem:[#allocation2] sm:$0xff]
    %v328 = vld [vmem:[#allocation2 + $0x8] sm:$0xff]
    %v329 = vld [vmem:[#allocation2 + $0x10] sm:$0xff]
    %v330 = vld [vmem:[#allocation2 + $0x18] sm:$0xff]
    %v331 = vld [vmem:[#allocation2 + $0x20] sm:$0xff]
    %v332 = vld [vmem:[#allocation2 + $0x28] sm:$0xff]
    %v333 = vld [vmem:[#allocation2 + $0x30] sm:$0xff]
    %v334 = vld [vmem:[#allocation2 + $0x38] sm:$0xff]
    %v335 = vld [vmem:[#allocation2 + $0x40] sm:$0xff]
    %v336 = vld [vmem:[#allocation2 + $0x48] sm:$0xff]
    %v337 = vld [vmem:[#allocation2 + $0x50] sm:$0xff]
    %v338 = vld [vmem:[#allocation2 + $0x58] sm:$0xff]
    %v339 = vld [vmem:[#allocation2 + $0x60] sm:$0xff]
    %v340 = vld [vmem:[#allocation2 + $0x68] sm:$0xff]
    %v341 = vld [vmem:[#allocation2 + $0x70] sm:$0xff]
    %v342 = vld [vmem:[#allocation2 + $0x78] sm:$0xff]
    %343 = vst [vmem:[%s3] sm:$0xff] %v327
    %344 = vst [vmem:[%s3 + $0x8] sm:$0xff] %v328
    %345 = vst [vmem:[%s3 + $0x10] sm:$0xff] %v329
    %346 = vst [vmem:[%s3 + $0x18] sm:$0xff] %v330
    %347 = vst [vmem:[%s3 + $0x20] sm:$0xff] %v331
    %348 = vst [vmem:[%s3 + $0x28] sm:$0xff] %v332
    %349 = vst [vmem:[%s3 + $0x30] sm:$0xff] %v333
    %350 = vst [vmem:[%s3 + $0x38] sm:$0xff] %v334
    %351 = vst [vmem:[%s3 + $0x40] sm:$0xff] %v335
    %352 = vst [vmem:[%s3 + $0x48] sm:$0xff] %v336
    %353 = vst [vmem:[%s3 + $0x50] sm:$0xff] %v337
    %354 = vst [vmem:[%s3 + $0x58] sm:$0xff] %v338
    %355 = vst [vmem:[%s3 + $0x60] sm:$0xff] %v339
    %356 = vst [vmem:[%s3 + $0x68] sm:$0xff] %v340
    %357 = vst [vmem:[%s3 + $0x70] sm:$0xff] %v341
    %358 = vst [vmem:[%s3 + $0x78] sm:$0xff] %v342
  $region21: #{_lambda_.35} parent=0 // pred_fallthru
    _
  // Predicated region
  $region22: #{_lambda_.35} parent=0 // pred_check
    _
  $region23: #{_lambda_.35} parent=0 // pred_check_branch
    %360 = sbr.rel (0) target = $region25
  $region24: #{_lambda_.35} parent=0 // pred_region
    _
  $region25: #{_lambda_.35} parent=0 // pred_fallthru
    _
  // Predicated region
  $region26: #{_lambda_.35} parent=0 // pred_check
    _
  $region27: #{_lambda_.35} parent=0 // pred_check_branch
    %362 = sbr.rel (0) target = $region29
  $region28: #{_lambda_.35} parent=0 // pred_region
    _
  $region29: #{_lambda_.35} parent=0 // pred_fallthru
    _

// kernel: _lambda_.36
$region0: #{_lambda_.36}
  #allocation0 [shape = 'u32[]', space=smem, size = 0x4, offset = 0x4, fixed_abs, tag = 'smem constant byte address 0x4 - core index']
  #allocation1 [shape = 'u32[144,128]{1,0:T(1,128)}', space=vmem, size = 0x12000, scoped, tag = 'internal scratch']
  #allocation2 [shape = 'f32[1,128]{1,0:T(1,128)}', space=vmem, size = 0x200, scoped, tag = 'scratch operand']
  #allocation3 [shape = 'f32[1,128]{1,0:T(1,128)}', space=vmem, size = 0x200, scoped, tag = 'scratch operand']
  %s0 = inlined_call_operand.vmem [shape: f32[512,128], index: 0, kind: input, shape index: {}]
  %s1 = inlined_call_operand.vmem [shape: f32[1,128], index: 1, kind: input, shape index: {}]
  %s2 = inlined_call_operand.vmem [shape: f32[1,128], index: 2, kind: input, shape index: {}]
  %s3 = inlined_call_operand.vmem [shape: f32[1,128], index: 3, kind: output, shape index: {0}]
  %s4 = inlined_call_operand.vmem [shape: f32[1,128], index: 4, kind: output, shape index: {1}]
  %5 = xla_tuple %s3, %s4
  %s6 = sld [smem:[#allocation0]]
  $region38: #{_lambda_.36} parent=0
    _
  %s8 = ssub.s32 1, %s6
  %s9 = scalar_select 0, %s8, %s6
  // Predicated region
  $region2: #{_lambda_.36} parent=0 // pred_check
    _
  $region3: #{_lambda_.36} parent=0 // pred_check_branch
    %11 = sbr.rel (0) target = $region5
  $region4: #{_lambda_.36} parent=0 // pred_region
    _
  $region5: #{_lambda_.36} parent=0 // pred_fallthru
    _
  // Predicated region
  $region6: #{_lambda_.36} parent=0 // pred_check
    _
  $region7: #{_lambda_.36} parent=0 // pred_check_branch
    %13 = sbr.rel (0) target = $region9
  $region8: #{_lambda_.36} parent=0 // pred_region
    _
  $region9: #{_lambda_.36} parent=0 // pred_fallthru
    _
  // Predicated region
  $region10: #{_lambda_.36} parent=0 // pred_check
    _
  $region11: #{_lambda_.36} parent=0 // pred_check_branch
    %15 = sbr.rel (0) target = $region13
  $region12: #{_lambda_.36} parent=0 // pred_region
    _
  $region13: #{_lambda_.36} parent=0 // pred_fallthru
    _
  %p16 = scmp.eq.s32.totalorder 0, 0
  // Predicated region
  $region14: #{_lambda_.36} parent=0 // pred_check
    %p17 = pneg %p16
  $region15: #{_lambda_.36} parent=0 // pred_check_branch
    %19 = sbr.rel (%p17) target = $region17
  $region16: #{_lambda_.36} parent=0 // pred_region
    %20 = vst [vmem:[#allocation2] sm:$0x1] 0.0
    %21 = vst [vmem:[#allocation3] sm:$0x1] 0.0
  $region17: #{_lambda_.36} parent=0 // pred_fallthru
    _
  %v22 = vld [vmem:[%s0] sm:$0xff]
  %v23 = vld [vmem:[%s0 + $0x8] sm:$0xff]
  %v24 = vld [vmem:[%s0 + $0x10] sm:$0xff]
  %v25 = vld [vmem:[%s0 + $0x18] sm:$0xff]
  %v26 = vld [vmem:[%s0 + $0x20] sm:$0xff]
  %v27 = vld [vmem:[%s0 + $0x28] sm:$0xff]
  %v28 = vld [vmem:[%s0 + $0x30] sm:$0xff]
  %v29 = vld [vmem:[%s0 + $0x38] sm:$0xff]
  %v30 = vld [vmem:[%s0 + $0x40] sm:$0xff]
  %v31 = vld [vmem:[%s0 + $0x48] sm:$0xff]
  %v32 = vld [vmem:[%s0 + $0x50] sm:$0xff]
  %v33 = vld [vmem:[%s0 + $0x58] sm:$0xff]
  %v34 = vld [vmem:[%s0 + $0x60] sm:$0xff]
  %v35 = vld [vmem:[%s0 + $0x68] sm:$0xff]
  %v36 = vld [vmem:[%s0 + $0x70] sm:$0xff]
  %v37 = vld [vmem:[%s0 + $0x78] sm:$0xff]
  %v38 = vld [vmem:[%s0 + $0x80] sm:$0xff]
  %v39 = vld [vmem:[%s0 + $0x88] sm:$0xff]
  %v40 = vld [vmem:[%s0 + $0x90] sm:$0xff]
  %v41 = vld [vmem:[%s0 + $0x98] sm:$0xff]
  %v42 = vld [vmem:[%s0 + $0xa0] sm:$0xff]
  %v43 = vld [vmem:[%s0 + $0xa8] sm:$0xff]
  %v44 = vld [vmem:[%s0 + $0xb0] sm:$0xff]
  %v45 = vld [vmem:[%s0 + $0xb8] sm:$0xff]
  %v46 = vld [vmem:[%s0 + $0xc0] sm:$0xff]
  %v47 = vld [vmem:[%s0 + $0xc8] sm:$0xff]
  %v48 = vld [vmem:[%s0 + $0xd0] sm:$0xff]
  %v49 = vld [vmem:[%s0 + $0xd8] sm:$0xff]
  %v50 = vld [vmem:[%s0 + $0xe0] sm:$0xff]
  %v51 = vld [vmem:[%s0 + $0xe8] sm:$0xff]
  %v52 = vld [vmem:[%s0 + $0xf0] sm:$0xff]
  %v53 = vld [vmem:[%s0 + $0xf8] sm:$0xff]
  %v54 = vld [vmem:[%s0 + $0x100] sm:$0xff]
  %v55 = vld [vmem:[%s0 + $0x108] sm:$0xff]
  %v56 = vld [vmem:[%s0 + $0x110] sm:$0xff]
  %v57 = vld [vmem:[%s0 + $0x118] sm:$0xff]
  %v58 = vld [vmem:[%s0 + $0x120] sm:$0xff]
  %v59 = vld [vmem:[%s0 + $0x128] sm:$0xff]
  %v60 = vld [vmem:[%s0 + $0x130] sm:$0xff]
  %v61 = vld [vmem:[%s0 + $0x138] sm:$0xff]
  %v62 = vld [vmem:[%s0 + $0x140] sm:$0xff]
  %v63 = vld [vmem:[%s0 + $0x148] sm:$0xff]
  %v64 = vld [vmem:[%s0 + $0x150] sm:$0xff]
  %v65 = vld [vmem:[%s0 + $0x158] sm:$0xff]
  %v66 = vld [vmem:[%s0 + $0x160] sm:$0xff]
  %v67 = vld [vmem:[%s0 + $0x168] sm:$0xff]
  %v68 = vld [vmem:[%s0 + $0x170] sm:$0xff]
  %v69 = vld [vmem:[%s0 + $0x178] sm:$0xff]
  %v70 = vld [vmem:[%s0 + $0x180] sm:$0xff]
  %v71 = vld [vmem:[%s0 + $0x188] sm:$0xff]
  %v72 = vld [vmem:[%s0 + $0x190] sm:$0xff]
  %v73 = vld [vmem:[%s0 + $0x198] sm:$0xff]
  %v74 = vld [vmem:[%s0 + $0x1a0] sm:$0xff]
  %v75 = vld [vmem:[%s0 + $0x1a8] sm:$0xff]
  %v76 = vld [vmem:[%s0 + $0x1b0] sm:$0xff]
  %v77 = vld [vmem:[%s0 + $0x1b8] sm:$0xff]
  %v78 = vld [vmem:[%s0 + $0x1c0] sm:$0xff]
  %v79 = vld [vmem:[%s0 + $0x1c8] sm:$0xff]
  %v80 = vld [vmem:[%s0 + $0x1d0] sm:$0xff]
  %v81 = vld [vmem:[%s0 + $0x1d8] sm:$0xff]
  %v82 = vld [vmem:[%s0 + $0x1e0] sm:$0xff]
  %v83 = vld [vmem:[%s0 + $0x1e8] sm:$0xff]
  %v84 = vld [vmem:[%s0 + $0x1f0] sm:$0xff]
  %v85 = vld [vmem:[%s0 + $0x1f8] sm:$0xff]
  %v86 = vld [vmem:[#allocation2] sm:$0x1]
  %v87 = vadd.f32 %v22, %v23
  %v88 = vadd.f32 %v87, %v24
  %v89 = vadd.f32 %v88, %v25
  %v90 = vadd.f32 %v89, %v26
  %v91 = vadd.f32 %v90, %v27
  %v92 = vadd.f32 %v91, %v28
  %v93 = vadd.f32 %v92, %v29
  %v94 = vadd.f32 %v93, %v30
  %v95 = vadd.f32 %v94, %v31
  %v96 = vadd.f32 %v95, %v32
  %v97 = vadd.f32 %v96, %v33
  %v98 = vadd.f32 %v97, %v34
  %v99 = vadd.f32 %v98, %v35
  %v100 = vadd.f32 %v99, %v36
  %v101 = vadd.f32 %v100, %v37
  %v102 = vadd.f32 %v101, %v38
  %v103 = vadd.f32 %v102, %v39
  %v104 = vadd.f32 %v103, %v40
  %v105 = vadd.f32 %v104, %v41
  %v106 = vadd.f32 %v105, %v42
  %v107 = vadd.f32 %v106, %v43
  %v108 = vadd.f32 %v107, %v44
  %v109 = vadd.f32 %v108, %v45
  %v110 = vadd.f32 %v109, %v46
  %v111 = vadd.f32 %v110, %v47
  %v112 = vadd.f32 %v111, %v48
  %v113 = vadd.f32 %v112, %v49
  %v114 = vadd.f32 %v113, %v50
  %v115 = vadd.f32 %v114, %v51
  %v116 = vadd.f32 %v115, %v52
  %v117 = vadd.f32 %v116, %v53
  %v118 = vadd.f32 %v117, %v54
  %v119 = vadd.f32 %v118, %v55
  %v120 = vadd.f32 %v119, %v56
  %v121 = vadd.f32 %v120, %v57
  %v122 = vadd.f32 %v121, %v58
  %v123 = vadd.f32 %v122, %v59
  %v124 = vadd.f32 %v123, %v60
  %v125 = vadd.f32 %v124, %v61
  %v126 = vadd.f32 %v125, %v62
  %v127 = vadd.f32 %v126, %v63
  %v128 = vadd.f32 %v127, %v64
  %v129 = vadd.f32 %v128, %v65
  %v130 = vadd.f32 %v129, %v66
  %v131 = vadd.f32 %v130, %v67
  %v132 = vadd.f32 %v131, %v68
  %v133 = vadd.f32 %v132, %v69
  %v134 = vadd.f32 %v133, %v70
  %v135 = vadd.f32 %v134, %v71
  %v136 = vadd.f32 %v135, %v72
  %v137 = vadd.f32 %v136, %v73
  %v138 = vadd.f32 %v137, %v74
  %v139 = vadd.f32 %v138, %v75
  %v140 = vadd.f32 %v139, %v76
  %v141 = vadd.f32 %v140, %v77
  %v142 = vadd.f32 %v141, %v78
  %v143 = vadd.f32 %v142, %v79
  %v144 = vadd.f32 %v143, %v80
  %v145 = vadd.f32 %v144, %v81
  %v146 = vadd.f32 %v145, %v82
  %v147 = vadd.f32 %v146, %v83
  %v148 = vadd.f32 %v147, %v84
  %v149 = vadd.f32 %v148, %v85
  %v150 = vrot.slane %v149, 4
  %v151 = vadd.f32 %v149, %v150
  %v152 = vrot.slane %v151, 2
  %v153 = vadd.f32 %v151, %v152
  %v154 = vrot.slane %v153, 1
  %v155 = vadd.f32 %v153, %v154
  %v156 = vadd.f32 %v86, %v155
  %157 = vst [vmem:[#allocation2] sm:$0x1] %v156
  %v158 = vld [vmem:[#allocation3] sm:$0x1]
  %v159 = vmul.f32 %v22, %v22
  %v160 = vmul.f32 %v23, %v23
  %v161 = vmul.f32 %v24, %v24
  %v162 = vmul.f32 %v25, %v25
  %v163 = vmul.f32 %v26, %v26
  %v164 = vmul.f32 %v27, %v27
  %v165 = vmul.f32 %v28, %v28
  %v166 = vmul.f32 %v29, %v29
  %v167 = vmul.f32 %v30, %v30
  %v168 = vmul.f32 %v31, %v31
  %v169 = vmul.f32 %v32, %v32
  %v170 = vmul.f32 %v33, %v33
  %v171 = vmul.f32 %v34, %v34
  %v172 = vmul.f32 %v35, %v35
  %v173 = vmul.f32 %v36, %v36
  %v174 = vmul.f32 %v37, %v37
  %v175 = vmul.f32 %v38, %v38
  %v176 = vmul.f32 %v39, %v39
  %v177 = vmul.f32 %v40, %v40
  %v178 = vmul.f32 %v41, %v41
  %v179 = vmul.f32 %v42, %v42
  %v180 = vmul.f32 %v43, %v43
  %v181 = vmul.f32 %v44, %v44
  %v182 = vmul.f32 %v45, %v45
  %v183 = vmul.f32 %v46, %v46
  %v184 = vmul.f32 %v47, %v47
  %v185 = vmul.f32 %v48, %v48
  %v186 = vmul.f32 %v49, %v49
  %v187 = vmul.f32 %v50, %v50
  %v188 = vmul.f32 %v51, %v51
  %v189 = vmul.f32 %v52, %v52
  %v190 = vmul.f32 %v53, %v53
  %v191 = vmul.f32 %v54, %v54
  %v192 = vmul.f32 %v55, %v55
  %v193 = vmul.f32 %v56, %v56
  %v194 = vmul.f32 %v57, %v57
  %v195 = vmul.f32 %v58, %v58
  %v196 = vmul.f32 %v59, %v59
  %v197 = vmul.f32 %v60, %v60
  %v198 = vmul.f32 %v61, %v61
  %v199 = vmul.f32 %v62, %v62
  %v200 = vmul.f32 %v63, %v63
  %v201 = vmul.f32 %v64, %v64
  %v202 = vmul.f32 %v65, %v65
  %v203 = vmul.f32 %v66, %v66
  %v204 = vmul.f32 %v67, %v67
  %v205 = vmul.f32 %v68, %v68
  %v206 = vmul.f32 %v69, %v69
  %v207 = vmul.f32 %v70, %v70
  %v208 = vmul.f32 %v71, %v71
  %v209 = vmul.f32 %v72, %v72
  %v210 = vmul.f32 %v73, %v73
  %v211 = vmul.f32 %v74, %v74
  %v212 = vmul.f32 %v75, %v75
  %v213 = vmul.f32 %v76, %v76
  %v214 = vmul.f32 %v77, %v77
  %v215 = vmul.f32 %v78, %v78
  %v216 = vmul.f32 %v79, %v79
  %v217 = vmul.f32 %v80, %v80
  %v218 = vmul.f32 %v81, %v81
  %v219 = vmul.f32 %v82, %v82
  %v220 = vmul.f32 %v83, %v83
  %v221 = vmul.f32 %v84, %v84
  %v222 = vmul.f32 %v85, %v85
  %v223 = vadd.f32 %v159, %v160
  %v224 = vadd.f32 %v223, %v161
  %v225 = vadd.f32 %v224, %v162
  %v226 = vadd.f32 %v225, %v163
  %v227 = vadd.f32 %v226, %v164
  %v228 = vadd.f32 %v227, %v165
  %v229 = vadd.f32 %v228, %v166
  %v230 = vadd.f32 %v229, %v167
  %v231 = vadd.f32 %v230, %v168
  %v232 = vadd.f32 %v231, %v169
  %v233 = vadd.f32 %v232, %v170
  %v234 = vadd.f32 %v233, %v171
  %v235 = vadd.f32 %v234, %v172
  %v236 = vadd.f32 %v235, %v173
  %v237 = vadd.f32 %v236, %v174
  %v238 = vadd.f32 %v237, %v175
  %v239 = vadd.f32 %v238, %v176
  %v240 = vadd.f32 %v239, %v177
  %v241 = vadd.f32 %v240, %v178
  %v242 = vadd.f32 %v241, %v179
  %v243 = vadd.f32 %v242, %v180
  %v244 = vadd.f32 %v243, %v181
  %v245 = vadd.f32 %v244, %v182
  %v246 = vadd.f32 %v245, %v183
  %v247 = vadd.f32 %v246, %v184
  %v248 = vadd.f32 %v247, %v185
  %v249 = vadd.f32 %v248, %v186
  %v250 = vadd.f32 %v249, %v187
  %v251 = vadd.f32 %v250, %v188
  %v252 = vadd.f32 %v251, %v189
  %v253 = vadd.f32 %v252, %v190
  %v254 = vadd.f32 %v253, %v191
  %v255 = vadd.f32 %v254, %v192
  %v256 = vadd.f32 %v255, %v193
  %v257 = vadd.f32 %v256, %v194
  %v258 = vadd.f32 %v257, %v195
  %v259 = vadd.f32 %v258, %v196
  %v260 = vadd.f32 %v259, %v197
  %v261 = vadd.f32 %v260, %v198
  %v262 = vadd.f32 %v261, %v199
  %v263 = vadd.f32 %v262, %v200
  %v264 = vadd.f32 %v263, %v201
  %v265 = vadd.f32 %v264, %v202
  %v266 = vadd.f32 %v265, %v203
  %v267 = vadd.f32 %v266, %v204
  %v268 = vadd.f32 %v267, %v205
  %v269 = vadd.f32 %v268, %v206
  %v270 = vadd.f32 %v269, %v207
  %v271 = vadd.f32 %v270, %v208
  %v272 = vadd.f32 %v271, %v209
  %v273 = vadd.f32 %v272, %v210
  %v274 = vadd.f32 %v273, %v211
  %v275 = vadd.f32 %v274, %v212
  %v276 = vadd.f32 %v275, %v213
  %v277 = vadd.f32 %v276, %v214
  %v278 = vadd.f32 %v277, %v215
  %v279 = vadd.f32 %v278, %v216
  %v280 = vadd.f32 %v279, %v217
  %v281 = vadd.f32 %v280, %v218
  %v282 = vadd.f32 %v281, %v219
  %v283 = vadd.f32 %v282, %v220
  %v284 = vadd.f32 %v283, %v221
  %v285 = vadd.f32 %v284, %v222
  %v286 = vrot.slane %v285, 4
  %v287 = vadd.f32 %v285, %v286
  %v288 = vrot.slane %v287, 2
  %v289 = vadd.f32 %v287, %v288
  %v290 = vrot.slane %v289, 1
  %v291 = vadd.f32 %v289, %v290
  %v292 = vadd.f32 %v158, %v291
  %293 = vst [vmem:[#allocation3] sm:$0x1] %v292
  // Predicated region
  $region18: #{_lambda_.36} parent=0 // pred_check
    %p294 = pneg %p16
  $region19: #{_lambda_.36} parent=0 // pred_check_branch
    %296 = sbr.rel (%p294) target = $region21
  $region20: #{_lambda_.36} parent=0 // pred_region
    %v297 = vld [vmem:[#allocation2] sm:$0x1]
    %v298 = vmul.f32 %v297, 0.001953125
    %v299 = vld [vmem:[#allocation3] sm:$0x1]
    %v300 = vmul.f32 %v299, 0.001953125
    %v301 = vmul.f32 %v298, %v298
    %v302 = vsub.f32 %v300, %v301
    %v303 = vld [vmem:[%s1] sm:$0x1]
    %v304 = vadd.f32 %v302, 1e-05
    %v305 = vrsqrt.pop %v304
    %v306 = vmul.f32 %v303, %v305
    %307 = vst [vmem:[%s3] sm:$0x1] %v306
    %v308 = vld [vmem:[%s2] sm:$0x1]
    %v309 = vmul.f32 %v298, %v306
    %v310 = vsub.f32 %v308, %v309
    %311 = vst [vmem:[%s4] sm:$0x1] %v310
  $region21: #{_lambda_.36} parent=0 // pred_fallthru
    _
  // Predicated region
  $region22: #{_lambda_.36} parent=0 // pred_check
    _
  $region23: #{_lambda_.36} parent=0 // pred_check_branch
    %313 = sbr.rel (0) target = $region25
  $region24: #{_lambda_.36} parent=0 // pred_region
    _
  $region25: #{_lambda_.36} parent=0 // pred_fallthru
    _
  // Predicated region
  $region26: #{_lambda_.36} parent=0 // pred_check
    _
  $region27: #{_lambda_.36} parent=0 // pred_check_branch
    %315 = sbr.rel (0) target = $region29
  $region28: #{_lambda_.36} parent=0 // pred_region
    _
  $region29: #{_lambda_.36} parent=0 // pred_fallthru
    _
  // Predicated region
  $region30: #{_lambda_.36} parent=0 // pred_check
    _
  $region31: #{_lambda_.36} parent=0 // pred_check_branch
    %317 = sbr.rel (0) target = $region33
  $region32: #{_lambda_.36} parent=0 // pred_region
    _
  $region33: #{_lambda_.36} parent=0 // pred_fallthru
    _
  // Predicated region
  $region34: #{_lambda_.36} parent=0 // pred_check
    _
  $region35: #{_lambda_.36} parent=0 // pred_check_branch
    %319 = sbr.rel (0) target = $region37
  $region36: #{_lambda_.36} parent=0 // pred_region
    _
  $region37: #{_lambda_.36} parent=0 // pred_fallthru
    _

// kernel: _lambda_.37
$region0: #{_lambda_.37}
  #allocation0 [shape = 'u32[]', space=smem, size = 0x4, offset = 0x4, fixed_abs, tag = 'smem constant byte address 0x4 - core index']
  #allocation1 [shape = 'u32[144,128]{1,0:T(1,128)}', space=vmem, size = 0x12000, scoped, tag = 'internal scratch']
  %s0 = inlined_call_operand.vmem [shape: f32[512,128], index: 0, kind: input, shape index: {}]
  %s1 = inlined_call_operand.vmem [shape: f32[1,128], index: 1, kind: input, shape index: {}]
  %s2 = inlined_call_operand.vmem [shape: f32[1,128], index: 2, kind: input, shape index: {}]
  %s3 = inlined_call_operand.vmem [shape: f32[512,128], index: 3, kind: output, shape index: {}]
  %s4 = sld [smem:[#allocation0]]
  $region22: #{_lambda_.37} parent=0
    _
  %s6 = ssub.s32 1, %s4
  %s7 = scalar_select 0, %s6, %s4
  // Predicated region
  $region2: #{_lambda_.37} parent=0 // pred_check
    _
  $region3: #{_lambda_.37} parent=0 // pred_check_branch
    %9 = sbr.rel (0) target = $region5
  $region4: #{_lambda_.37} parent=0 // pred_region
    _
  $region5: #{_lambda_.37} parent=0 // pred_fallthru
    _
  // Predicated region
  $region6: #{_lambda_.37} parent=0 // pred_check
    _
  $region7: #{_lambda_.37} parent=0 // pred_check_branch
    %11 = sbr.rel (0) target = $region9
  $region8: #{_lambda_.37} parent=0 // pred_region
    _
  $region9: #{_lambda_.37} parent=0 // pred_fallthru
    _
  // Predicated region
  $region10: #{_lambda_.37} parent=0 // pred_check
    _
  $region11: #{_lambda_.37} parent=0 // pred_check_branch
    %13 = sbr.rel (0) target = $region13
  $region12: #{_lambda_.37} parent=0 // pred_region
    _
  $region13: #{_lambda_.37} parent=0 // pred_fallthru
    _
  %v14 = vld [vmem:[%s0] sm:$0xff]
  %v15 = vld [vmem:[%s0 + $0x8] sm:$0xff]
  %v16 = vld [vmem:[%s0 + $0x10] sm:$0xff]
  %v17 = vld [vmem:[%s0 + $0x18] sm:$0xff]
  %v18 = vld [vmem:[%s0 + $0x20] sm:$0xff]
  %v19 = vld [vmem:[%s0 + $0x28] sm:$0xff]
  %v20 = vld [vmem:[%s0 + $0x30] sm:$0xff]
  %v21 = vld [vmem:[%s0 + $0x38] sm:$0xff]
  %v22 = vld [vmem:[%s0 + $0x40] sm:$0xff]
  %v23 = vld [vmem:[%s0 + $0x48] sm:$0xff]
  %v24 = vld [vmem:[%s0 + $0x50] sm:$0xff]
  %v25 = vld [vmem:[%s0 + $0x58] sm:$0xff]
  %v26 = vld [vmem:[%s0 + $0x60] sm:$0xff]
  %v27 = vld [vmem:[%s0 + $0x68] sm:$0xff]
  %v28 = vld [vmem:[%s0 + $0x70] sm:$0xff]
  %v29 = vld [vmem:[%s0 + $0x78] sm:$0xff]
  %v30 = vld [vmem:[%s0 + $0x80] sm:$0xff]
  %v31 = vld [vmem:[%s0 + $0x88] sm:$0xff]
  %v32 = vld [vmem:[%s0 + $0x90] sm:$0xff]
  %v33 = vld [vmem:[%s0 + $0x98] sm:$0xff]
  %v34 = vld [vmem:[%s0 + $0xa0] sm:$0xff]
  %v35 = vld [vmem:[%s0 + $0xa8] sm:$0xff]
  %v36 = vld [vmem:[%s0 + $0xb0] sm:$0xff]
  %v37 = vld [vmem:[%s0 + $0xb8] sm:$0xff]
  %v38 = vld [vmem:[%s0 + $0xc0] sm:$0xff]
  %v39 = vld [vmem:[%s0 + $0xc8] sm:$0xff]
  %v40 = vld [vmem:[%s0 + $0xd0] sm:$0xff]
  %v41 = vld [vmem:[%s0 + $0xd8] sm:$0xff]
  %v42 = vld [vmem:[%s0 + $0xe0] sm:$0xff]
  %v43 = vld [vmem:[%s0 + $0xe8] sm:$0xff]
  %v44 = vld [vmem:[%s0 + $0xf0] sm:$0xff]
  %v45 = vld [vmem:[%s0 + $0xf8] sm:$0xff]
  %v46 = vld [vmem:[%s0 + $0x100] sm:$0xff]
  %v47 = vld [vmem:[%s0 + $0x108] sm:$0xff]
  %v48 = vld [vmem:[%s0 + $0x110] sm:$0xff]
  %v49 = vld [vmem:[%s0 + $0x118] sm:$0xff]
  %v50 = vld [vmem:[%s0 + $0x120] sm:$0xff]
  %v51 = vld [vmem:[%s0 + $0x128] sm:$0xff]
  %v52 = vld [vmem:[%s0 + $0x130] sm:$0xff]
  %v53 = vld [vmem:[%s0 + $0x138] sm:$0xff]
  %v54 = vld [vmem:[%s0 + $0x140] sm:$0xff]
  %v55 = vld [vmem:[%s0 + $0x148] sm:$0xff]
  %v56 = vld [vmem:[%s0 + $0x150] sm:$0xff]
  %v57 = vld [vmem:[%s0 + $0x158] sm:$0xff]
  %v58 = vld [vmem:[%s0 + $0x160] sm:$0xff]
  %v59 = vld [vmem:[%s0 + $0x168] sm:$0xff]
  %v60 = vld [vmem:[%s0 + $0x170] sm:$0xff]
  %v61 = vld [vmem:[%s0 + $0x178] sm:$0xff]
  %v62 = vld [vmem:[%s0 + $0x180] sm:$0xff]
  %v63 = vld [vmem:[%s0 + $0x188] sm:$0xff]
  %v64 = vld [vmem:[%s0 + $0x190] sm:$0xff]
  %v65 = vld [vmem:[%s0 + $0x198] sm:$0xff]
  %v66 = vld [vmem:[%s0 + $0x1a0] sm:$0xff]
  %v67 = vld [vmem:[%s0 + $0x1a8] sm:$0xff]
  %v68 = vld [vmem:[%s0 + $0x1b0] sm:$0xff]
  %v69 = vld [vmem:[%s0 + $0x1b8] sm:$0xff]
  %v70 = vld [vmem:[%s0 + $0x1c0] sm:$0xff]
  %v71 = vld [vmem:[%s0 + $0x1c8] sm:$0xff]
  %v72 = vld [vmem:[%s0 + $0x1d0] sm:$0xff]
  %v73 = vld [vmem:[%s0 + $0x1d8] sm:$0xff]
  %v74 = vld [vmem:[%s0 + $0x1e0] sm:$0xff]
  %v75 = vld [vmem:[%s0 + $0x1e8] sm:$0xff]
  %v76 = vld [vmem:[%s0 + $0x1f0] sm:$0xff]
  %v77 = vld [vmem:[%s0 + $0x1f8] sm:$0xff]
  %v78 = vld [vmem:[%s1] sm:$0x1]
  %v80 = vlaneseq
  %v81 = vshrl.u32 %v80, 7
  %v82 = vsub.s32 0, %v81
  %v83 = vrot.slane %v78, %v82
  %v85 = vmul.f32 %v14, %v83
  %v86 = vmul.f32 %v15, %v83
  %v87 = vmul.f32 %v16, %v83
  %v88 = vmul.f32 %v17, %v83
  %v89 = vmul.f32 %v18, %v83
  %v90 = vmul.f32 %v19, %v83
  %v91 = vmul.f32 %v20, %v83
  %v92 = vmul.f32 %v21, %v83
  %v93 = vmul.f32 %v22, %v83
  %v94 = vmul.f32 %v23, %v83
  %v95 = vmul.f32 %v24, %v83
  %v96 = vmul.f32 %v25, %v83
  %v97 = vmul.f32 %v26, %v83
  %v98 = vmul.f32 %v27, %v83
  %v99 = vmul.f32 %v28, %v83
  %v100 = vmul.f32 %v29, %v83
  %v101 = vmul.f32 %v30, %v83
  %v102 = vmul.f32 %v31, %v83
  %v103 = vmul.f32 %v32, %v83
  %v104 = vmul.f32 %v33, %v83
  %v105 = vmul.f32 %v34, %v83
  %v106 = vmul.f32 %v35, %v83
  %v107 = vmul.f32 %v36, %v83
  %v108 = vmul.f32 %v37, %v83
  %v109 = vmul.f32 %v38, %v83
  %v110 = vmul.f32 %v39, %v83
  %v111 = vmul.f32 %v40, %v83
  %v112 = vmul.f32 %v41, %v83
  %v113 = vmul.f32 %v42, %v83
  %v114 = vmul.f32 %v43, %v83
  %v115 = vmul.f32 %v44, %v83
  %v116 = vmul.f32 %v45, %v83
  %v117 = vmul.f32 %v46, %v83
  %v118 = vmul.f32 %v47, %v83
  %v119 = vmul.f32 %v48, %v83
  %v120 = vmul.f32 %v49, %v83
  %v121 = vmul.f32 %v50, %v83
  %v122 = vmul.f32 %v51, %v83
  %v123 = vmul.f32 %v52, %v83
  %v124 = vmul.f32 %v53, %v83
  %v125 = vmul.f32 %v54, %v83
  %v126 = vmul.f32 %v55, %v83
  %v127 = vmul.f32 %v56, %v83
  %v128 = vmul.f32 %v57, %v83
  %v129 = vmul.f32 %v58, %v83
  %v130 = vmul.f32 %v59, %v83
  %v131 = vmul.f32 %v60, %v83
  %v132 = vmul.f32 %v61, %v83
  %v133 = vmul.f32 %v62, %v83
  %v134 = vmul.f32 %v63, %v83
  %v135 = vmul.f32 %v64, %v83
  %v136 = vmul.f32 %v65, %v83
  %v137 = vmul.f32 %v66, %v83
  %v138 = vmul.f32 %v67, %v83
  %v139 = vmul.f32 %v68, %v83
  %v140 = vmul.f32 %v69, %v83
  %v141 = vmul.f32 %v70, %v83
  %v142 = vmul.f32 %v71, %v83
  %v143 = vmul.f32 %v72, %v83
  %v144 = vmul.f32 %v73, %v83
  %v145 = vmul.f32 %v74, %v83
  %v146 = vmul.f32 %v75, %v83
  %v147 = vmul.f32 %v76, %v83
  %v148 = vmul.f32 %v77, %v83
  %v149 = vld [vmem:[%s2] sm:$0x1]
  %v151 = vlaneseq
  %v152 = vshrl.u32 %v151, 7
  %v153 = vsub.s32 0, %v152
  %v154 = vrot.slane %v149, %v153
  %v156 = vadd.f32 %v85, %v154
  %v157 = vadd.f32 %v86, %v154
  %v158 = vadd.f32 %v87, %v154
  %v159 = vadd.f32 %v88, %v154
  %v160 = vadd.f32 %v89, %v154
  %v161 = vadd.f32 %v90, %v154
  %v162 = vadd.f32 %v91, %v154
  %v163 = vadd.f32 %v92, %v154
  %v164 = vadd.f32 %v93, %v154
  %v165 = vadd.f32 %v94, %v154
  %v166 = vadd.f32 %v95, %v154
  %v167 = vadd.f32 %v96, %v154
  %v168 = vadd.f32 %v97, %v154
  %v169 = vadd.f32 %v98, %v154
  %v170 = vadd.f32 %v99, %v154
  %v171 = vadd.f32 %v100, %v154
  %v172 = vadd.f32 %v101, %v154
  %v173 = vadd.f32 %v102, %v154
  %v174 = vadd.f32 %v103, %v154
  %v175 = vadd.f32 %v104, %v154
  %v176 = vadd.f32 %v105, %v154
  %v177 = vadd.f32 %v106, %v154
  %v178 = vadd.f32 %v107, %v154
  %v179 = vadd.f32 %v108, %v154
  %v180 = vadd.f32 %v109, %v154
  %v181 = vadd.f32 %v110, %v154
  %v182 = vadd.f32 %v111, %v154
  %v183 = vadd.f32 %v112, %v154
  %v184 = vadd.f32 %v113, %v154
  %v185 = vadd.f32 %v114, %v154
  %v186 = vadd.f32 %v115, %v154
  %v187 = vadd.f32 %v116, %v154
  %v188 = vadd.f32 %v117, %v154
  %v189 = vadd.f32 %v118, %v154
  %v190 = vadd.f32 %v119, %v154
  %v191 = vadd.f32 %v120, %v154
  %v192 = vadd.f32 %v121, %v154
  %v193 = vadd.f32 %v122, %v154
  %v194 = vadd.f32 %v123, %v154
  %v195 = vadd.f32 %v124, %v154
  %v196 = vadd.f32 %v125, %v154
  %v197 = vadd.f32 %v126, %v154
  %v198 = vadd.f32 %v127, %v154
  %v199 = vadd.f32 %v128, %v154
  %v200 = vadd.f32 %v129, %v154
  %v201 = vadd.f32 %v130, %v154
  %v202 = vadd.f32 %v131, %v154
  %v203 = vadd.f32 %v132, %v154
  %v204 = vadd.f32 %v133, %v154
  %v205 = vadd.f32 %v134, %v154
  %v206 = vadd.f32 %v135, %v154
  %v207 = vadd.f32 %v136, %v154
  %v208 = vadd.f32 %v137, %v154
  %v209 = vadd.f32 %v138, %v154
  %v210 = vadd.f32 %v139, %v154
  %v211 = vadd.f32 %v140, %v154
  %v212 = vadd.f32 %v141, %v154
  %v213 = vadd.f32 %v142, %v154
  %v214 = vadd.f32 %v143, %v154
  %v215 = vadd.f32 %v144, %v154
  %v216 = vadd.f32 %v145, %v154
  %v217 = vadd.f32 %v146, %v154
  %v218 = vadd.f32 %v147, %v154
  %v219 = vadd.f32 %v148, %v154
  %220 = vst [vmem:[%s3] sm:$0xff] %v156
  %221 = vst [vmem:[%s3 + $0x8] sm:$0xff] %v157
  %222 = vst [vmem:[%s3 + $0x10] sm:$0xff] %v158
  %223 = vst [vmem:[%s3 + $0x18] sm:$0xff] %v159
  %224 = vst [vmem:[%s3 + $0x20] sm:$0xff] %v160
  %225 = vst [vmem:[%s3 + $0x28] sm:$0xff] %v161
  %226 = vst [vmem:[%s3 + $0x30] sm:$0xff] %v162
  %227 = vst [vmem:[%s3 + $0x38] sm:$0xff] %v163
  %228 = vst [vmem:[%s3 + $0x40] sm:$0xff] %v164
  %229 = vst [vmem:[%s3 + $0x48] sm:$0xff] %v165
  %230 = vst [vmem:[%s3 + $0x50] sm:$0xff] %v166
  %231 = vst [vmem:[%s3 + $0x58] sm:$0xff] %v167
  %232 = vst [vmem:[%s3 + $0x60] sm:$0xff] %v168
  %233 = vst [vmem:[%s3 + $0x68] sm:$0xff] %v169
  %234 = vst [vmem:[%s3 + $0x70] sm:$0xff] %v170
  %235 = vst [vmem:[%s3 + $0x78] sm:$0xff] %v171
  %236 = vst [vmem:[%s3 + $0x80] sm:$0xff] %v172
  %237 = vst [vmem:[%s3 + $0x88] sm:$0xff] %v173
  %238 = vst [vmem:[%s3 + $0x90] sm:$0xff] %v174
  %239 = vst [vmem:[%s3 + $0x98] sm:$0xff] %v175
  %240 = vst [vmem:[%s3 + $0xa0] sm:$0xff] %v176
  %241 = vst [vmem:[%s3 + $0xa8] sm:$0xff] %v177
  %242 = vst [vmem:[%s3 + $0xb0] sm:$0xff] %v178
  %243 = vst [vmem:[%s3 + $0xb8] sm:$0xff] %v179
  %244 = vst [vmem:[%s3 + $0xc0] sm:$0xff] %v180
  %245 = vst [vmem:[%s3 + $0xc8] sm:$0xff] %v181
  %246 = vst [vmem:[%s3 + $0xd0] sm:$0xff] %v182
  %247 = vst [vmem:[%s3 + $0xd8] sm:$0xff] %v183
  %248 = vst [vmem:[%s3 + $0xe0] sm:$0xff] %v184
  %249 = vst [vmem:[%s3 + $0xe8] sm:$0xff] %v185
  %250 = vst [vmem:[%s3 + $0xf0] sm:$0xff] %v186
  %251 = vst [vmem:[%s3 + $0xf8] sm:$0xff] %v187
  %252 = vst [vmem:[%s3 + $0x100] sm:$0xff] %v188
  %253 = vst [vmem:[%s3 + $0x108] sm:$0xff] %v189
  %254 = vst [vmem:[%s3 + $0x110] sm:$0xff] %v190
  %255 = vst [vmem:[%s3 + $0x118] sm:$0xff] %v191
  %256 = vst [vmem:[%s3 + $0x120] sm:$0xff] %v192
  %257 = vst [vmem:[%s3 + $0x128] sm:$0xff] %v193
  %258 = vst [vmem:[%s3 + $0x130] sm:$0xff] %v194
  %259 = vst [vmem:[%s3 + $0x138] sm:$0xff] %v195
  %260 = vst [vmem:[%s3 + $0x140] sm:$0xff] %v196
  %261 = vst [vmem:[%s3 + $0x148] sm:$0xff] %v197
  %262 = vst [vmem:[%s3 + $0x150] sm:$0xff] %v198
  %263 = vst [vmem:[%s3 + $0x158] sm:$0xff] %v199
  %264 = vst [vmem:[%s3 + $0x160] sm:$0xff] %v200
  %265 = vst [vmem:[%s3 + $0x168] sm:$0xff] %v201
  %266 = vst [vmem:[%s3 + $0x170] sm:$0xff] %v202
  %267 = vst [vmem:[%s3 + $0x178] sm:$0xff] %v203
  %268 = vst [vmem:[%s3 + $0x180] sm:$0xff] %v204
  %269 = vst [vmem:[%s3 + $0x188] sm:$0xff] %v205
  %270 = vst [vmem:[%s3 + $0x190] sm:$0xff] %v206
  %271 = vst [vmem:[%s3 + $0x198] sm:$0xff] %v207
  %272 = vst [vmem:[%s3 + $0x1a0] sm:$0xff] %v208
  %273 = vst [vmem:[%s3 + $0x1a8] sm:$0xff] %v209
  %274 = vst [vmem:[%s3 + $0x1b0] sm:$0xff] %v210
  %275 = vst [vmem:[%s3 + $0x1b8] sm:$0xff] %v211
  %276 = vst [vmem:[%s3 + $0x1c0] sm:$0xff] %v212
  %277 = vst [vmem:[%s3 + $0x1c8] sm:$0xff] %v213
  %278 = vst [vmem:[%s3 + $0x1d0] sm:$0xff] %v214
  %279 = vst [vmem:[%s3 + $0x1d8] sm:$0xff] %v215
  %280 = vst [vmem:[%s3 + $0x1e0] sm:$0xff] %v216
  %281 = vst [vmem:[%s3 + $0x1e8] sm:$0xff] %v217
  %282 = vst [vmem:[%s3 + $0x1f0] sm:$0xff] %v218
  %283 = vst [vmem:[%s3 + $0x1f8] sm:$0xff] %v219
  // Predicated region
  $region14: #{_lambda_.37} parent=0 // pred_check
    _
  $region15: #{_lambda_.37} parent=0 // pred_check_branch
    %285 = sbr.rel (0) target = $region17
  $region16: #{_lambda_.37} parent=0 // pred_region
    _
  $region17: #{_lambda_.37} parent=0 // pred_fallthru
    _
  // Predicated region
  $region18: #{_lambda_.37} parent=0 // pred_check
    _
  $region19: #{_lambda_.37} parent=0 // pred_check_branch
    %287 = sbr.rel (0) target = $region21
  $region20: #{_lambda_.37} parent=0 // pred_region
    _
  $region21: #{_lambda_.37} parent=0 // pred_fallthru
    _

// kernel: _lambda_.40
$region0: #{_lambda_.40}
  #allocation0 [shape = 'u32[]', space=smem, size = 0x4, offset = 0x4, fixed_abs, tag = 'smem constant byte address 0x4 - core index']
  #allocation1 [shape = 'u32[144,128]{1,0:T(1,128)}', space=vmem, size = 0x12000, scoped, tag = 'internal scratch']
  #allocation2 [shape = 'f32[512,128]{1,0:T(8,128)}', space=vmem, size = 0x40000, scoped, tag = 'scratch operand']
  %s0 = inlined_call_operand.vmem [shape: bf16[512,128], index: 0, kind: input, shape index: {}]
  %s1 = inlined_call_operand.vmem [shape: bf16[128,128], index: 1, kind: input, shape index: {}]
  %s2 = inlined_call_operand.vmem [shape: f32[1,128], index: 2, kind: input, shape index: {}]
  %s3 = inlined_call_operand.vmem [shape: f32[512,128], index: 3, kind: output, shape index: {}]
  %s4 = sld [smem:[#allocation0]]
  $region30: #{_lambda_.40} parent=0
    _
  %s6 = ssub.s32 1, %s4
  %s7 = scalar_select 0, %s6, %s4
  // Predicated region
  $region2: #{_lambda_.40} parent=0 // pred_check
    _
  $region3: #{_lambda_.40} parent=0 // pred_check_branch
    %9 = sbr.rel (0) target = $region5
  $region4: #{_lambda_.40} parent=0 // pred_region
    _
  $region5: #{_lambda_.40} parent=0 // pred_fallthru
    _
  // Predicated region
  $region6: #{_lambda_.40} parent=0 // pred_check
    _
  $region7: #{_lambda_.40} parent=0 // pred_check_branch
    %11 = sbr.rel (0) target = $region9
  $region8: #{_lambda_.40} parent=0 // pred_region
    _
  $region9: #{_lambda_.40} parent=0 // pred_fallthru
    _
  // Predicated region
  $region10: #{_lambda_.40} parent=0 // pred_check
    _
  $region11: #{_lambda_.40} parent=0 // pred_check_branch
    %13 = sbr.rel (0) target = $region13
  $region12: #{_lambda_.40} parent=0 // pred_region
    _
  $region13: #{_lambda_.40} parent=0 // pred_fallthru
    _
  %p15 = scmp.eq.s32.totalorder 0, 0
  // Predicated region
  $region14: #{_lambda_.40} parent=0 // pred_check
    %p16 = pneg %p15
  $region15: #{_lambda_.40} parent=0 // pred_check_branch
    %18 = sbr.rel (%p16) target = $region17
  $region16: #{_lambda_.40} parent=0 // pred_region
    %19 = vst [vmem:[#allocation2] sm:$0xff] 0.0
    %20 = vst [vmem:[#allocation2 + $0x8] sm:$0xff] 0.0
    %21 = vst [vmem:[#allocation2 + $0x10] sm:$0xff] 0.0
    %22 = vst [vmem:[#allocation2 + $0x18] sm:$0xff] 0.0
    %23 = vst [vmem:[#allocation2 + $0x20] sm:$0xff] 0.0
    %24 = vst [vmem:[#allocation2 + $0x28] sm:$0xff] 0.0
    %25 = vst [vmem:[#allocation2 + $0x30] sm:$0xff] 0.0
    %26 = vst [vmem:[#allocation2 + $0x38] sm:$0xff] 0.0
    %27 = vst [vmem:[#allocation2 + $0x40] sm:$0xff] 0.0
    %28 = vst [vmem:[#allocation2 + $0x48] sm:$0xff] 0.0
    %29 = vst [vmem:[#allocation2 + $0x50] sm:$0xff] 0.0
    %30 = vst [vmem:[#allocation2 + $0x58] sm:$0xff] 0.0
    %31 = vst [vmem:[#allocation2 + $0x60] sm:$0xff] 0.0
    %32 = vst [vmem:[#allocation2 + $0x68] sm:$0xff] 0.0
    %33 = vst [vmem:[#allocation2 + $0x70] sm:$0xff] 0.0
    %34 = vst [vmem:[#allocation2 + $0x78] sm:$0xff] 0.0
    %35 = vst [vmem:[#allocation2 + $0x80] sm:$0xff] 0.0
    %36 = vst [vmem:[#allocation2 + $0x88] sm:$0xff] 0.0
    %37 = vst [vmem:[#allocation2 + $0x90] sm:$0xff] 0.0
    %38 = vst [vmem:[#allocation2 + $0x98] sm:$0xff] 0.0
    %39 = vst [vmem:[#allocation2 + $0xa0] sm:$0xff] 0.0
    %40 = vst [vmem:[#allocation2 + $0xa8] sm:$0xff] 0.0
    %41 = vst [vmem:[#allocation2 + $0xb0] sm:$0xff] 0.0
    %42 = vst [vmem:[#allocation2 + $0xb8] sm:$0xff] 0.0
    %43 = vst [vmem:[#allocation2 + $0xc0] sm:$0xff] 0.0
    %44 = vst [vmem:[#allocation2 + $0xc8] sm:$0xff] 0.0
    %45 = vst [vmem:[#allocation2 + $0xd0] sm:$0xff] 0.0
    %46 = vst [vmem:[#allocation2 + $0xd8] sm:$0xff] 0.0
    %47 = vst [vmem:[#allocation2 + $0xe0] sm:$0xff] 0.0
    %48 = vst [vmem:[#allocation2 + $0xe8] sm:$0xff] 0.0
    %49 = vst [vmem:[#allocation2 + $0xf0] sm:$0xff] 0.0
    %50 = vst [vmem:[#allocation2 + $0xf8] sm:$0xff] 0.0
    %51 = vst [vmem:[#allocation2 + $0x100] sm:$0xff] 0.0
    %52 = vst [vmem:[#allocation2 + $0x108] sm:$0xff] 0.0
    %53 = vst [vmem:[#allocation2 + $0x110] sm:$0xff] 0.0
    %54 = vst [vmem:[#allocation2 + $0x118] sm:$0xff] 0.0
    %55 = vst [vmem:[#allocation2 + $0x120] sm:$0xff] 0.0
    %56 = vst [vmem:[#allocation2 + $0x128] sm:$0xff] 0.0
    %57 = vst [vmem:[#allocation2 + $0x130] sm:$0xff] 0.0
    %58 = vst [vmem:[#allocation2 + $0x138] sm:$0xff] 0.0
    %59 = vst [vmem:[#allocation2 + $0x140] sm:$0xff] 0.0
    %60 = vst [vmem:[#allocation2 + $0x148] sm:$0xff] 0.0
    %61 = vst [vmem:[#allocation2 + $0x150] sm:$0xff] 0.0
    %62 = vst [vmem:[#allocation2 + $0x158] sm:$0xff] 0.0
    %63 = vst [vmem:[#allocation2 + $0x160] sm:$0xff] 0.0
    %64 = vst [vmem:[#allocation2 + $0x168] sm:$0xff] 0.0
    %65 = vst [vmem:[#allocation2 + $0x170] sm:$0xff] 0.0
    %66 = vst [vmem:[#allocation2 + $0x178] sm:$0xff] 0.0
    %67 = vst [vmem:[#allocation2 + $0x180] sm:$0xff] 0.0
    %68 = vst [vmem:[#allocation2 + $0x188] sm:$0xff] 0.0
    %69 = vst [vmem:[#allocation2 + $0x190] sm:$0xff] 0.0
    %70 = vst [vmem:[#allocation2 + $0x198] sm:$0xff] 0.0
    %71 = vst [vmem:[#allocation2 + $0x1a0] sm:$0xff] 0.0
    %72 = vst [vmem:[#allocation2 + $0x1a8] sm:$0xff] 0.0
    %73 = vst [vmem:[#allocation2 + $0x1b0] sm:$0xff] 0.0
    %74 = vst [vmem:[#allocation2 + $0x1b8] sm:$0xff] 0.0
    %75 = vst [vmem:[#allocation2 + $0x1c0] sm:$0xff] 0.0
    %76 = vst [vmem:[#allocation2 + $0x1c8] sm:$0xff] 0.0
    %77 = vst [vmem:[#allocation2 + $0x1d0] sm:$0xff] 0.0
    %78 = vst [vmem:[#allocation2 + $0x1d8] sm:$0xff] 0.0
    %79 = vst [vmem:[#allocation2 + $0x1e0] sm:$0xff] 0.0
    %80 = vst [vmem:[#allocation2 + $0x1e8] sm:$0xff] 0.0
    %81 = vst [vmem:[#allocation2 + $0x1f0] sm:$0xff] 0.0
    %82 = vst [vmem:[#allocation2 + $0x1f8] sm:$0xff] 0.0
  $region17: #{_lambda_.40} parent=0 // pred_fallthru
    _
  %v83 = vld [vmem:[%s0] sm:$0xf]
  %v84 = vld [vmem:[%s0 + $0x4] sm:$0xf]
  %v85 = vld [vmem:[%s0 + $0x8] sm:$0xf]
  %v86 = vld [vmem:[%s0 + $0xc] sm:$0xf]
  %v87 = vld [vmem:[%s0 + $0x10] sm:$0xf]
  %v88 = vld [vmem:[%s0 + $0x14] sm:$0xf]
  %v89 = vld [vmem:[%s0 + $0x18] sm:$0xf]
  %v90 = vld [vmem:[%s0 + $0x1c] sm:$0xf]
  %v91 = vld [vmem:[%s0 + $0x20] sm:$0xf]
  %v92 = vld [vmem:[%s0 + $0x24] sm:$0xf]
  %v93 = vld [vmem:[%s0 + $0x28] sm:$0xf]
  %v94 = vld [vmem:[%s0 + $0x2c] sm:$0xf]
  %v95 = vld [vmem:[%s0 + $0x30] sm:$0xf]
  %v96 = vld [vmem:[%s0 + $0x34] sm:$0xf]
  %v97 = vld [vmem:[%s0 + $0x38] sm:$0xf]
  %v98 = vld [vmem:[%s0 + $0x3c] sm:$0xf]
  %v99 = vld [vmem:[%s0 + $0x40] sm:$0xf]
  %v100 = vld [vmem:[%s0 + $0x44] sm:$0xf]
  %v101 = vld [vmem:[%s0 + $0x48] sm:$0xf]
  %v102 = vld [vmem:[%s0 + $0x4c] sm:$0xf]
  %v103 = vld [vmem:[%s0 + $0x50] sm:$0xf]
  %v104 = vld [vmem:[%s0 + $0x54] sm:$0xf]
  %v105 = vld [vmem:[%s0 + $0x58] sm:$0xf]
  %v106 = vld [vmem:[%s0 + $0x5c] sm:$0xf]
  %v107 = vld [vmem:[%s0 + $0x60] sm:$0xf]
  %v108 = vld [vmem:[%s0 + $0x64] sm:$0xf]
  %v109 = vld [vmem:[%s0 + $0x68] sm:$0xf]
  %v110 = vld [vmem:[%s0 + $0x6c] sm:$0xf]
  %v111 = vld [vmem:[%s0 + $0x70] sm:$0xf]
  %v112 = vld [vmem:[%s0 + $0x74] sm:$0xf]
  %v113 = vld [vmem:[%s0 + $0x78] sm:$0xf]
  %v114 = vld [vmem:[%s0 + $0x7c] sm:$0xf]
  %v115 = vld [vmem:[%s0 + $0x80] sm:$0xf]
  %v116 = vld [vmem:[%s0 + $0x84] sm:$0xf]
  %v117 = vld [vmem:[%s0 + $0x88] sm:$0xf]
  %v118 = vld [vmem:[%s0 + $0x8c] sm:$0xf]
  %v119 = vld [vmem:[%s0 + $0x90] sm:$0xf]
  %v120 = vld [vmem:[%s0 + $0x94] sm:$0xf]
  %v121 = vld [vmem:[%s0 + $0x98] sm:$0xf]
  %v122 = vld [vmem:[%s0 + $0x9c] sm:$0xf]
  %v123 = vld [vmem:[%s0 + $0xa0] sm:$0xf]
  %v124 = vld [vmem:[%s0 + $0xa4] sm:$0xf]
  %v125 = vld [vmem:[%s0 + $0xa8] sm:$0xf]
  %v126 = vld [vmem:[%s0 + $0xac] sm:$0xf]
  %v127 = vld [vmem:[%s0 + $0xb0] sm:$0xf]
  %v128 = vld [vmem:[%s0 + $0xb4] sm:$0xf]
  %v129 = vld [vmem:[%s0 + $0xb8] sm:$0xf]
  %v130 = vld [vmem:[%s0 + $0xbc] sm:$0xf]
  %v131 = vld [vmem:[%s0 + $0xc0] sm:$0xf]
  %v132 = vld [vmem:[%s0 + $0xc4] sm:$0xf]
  %v133 = vld [vmem:[%s0 + $0xc8] sm:$0xf]
  %v134 = vld [vmem:[%s0 + $0xcc] sm:$0xf]
  %v135 = vld [vmem:[%s0 + $0xd0] sm:$0xf]
  %v136 = vld [vmem:[%s0 + $0xd4] sm:$0xf]
  %v137 = vld [vmem:[%s0 + $0xd8] sm:$0xf]
  %v138 = vld [vmem:[%s0 + $0xdc] sm:$0xf]
  %v139 = vld [vmem:[%s0 + $0xe0] sm:$0xf]
  %v140 = vld [vmem:[%s0 + $0xe4] sm:$0xf]
  %v141 = vld [vmem:[%s0 + $0xe8] sm:$0xf]
  %v142 = vld [vmem:[%s0 + $0xec] sm:$0xf]
  %v143 = vld [vmem:[%s0 + $0xf0] sm:$0xf]
  %v144 = vld [vmem:[%s0 + $0xf4] sm:$0xf]
  %v145 = vld [vmem:[%s0 + $0xf8] sm:$0xf]
  %v146 = vld [vmem:[%s0 + $0xfc] sm:$0xf]
  %v147 = vmax.bf16 %v83, 0
  %v148 = vmax.bf16 %v84, 0
  %v149 = vmax.bf16 %v85, 0
  %v150 = vmax.bf16 %v86, 0
  %v151 = vmax.bf16 %v87, 0
  %v152 = vmax.bf16 %v88, 0
  %v153 = vmax.bf16 %v89, 0
  %v154 = vmax.bf16 %v90, 0
  %v155 = vmax.bf16 %v91, 0
  %v156 = vmax.bf16 %v92, 0
  %v157 = vmax.bf16 %v93, 0
  %v158 = vmax.bf16 %v94, 0
  %v159 = vmax.bf16 %v95, 0
  %v160 = vmax.bf16 %v96, 0
  %v161 = vmax.bf16 %v97, 0
  %v162 = vmax.bf16 %v98, 0
  %v163 = vmax.bf16 %v99, 0
  %v164 = vmax.bf16 %v100, 0
  %v165 = vmax.bf16 %v101, 0
  %v166 = vmax.bf16 %v102, 0
  %v167 = vmax.bf16 %v103, 0
  %v168 = vmax.bf16 %v104, 0
  %v169 = vmax.bf16 %v105, 0
  %v170 = vmax.bf16 %v106, 0
  %v171 = vmax.bf16 %v107, 0
  %v172 = vmax.bf16 %v108, 0
  %v173 = vmax.bf16 %v109, 0
  %v174 = vmax.bf16 %v110, 0
  %v175 = vmax.bf16 %v111, 0
  %v176 = vmax.bf16 %v112, 0
  %v177 = vmax.bf16 %v113, 0
  %v178 = vmax.bf16 %v114, 0
  %v179 = vmax.bf16 %v115, 0
  %v180 = vmax.bf16 %v116, 0
  %v181 = vmax.bf16 %v117, 0
  %v182 = vmax.bf16 %v118, 0
  %v183 = vmax.bf16 %v119, 0
  %v184 = vmax.bf16 %v120, 0
  %v185 = vmax.bf16 %v121, 0
  %v186 = vmax.bf16 %v122, 0
  %v187 = vmax.bf16 %v123, 0
  %v188 = vmax.bf16 %v124, 0
  %v189 = vmax.bf16 %v125, 0
  %v190 = vmax.bf16 %v126, 0
  %v191 = vmax.bf16 %v127, 0
  %v192 = vmax.bf16 %v128, 0
  %v193 = vmax.bf16 %v129, 0
  %v194 = vmax.bf16 %v130, 0
  %v195 = vmax.bf16 %v131, 0
  %v196 = vmax.bf16 %v132, 0
  %v197 = vmax.bf16 %v133, 0
  %v198 = vmax.bf16 %v134, 0
  %v199 = vmax.bf16 %v135, 0
  %v200 = vmax.bf16 %v136, 0
  %v201 = vmax.bf16 %v137, 0
  %v202 = vmax.bf16 %v138, 0
  %v203 = vmax.bf16 %v139, 0
  %v204 = vmax.bf16 %v140, 0
  %v205 = vmax.bf16 %v141, 0
  %v206 = vmax.bf16 %v142, 0
  %v207 = vmax.bf16 %v143, 0
  %v208 = vmax.bf16 %v144, 0
  %v209 = vmax.bf16 %v145, 0
  %v210 = vmax.bf16 %v146, 0
  %v211 = vld [vmem:[#allocation2] sm:$0xff]
  %v212 = vld [vmem:[#allocation2 + $0x8] sm:$0xff]
  %v213 = vld [vmem:[#allocation2 + $0x10] sm:$0xff]
  %v214 = vld [vmem:[#allocation2 + $0x18] sm:$0xff]
  %v215 = vld [vmem:[#allocation2 + $0x20] sm:$0xff]
  %v216 = vld [vmem:[#allocation2 + $0x28] sm:$0xff]
  %v217 = vld [vmem:[#allocation2 + $0x30] sm:$0xff]
  %v218 = vld [vmem:[#allocation2 + $0x38] sm:$0xff]
  %v219 = vld [vmem:[#allocation2 + $0x40] sm:$0xff]
  %v220 = vld [vmem:[#allocation2 + $0x48] sm:$0xff]
  %v221 = vld [vmem:[#allocation2 + $0x50] sm:$0xff]
  %v222 = vld [vmem:[#allocation2 + $0x58] sm:$0xff]
  %v223 = vld [vmem:[#allocation2 + $0x60] sm:$0xff]
  %v224 = vld [vmem:[#allocation2 + $0x68] sm:$0xff]
  %v225 = vld [vmem:[#allocation2 + $0x70] sm:$0xff]
  %v226 = vld [vmem:[#allocation2 + $0x78] sm:$0xff]
  %v227 = vld [vmem:[#allocation2 + $0x80] sm:$0xff]
  %v228 = vld [vmem:[#allocation2 + $0x88] sm:$0xff]
  %v229 = vld [vmem:[#allocation2 + $0x90] sm:$0xff]
  %v230 = vld [vmem:[#allocation2 + $0x98] sm:$0xff]
  %v231 = vld [vmem:[#allocation2 + $0xa0] sm:$0xff]
  %v232 = vld [vmem:[#allocation2 + $0xa8] sm:$0xff]
  %v233 = vld [vmem:[#allocation2 + $0xb0] sm:$0xff]
  %v234 = vld [vmem:[#allocation2 + $0xb8] sm:$0xff]
  %v235 = vld [vmem:[#allocation2 + $0xc0] sm:$0xff]
  %v236 = vld [vmem:[#allocation2 + $0xc8] sm:$0xff]
  %v237 = vld [vmem:[#allocation2 + $0xd0] sm:$0xff]
  %v238 = vld [vmem:[#allocation2 + $0xd8] sm:$0xff]
  %v239 = vld [vmem:[#allocation2 + $0xe0] sm:$0xff]
  %v240 = vld [vmem:[#allocation2 + $0xe8] sm:$0xff]
  %v241 = vld [vmem:[#allocation2 + $0xf0] sm:$0xff]
  %v242 = vld [vmem:[#allocation2 + $0xf8] sm:$0xff]
  %v243 = vld [vmem:[#allocation2 + $0x100] sm:$0xff]
  %v244 = vld [vmem:[#allocation2 + $0x108] sm:$0xff]
  %v245 = vld [vmem:[#allocation2 + $0x110] sm:$0xff]
  %v246 = vld [vmem:[#allocation2 + $0x118] sm:$0xff]
  %v247 = vld [vmem:[#allocation2 + $0x120] sm:$0xff]
  %v248 = vld [vmem:[#allocation2 + $0x128] sm:$0xff]
  %v249 = vld [vmem:[#allocation2 + $0x130] sm:$0xff]
  %v250 = vld [vmem:[#allocation2 + $0x138] sm:$0xff]
  %v251 = vld [vmem:[#allocation2 + $0x140] sm:$0xff]
  %v252 = vld [vmem:[#allocation2 + $0x148] sm:$0xff]
  %v253 = vld [vmem:[#allocation2 + $0x150] sm:$0xff]
  %v254 = vld [vmem:[#allocation2 + $0x158] sm:$0xff]
  %v255 = vld [vmem:[#allocation2 + $0x160] sm:$0xff]
  %v256 = vld [vmem:[#allocation2 + $0x168] sm:$0xff]
  %v257 = vld [vmem:[#allocation2 + $0x170] sm:$0xff]
  %v258 = vld [vmem:[#allocation2 + $0x178] sm:$0xff]
  %v259 = vld [vmem:[#allocation2 + $0x180] sm:$0xff]
  %v260 = vld [vmem:[#allocation2 + $0x188] sm:$0xff]
  %v261 = vld [vmem:[#allocation2 + $0x190] sm:$0xff]
  %v262 = vld [vmem:[#allocation2 + $0x198] sm:$0xff]
  %v263 = vld [vmem:[#allocation2 + $0x1a0] sm:$0xff]
  %v264 = vld [vmem:[#allocation2 + $0x1a8] sm:$0xff]
  %v265 = vld [vmem:[#allocation2 + $0x1b0] sm:$0xff]
  %v266 = vld [vmem:[#allocation2 + $0x1b8] sm:$0xff]
  %v267 = vld [vmem:[#allocation2 + $0x1c0] sm:$0xff]
  %v268 = vld [vmem:[#allocation2 + $0x1c8] sm:$0xff]
  %v269 = vld [vmem:[#allocation2 + $0x1d0] sm:$0xff]
  %v270 = vld [vmem:[#allocation2 + $0x1d8] sm:$0xff]
  %v271 = vld [vmem:[#allocation2 + $0x1e0] sm:$0xff]
  %v272 = vld [vmem:[#allocation2 + $0x1e8] sm:$0xff]
  %v273 = vld [vmem:[#allocation2 + $0x1f0] sm:$0xff]
  %v274 = vld [vmem:[#allocation2 + $0x1f8] sm:$0xff]
  %v275 = vld [vmem:[%s1] sm:$0xf]
  %v276 = vld [vmem:[%s1 + $0x4] sm:$0xf]
  %v277 = vld [vmem:[%s1 + $0x8] sm:$0xf]
  %v278 = vld [vmem:[%s1 + $0xc] sm:$0xf]
  %v279 = vld [vmem:[%s1 + $0x10] sm:$0xf]
  %v280 = vld [vmem:[%s1 + $0x14] sm:$0xf]
  %v281 = vld [vmem:[%s1 + $0x18] sm:$0xf]
  %v282 = vld [vmem:[%s1 + $0x1c] sm:$0xf]
  %v283 = vld [vmem:[%s1 + $0x20] sm:$0xf]
  %v284 = vld [vmem:[%s1 + $0x24] sm:$0xf]
  %v285 = vld [vmem:[%s1 + $0x28] sm:$0xf]
  %v286 = vld [vmem:[%s1 + $0x2c] sm:$0xf]
  %v287 = vld [vmem:[%s1 + $0x30] sm:$0xf]
  %v288 = vld [vmem:[%s1 + $0x34] sm:$0xf]
  %v289 = vld [vmem:[%s1 + $0x38] sm:$0xf]
  %v290 = vld [vmem:[%s1 + $0x3c] sm:$0xf]
  %v355 = vunpack.c.l.b16 %v147
  %v356 = vunpack.c.l.b16 %v148
  %v357 = vunpack.c.l.b16 %v149
  %v358 = vunpack.c.l.b16 %v150
  %v359 = vunpack.c.l.b16 %v151
  %v360 = vunpack.c.l.b16 %v152
  %v361 = vunpack.c.l.b16 %v153
  %v362 = vunpack.c.l.b16 %v154
  %v363 = vunpack.c.l.b16 %v155
  %v364 = vunpack.c.l.b16 %v156
  %v365 = vunpack.c.l.b16 %v157
  %v366 = vunpack.c.l.b16 %v158
  %v367 = vunpack.c.l.b16 %v159
  %v368 = vunpack.c.l.b16 %v160
  %v369 = vunpack.c.l.b16 %v161
  %v370 = vunpack.c.l.b16 %v162
  %v371 = vunpack.c.l.b16 %v163
  %v372 = vunpack.c.l.b16 %v164
  %v373 = vunpack.c.l.b16 %v165
  %v374 = vunpack.c.l.b16 %v166
  %v375 = vunpack.c.l.b16 %v167
  %v376 = vunpack.c.l.b16 %v168
  %v377 = vunpack.c.l.b16 %v169
  %v378 = vunpack.c.l.b16 %v170
  %v379 = vunpack.c.l.b16 %v171
  %v380 = vunpack.c.l.b16 %v172
  %v381 = vunpack.c.l.b16 %v173
  %v382 = vunpack.c.l.b16 %v174
  %v383 = vunpack.c.l.b16 %v175
  %v384 = vunpack.c.l.b16 %v176
  %v385 = vunpack.c.l.b16 %v177
  %v386 = vunpack.c.l.b16 %v178
  %v387 = vunpack.c.l.b16 %v179
  %v388 = vunpack.c.l.b16 %v180
  %v389 = vunpack.c.l.b16 %v181
  %v390 = vunpack.c.l.b16 %v182
  %v391 = vunpack.c.l.b16 %v183
  %v392 = vunpack.c.l.b16 %v184
  %v393 = vunpack.c.l.b16 %v185
  %v394 = vunpack.c.l.b16 %v186
  %v395 = vunpack.c.l.b16 %v187
  %v396 = vunpack.c.l.b16 %v188
  %v397 = vunpack.c.l.b16 %v189
  %v398 = vunpack.c.l.b16 %v190
  %v399 = vunpack.c.l.b16 %v191
  %v400 = vunpack.c.l.b16 %v192
  %v401 = vunpack.c.l.b16 %v193
  %v402 = vunpack.c.l.b16 %v194
  %v403 = vunpack.c.l.b16 %v195
  %v404 = vunpack.c.l.b16 %v196
  %v405 = vunpack.c.l.b16 %v197
  %v406 = vunpack.c.l.b16 %v198
  %v407 = vunpack.c.l.b16 %v199
  %v408 = vunpack.c.l.b16 %v200
  %v409 = vunpack.c.l.b16 %v201
  %v410 = vunpack.c.l.b16 %v202
  %v411 = vunpack.c.l.b16 %v203
  %v412 = vunpack.c.l.b16 %v204
  %v413 = vunpack.c.l.b16 %v205
  %v414 = vunpack.c.l.b16 %v206
  %v415 = vunpack.c.l.b16 %v207
  %v416 = vunpack.c.l.b16 %v208
  %v417 = vunpack.c.l.b16 %v209
  %v418 = vunpack.c.l.b16 %v210
  %v419 = vpack.c.b16 %v356, %v355
  %v420 = vpack.c.b16 %v358, %v357
  %v421 = vpack.c.b16 %v360, %v359
  %v422 = vpack.c.b16 %v362, %v361
  %v423 = vpack.c.b16 %v364, %v363
  %v424 = vpack.c.b16 %v366, %v365
  %v425 = vpack.c.b16 %v368, %v367
  %v426 = vpack.c.b16 %v370, %v369
  %v427 = vpack.c.b16 %v372, %v371
  %v428 = vpack.c.b16 %v374, %v373
  %v429 = vpack.c.b16 %v376, %v375
  %v430 = vpack.c.b16 %v378, %v377
  %v431 = vpack.c.b16 %v380, %v379
  %v432 = vpack.c.b16 %v382, %v381
  %v433 = vpack.c.b16 %v384, %v383
  %v434 = vpack.c.b16 %v386, %v385
  %v435 = vpack.c.b16 %v388, %v387
  %v436 = vpack.c.b16 %v390, %v389
  %v437 = vpack.c.b16 %v392, %v391
  %v438 = vpack.c.b16 %v394, %v393
  %v439 = vpack.c.b16 %v396, %v395
  %v440 = vpack.c.b16 %v398, %v397
  %v441 = vpack.c.b16 %v400, %v399
  %v442 = vpack.c.b16 %v402, %v401
  %v443 = vpack.c.b16 %v404, %v403
  %v444 = vpack.c.b16 %v406, %v405
  %v445 = vpack.c.b16 %v408, %v407
  %v446 = vpack.c.b16 %v410, %v409
  %v447 = vpack.c.b16 %v412, %v411
  %v448 = vpack.c.b16 %v414, %v413
  %v449 = vpack.c.b16 %v416, %v415
  %v450 = vpack.c.b16 %v418, %v417
  %v499 = vunpack.c.l.b16 %v275
  %v500 = vunpack.c.l.b16 %v276
  %v501 = vunpack.c.l.b16 %v277
  %v502 = vunpack.c.l.b16 %v278
  %v503 = vunpack.c.l.b16 %v279
  %v504 = vunpack.c.l.b16 %v280
  %v505 = vunpack.c.l.b16 %v281
  %v506 = vunpack.c.l.b16 %v282
  %v507 = vunpack.c.l.b16 %v283
  %v508 = vunpack.c.l.b16 %v284
  %v509 = vunpack.c.l.b16 %v285
  %v510 = vunpack.c.l.b16 %v286
  %v511 = vunpack.c.l.b16 %v287
  %v512 = vunpack.c.l.b16 %v288
  %v513 = vunpack.c.l.b16 %v289
  %v514 = vunpack.c.l.b16 %v290
  %v515 = vpack.c.b16 %v500, %v499
  %v516 = vpack.c.b16 %v502, %v501
  %v517 = vpack.c.b16 %v504, %v503
  %v518 = vpack.c.b16 %v506, %v505
  %v519 = vpack.c.b16 %v508, %v507
  %v520 = vpack.c.b16 %v510, %v509
  %v521 = vpack.c.b16 %v512, %v511
  %v522 = vpack.c.b16 %v514, %v513
  %531 = vmatprep.subr.bf16.mxu0 0
  %532 = vmatpush1.bf16.msra.mxu0 %v515
  %533 = vmatprep.subr.bf16.mxu0 0
  %534 = vmatpush1.bf16.msra.mxu0 %v516
  %535 = vmatprep.subr.bf16.mxu0 0
  %536 = vmatpush1.bf16.msra.mxu0 %v517
  %537 = vmatprep.subr.bf16.mxu0 0
  %538 = vmatpush1.bf16.msra.mxu0 %v518
  %539 = vmatprep.subr.bf16.mxu0 0
  %540 = vmatpush1.bf16.msra.mxu0 %v519
  %541 = vmatprep.subr.bf16.mxu0 0
  %542 = vmatpush1.bf16.msra.mxu0 %v520
  %543 = vmatprep.subr.bf16.mxu0 0
  %544 = vmatpush1.bf16.msra.mxu0 %v521
  %545 = vmatprep.subr.bf16.mxu0 0
  %546 = vmatpush1.bf16.msra.mxu0 %v522
  %547 = vmatprep.subr.bf16.mxu0 0
  %548 = vmatpush1.bf16.msra.mxu0 0
  %549 = vmatprep.subr.bf16.mxu0 0
  %550 = vmatpush1.bf16.msra.mxu0 0
  %551 = vmatprep.subr.bf16.mxu0 0
  %552 = vmatpush1.bf16.msra.mxu0 0
  %553 = vmatprep.subr.bf16.mxu0 0
  %554 = vmatpush1.bf16.msra.mxu0 0
  %555 = vmatprep.subr.bf16.mxu0 0
  %556 = vmatpush1.bf16.msra.mxu0 0
  %557 = vmatprep.subr.bf16.mxu0 0
  %558 = vmatpush1.bf16.msra.mxu0 0
  %559 = vmatprep.subr.bf16.mxu0 0
  %560 = vmatpush1.bf16.msra.mxu0 0
  %561 = vmatprep.subr.bf16.mxu0 0
  %562 = vmatpush1.bf16.msra.mxu0 0
  %563 = vmatprep.mubr.bf16.mxu0 0
  %564 = vmatmul.mubr.bf16.gmra.mrb[0].mxu0 %v419
  %v565 = vpop.f32.mrb[0].mxu0
  %v566 = vadd.f32 0.0, %v565
  %v567 = vpop.f32.mrb[0].mxu0
  %v568 = vpop.f32.mrb[0].mxu0
  %v569 = vadd.f32 0.0, %v568
  %v570 = vpop.f32.mrb[0].mxu0
  %571 = vmatprep.mubr.bf16.mxu0 0
  %572 = vmatmul.mubr.bf16.gmra.mrb[0].mxu0 %v420
  %v573 = vpop.f32.mrb[0].mxu0
  %v574 = vadd.f32 0.0, %v573
  %v575 = vpop.f32.mrb[0].mxu0
  %v576 = vpop.f32.mrb[0].mxu0
  %v577 = vadd.f32 0.0, %v576
  %v578 = vpop.f32.mrb[0].mxu0
  %579 = vmatprep.mubr.bf16.mxu0 0
  %580 = vmatmul.mubr.bf16.gmra.mrb[0].mxu0 %v421
  %v581 = vpop.f32.mrb[0].mxu0
  %v582 = vadd.f32 0.0, %v581
  %v583 = vpop.f32.mrb[0].mxu0
  %v584 = vpop.f32.mrb[0].mxu0
  %v585 = vadd.f32 0.0, %v584
  %v586 = vpop.f32.mrb[0].mxu0
  %587 = vmatprep.mubr.bf16.mxu0 0
  %588 = vmatmul.mubr.bf16.gmra.mrb[0].mxu0 %v422
  %v589 = vpop.f32.mrb[0].mxu0
  %v590 = vadd.f32 0.0, %v589
  %v591 = vpop.f32.mrb[0].mxu0
  %v592 = vpop.f32.mrb[0].mxu0
  %v593 = vadd.f32 0.0, %v592
  %v594 = vpop.f32.mrb[0].mxu0
  %595 = vmatprep.mubr.bf16.mxu0 0
  %596 = vmatmul.mubr.bf16.gmra.mrb[0].mxu0 %v423
  %v597 = vpop.f32.mrb[0].mxu0
  %v598 = vadd.f32 0.0, %v597
  %v599 = vpop.f32.mrb[0].mxu0
  %v600 = vpop.f32.mrb[0].mxu0
  %v601 = vadd.f32 0.0, %v600
  %v602 = vpop.f32.mrb[0].mxu0
  %603 = vmatprep.mubr.bf16.mxu0 0
  %604 = vmatmul.mubr.bf16.gmra.mrb[0].mxu0 %v424
  %v605 = vpop.f32.mrb[0].mxu0
  %v606 = vadd.f32 0.0, %v605
  %v607 = vpop.f32.mrb[0].mxu0
  %v608 = vpop.f32.mrb[0].mxu0
  %v609 = vadd.f32 0.0, %v608
  %v610 = vpop.f32.mrb[0].mxu0
  %611 = vmatprep.mubr.bf16.mxu0 0
  %612 = vmatmul.mubr.bf16.gmra.mrb[0].mxu0 %v425
  %v613 = vpop.f32.mrb[0].mxu0
  %v614 = vadd.f32 0.0, %v613
  %v615 = vpop.f32.mrb[0].mxu0
  %v616 = vpop.f32.mrb[0].mxu0
  %v617 = vadd.f32 0.0, %v616
  %v618 = vpop.f32.mrb[0].mxu0
  %619 = vmatprep.mubr.bf16.mxu0 0
  %620 = vmatmul.mubr.bf16.gmra.mrb[0].mxu0 %v426
  %v621 = vpop.f32.mrb[0].mxu0
  %v622 = vadd.f32 0.0, %v621
  %v623 = vpop.f32.mrb[0].mxu0
  %v624 = vpop.f32.mrb[0].mxu0
  %v625 = vadd.f32 0.0, %v624
  %v626 = vpop.f32.mrb[0].mxu0
  %627 = vmatprep.mubr.bf16.mxu0 0
  %628 = vmatmul.mubr.bf16.gmra.mrb[0].mxu0 %v427
  %v629 = vpop.f32.mrb[0].mxu0
  %v630 = vadd.f32 0.0, %v629
  %v631 = vpop.f32.mrb[0].mxu0
  %v632 = vpop.f32.mrb[0].mxu0
  %v633 = vadd.f32 0.0, %v632
  %v634 = vpop.f32.mrb[0].mxu0
  %635 = vmatprep.mubr.bf16.mxu0 0
  %636 = vmatmul.mubr.bf16.gmra.mrb[0].mxu0 %v428
  %v637 = vpop.f32.mrb[0].mxu0
  %v638 = vadd.f32 0.0, %v637
  %v639 = vpop.f32.mrb[0].mxu0
  %v640 = vpop.f32.mrb[0].mxu0
  %v641 = vadd.f32 0.0, %v640
  %v642 = vpop.f32.mrb[0].mxu0
  %643 = vmatprep.mubr.bf16.mxu0 0
  %644 = vmatmul.mubr.bf16.gmra.mrb[0].mxu0 %v429
  %v645 = vpop.f32.mrb[0].mxu0
  %v646 = vadd.f32 0.0, %v645
  %v647 = vpop.f32.mrb[0].mxu0
  %v648 = vpop.f32.mrb[0].mxu0
  %v649 = vadd.f32 0.0, %v648
  %v650 = vpop.f32.mrb[0].mxu0
  %651 = vmatprep.mubr.bf16.mxu0 0
  %652 = vmatmul.mubr.bf16.gmra.mrb[0].mxu0 %v430
  %v653 = vpop.f32.mrb[0].mxu0
  %v654 = vadd.f32 0.0, %v653
  %v655 = vpop.f32.mrb[0].mxu0
  %v656 = vpop.f32.mrb[0].mxu0
  %v657 = vadd.f32 0.0, %v656
  %v658 = vpop.f32.mrb[0].mxu0
  %659 = vmatprep.mubr.bf16.mxu0 0
  %660 = vmatmul.mubr.bf16.gmra.mrb[0].mxu0 %v431
  %v661 = vpop.f32.mrb[0].mxu0
  %v662 = vadd.f32 0.0, %v661
  %v663 = vpop.f32.mrb[0].mxu0
  %v664 = vpop.f32.mrb[0].mxu0
  %v665 = vadd.f32 0.0, %v664
  %v666 = vpop.f32.mrb[0].mxu0
  %667 = vmatprep.mubr.bf16.mxu0 0
  %668 = vmatmul.mubr.bf16.gmra.mrb[0].mxu0 %v432
  %v669 = vpop.f32.mrb[0].mxu0
  %v670 = vadd.f32 0.0, %v669
  %v671 = vpop.f32.mrb[0].mxu0
  %v672 = vpop.f32.mrb[0].mxu0
  %v673 = vadd.f32 0.0, %v672
  %v674 = vpop.f32.mrb[0].mxu0
  %675 = vmatprep.mubr.bf16.mxu0 0
  %676 = vmatmul.mubr.bf16.gmra.mrb[0].mxu0 %v433
  %v677 = vpop.f32.mrb[0].mxu0
  %v678 = vadd.f32 0.0, %v677
  %v679 = vpop.f32.mrb[0].mxu0
  %v680 = vpop.f32.mrb[0].mxu0
  %v681 = vadd.f32 0.0, %v680
  %v682 = vpop.f32.mrb[0].mxu0
  %683 = vmatprep.mubr.bf16.mxu0 0
  %684 = vmatmul.mubr.bf16.gmra.mrb[0].mxu0 %v434
  %v685 = vpop.f32.mrb[0].mxu0
  %v686 = vadd.f32 0.0, %v685
  %v687 = vpop.f32.mrb[0].mxu0
  %v688 = vpop.f32.mrb[0].mxu0
  %v689 = vadd.f32 0.0, %v688
  %v690 = vpop.f32.mrb[0].mxu0
  %691 = vmatprep.mubr.bf16.mxu0 0
  %692 = vmatmul.mubr.bf16.gmra.mrb[0].mxu0 %v435
  %v693 = vpop.f32.mrb[0].mxu0
  %v694 = vadd.f32 0.0, %v693
  %v695 = vpop.f32.mrb[0].mxu0
  %v696 = vpop.f32.mrb[0].mxu0
  %v697 = vadd.f32 0.0, %v696
  %v698 = vpop.f32.mrb[0].mxu0
  %699 = vmatprep.mubr.bf16.mxu0 0
  %700 = vmatmul.mubr.bf16.gmra.mrb[0].mxu0 %v436
  %v701 = vpop.f32.mrb[0].mxu0
  %v702 = vadd.f32 0.0, %v701
  %v703 = vpop.f32.mrb[0].mxu0
  %v704 = vpop.f32.mrb[0].mxu0
  %v705 = vadd.f32 0.0, %v704
  %v706 = vpop.f32.mrb[0].mxu0
  %707 = vmatprep.mubr.bf16.mxu0 0
  %708 = vmatmul.mubr.bf16.gmra.mrb[0].mxu0 %v437
  %v709 = vpop.f32.mrb[0].mxu0
  %v710 = vadd.f32 0.0, %v709
  %v711 = vpop.f32.mrb[0].mxu0
  %v712 = vpop.f32.mrb[0].mxu0
  %v713 = vadd.f32 0.0, %v712
  %v714 = vpop.f32.mrb[0].mxu0
  %715 = vmatprep.mubr.bf16.mxu0 0
  %716 = vmatmul.mubr.bf16.gmra.mrb[0].mxu0 %v438
  %v717 = vpop.f32.mrb[0].mxu0
  %v718 = vadd.f32 0.0, %v717
  %v719 = vpop.f32.mrb[0].mxu0
  %v720 = vpop.f32.mrb[0].mxu0
  %v721 = vadd.f32 0.0, %v720
  %v722 = vpop.f32.mrb[0].mxu0
  %723 = vmatprep.mubr.bf16.mxu0 0
  %724 = vmatmul.mubr.bf16.gmra.mrb[0].mxu0 %v439
  %v725 = vpop.f32.mrb[0].mxu0
  %v726 = vadd.f32 0.0, %v725
  %v727 = vpop.f32.mrb[0].mxu0
  %v728 = vpop.f32.mrb[0].mxu0
  %v729 = vadd.f32 0.0, %v728
  %v730 = vpop.f32.mrb[0].mxu0
  %731 = vmatprep.mubr.bf16.mxu0 0
  %732 = vmatmul.mubr.bf16.gmra.mrb[0].mxu0 %v440
  %v733 = vpop.f32.mrb[0].mxu0
  %v734 = vadd.f32 0.0, %v733
  %v735 = vpop.f32.mrb[0].mxu0
  %v736 = vpop.f32.mrb[0].mxu0
  %v737 = vadd.f32 0.0, %v736
  %v738 = vpop.f32.mrb[0].mxu0
  %739 = vmatprep.mubr.bf16.mxu0 0
  %740 = vmatmul.mubr.bf16.gmra.mrb[0].mxu0 %v441
  %v741 = vpop.f32.mrb[0].mxu0
  %v742 = vadd.f32 0.0, %v741
  %v743 = vpop.f32.mrb[0].mxu0
  %v744 = vpop.f32.mrb[0].mxu0
  %v745 = vadd.f32 0.0, %v744
  %v746 = vpop.f32.mrb[0].mxu0
  %747 = vmatprep.mubr.bf16.mxu0 0
  %748 = vmatmul.mubr.bf16.gmra.mrb[0].mxu0 %v442
  %v749 = vpop.f32.mrb[0].mxu0
  %v750 = vadd.f32 0.0, %v749
  %v751 = vpop.f32.mrb[0].mxu0
  %v752 = vpop.f32.mrb[0].mxu0
  %v753 = vadd.f32 0.0, %v752
  %v754 = vpop.f32.mrb[0].mxu0
  %755 = vmatprep.mubr.bf16.mxu0 0
  %756 = vmatmul.mubr.bf16.gmra.mrb[0].mxu0 %v443
  %v757 = vpop.f32.mrb[0].mxu0
  %v758 = vadd.f32 0.0, %v757
  %v759 = vpop.f32.mrb[0].mxu0
  %v760 = vpop.f32.mrb[0].mxu0
  %v761 = vadd.f32 0.0, %v760
  %v762 = vpop.f32.mrb[0].mxu0
  %763 = vmatprep.mubr.bf16.mxu0 0
  %764 = vmatmul.mubr.bf16.gmra.mrb[0].mxu0 %v444
  %v765 = vpop.f32.mrb[0].mxu0
  %v766 = vadd.f32 0.0, %v765
  %v767 = vpop.f32.mrb[0].mxu0
  %v768 = vpop.f32.mrb[0].mxu0
  %v769 = vadd.f32 0.0, %v768
  %v770 = vpop.f32.mrb[0].mxu0
  %771 = vmatprep.mubr.bf16.mxu0 0
  %772 = vmatmul.mubr.bf16.gmra.mrb[0].mxu0 %v445
  %v773 = vpop.f32.mrb[0].mxu0
  %v774 = vadd.f32 0.0, %v773
  %v775 = vpop.f32.mrb[0].mxu0
  %v776 = vpop.f32.mrb[0].mxu0
  %v777 = vadd.f32 0.0, %v776
  %v778 = vpop.f32.mrb[0].mxu0
  %779 = vmatprep.mubr.bf16.mxu0 0
  %780 = vmatmul.mubr.bf16.gmra.mrb[0].mxu0 %v446
  %v781 = vpop.f32.mrb[0].mxu0
  %v782 = vadd.f32 0.0, %v781
  %v783 = vpop.f32.mrb[0].mxu0
  %v784 = vpop.f32.mrb[0].mxu0
  %v785 = vadd.f32 0.0, %v784
  %v786 = vpop.f32.mrb[0].mxu0
  %787 = vmatprep.mubr.bf16.mxu0 0
  %788 = vmatmul.mubr.bf16.gmra.mrb[0].mxu0 %v447
  %v789 = vpop.f32.mrb[0].mxu0
  %v790 = vadd.f32 0.0, %v789
  %v791 = vpop.f32.mrb[0].mxu0
  %v792 = vpop.f32.mrb[0].mxu0
  %v793 = vadd.f32 0.0, %v792
  %v794 = vpop.f32.mrb[0].mxu0
  %795 = vmatprep.mubr.bf16.mxu0 0
  %796 = vmatmul.mubr.bf16.gmra.mrb[0].mxu0 %v448
  %v797 = vpop.f32.mrb[0].mxu0
  %v798 = vadd.f32 0.0, %v797
  %v799 = vpop.f32.mrb[0].mxu0
  %v800 = vpop.f32.mrb[0].mxu0
  %v801 = vadd.f32 0.0, %v800
  %v802 = vpop.f32.mrb[0].mxu0
  %803 = vmatprep.mubr.bf16.mxu0 0
  %804 = vmatmul.mubr.bf16.gmra.mrb[0].mxu0 %v449
  %v805 = vpop.f32.mrb[0].mxu0
  %v806 = vadd.f32 0.0, %v805
  %v807 = vpop.f32.mrb[0].mxu0
  %v808 = vpop.f32.mrb[0].mxu0
  %v809 = vadd.f32 0.0, %v808
  %v810 = vpop.f32.mrb[0].mxu0
  %811 = vmatprep.mubr.bf16.mxu0 0
  %812 = vmatmul.mubr.bf16.gmra.mrb[0].mxu0 %v450
  %v813 = vpop.f32.mrb[0].mxu0
  %v814 = vadd.f32 0.0, %v813
  %v815 = vpop.f32.mrb[0].mxu0
  %v816 = vpop.f32.mrb[0].mxu0
  %v817 = vadd.f32 0.0, %v816
  %v818 = vpop.f32.mrb[0].mxu0
  %819 = vdwg.mxu0
  %v820 = vadd.f32 %v211, %v566
  %v821 = vadd.f32 %v212, %v569
  %v822 = vadd.f32 %v213, %v574
  %v823 = vadd.f32 %v214, %v577
  %v824 = vadd.f32 %v215, %v582
  %v825 = vadd.f32 %v216, %v585
  %v826 = vadd.f32 %v217, %v590
  %v827 = vadd.f32 %v218, %v593
  %v828 = vadd.f32 %v219, %v598
  %v829 = vadd.f32 %v220, %v601
  %v830 = vadd.f32 %v221, %v606
  %v831 = vadd.f32 %v222, %v609
  %v832 = vadd.f32 %v223, %v614
  %v833 = vadd.f32 %v224, %v617
  %v834 = vadd.f32 %v225, %v622
  %v835 = vadd.f32 %v226, %v625
  %v836 = vadd.f32 %v227, %v630
  %v837 = vadd.f32 %v228, %v633
  %v838 = vadd.f32 %v229, %v638
  %v839 = vadd.f32 %v230, %v641
  %v840 = vadd.f32 %v231, %v646
  %v841 = vadd.f32 %v232, %v649
  %v842 = vadd.f32 %v233, %v654
  %v843 = vadd.f32 %v234, %v657
  %v844 = vadd.f32 %v235, %v662
  %v845 = vadd.f32 %v236, %v665
  %v846 = vadd.f32 %v237, %v670
  %v847 = vadd.f32 %v238, %v673
  %v848 = vadd.f32 %v239, %v678
  %v849 = vadd.f32 %v240, %v681
  %v850 = vadd.f32 %v241, %v686
  %v851 = vadd.f32 %v242, %v689
  %v852 = vadd.f32 %v243, %v694
  %v853 = vadd.f32 %v244, %v697
  %v854 = vadd.f32 %v245, %v702
  %v855 = vadd.f32 %v246, %v705
  %v856 = vadd.f32 %v247, %v710
  %v857 = vadd.f32 %v248, %v713
  %v858 = vadd.f32 %v249, %v718
  %v859 = vadd.f32 %v250, %v721
  %v860 = vadd.f32 %v251, %v726
  %v861 = vadd.f32 %v252, %v729
  %v862 = vadd.f32 %v253, %v734
  %v863 = vadd.f32 %v254, %v737
  %v864 = vadd.f32 %v255, %v742
  %v865 = vadd.f32 %v256, %v745
  %v866 = vadd.f32 %v257, %v750
  %v867 = vadd.f32 %v258, %v753
  %v868 = vadd.f32 %v259, %v758
  %v869 = vadd.f32 %v260, %v761
  %v870 = vadd.f32 %v261, %v766
  %v871 = vadd.f32 %v262, %v769
  %v872 = vadd.f32 %v263, %v774
  %v873 = vadd.f32 %v264, %v777
  %v874 = vadd.f32 %v265, %v782
  %v875 = vadd.f32 %v266, %v785
  %v876 = vadd.f32 %v267, %v790
  %v877 = vadd.f32 %v268, %v793
  %v878 = vadd.f32 %v269, %v798
  %v879 = vadd.f32 %v270, %v801
  %v880 = vadd.f32 %v271, %v806
  %v881 = vadd.f32 %v272, %v809
  %v882 = vadd.f32 %v273, %v814
  %v883 = vadd.f32 %v274, %v817
  %884 = vst [vmem:[#allocation2] sm:$0xff] %v820
  %885 = vst [vmem:[#allocation2 + $0x8] sm:$0xff] %v821
  %886 = vst [vmem:[#allocation2 + $0x10] sm:$0xff] %v822
  %887 = vst [vmem:[#allocation2 + $0x18] sm:$0xff] %v823
  %888 = vst [vmem:[#allocation2 + $0x20] sm:$0xff] %v824
  %889 = vst [vmem:[#allocation2 + $0x28] sm:$0xff] %v825
  %890 = vst [vmem:[#allocation2 + $0x30] sm:$0xff] %v826
  %891 = vst [vmem:[#allocation2 + $0x38] sm:$0xff] %v827
  %892 = vst [vmem:[#allocation2 + $0x40] sm:$0xff] %v828
  %893 = vst [vmem:[#allocation2 + $0x48] sm:$0xff] %v829
  %894 = vst [vmem:[#allocation2 + $0x50] sm:$0xff] %v830
  %895 = vst [vmem:[#allocation2 + $0x58] sm:$0xff] %v831
  %896 = vst [vmem:[#allocation2 + $0x60] sm:$0xff] %v832
  %897 = vst [vmem:[#allocation2 + $0x68] sm:$0xff] %v833
  %898 = vst [vmem:[#allocation2 + $0x70] sm:$0xff] %v834
  %899 = vst [vmem:[#allocation2 + $0x78] sm:$0xff] %v835
  %900 = vst [vmem:[#allocation2 + $0x80] sm:$0xff] %v836
  %901 = vst [vmem:[#allocation2 + $0x88] sm:$0xff] %v837
  %902 = vst [vmem:[#allocation2 + $0x90] sm:$0xff] %v838
  %903 = vst [vmem:[#allocation2 + $0x98] sm:$0xff] %v839
  %904 = vst [vmem:[#allocation2 + $0xa0] sm:$0xff] %v840
  %905 = vst [vmem:[#allocation2 + $0xa8] sm:$0xff] %v841
  %906 = vst [vmem:[#allocation2 + $0xb0] sm:$0xff] %v842
  %907 = vst [vmem:[#allocation2 + $0xb8] sm:$0xff] %v843
  %908 = vst [vmem:[#allocation2 + $0xc0] sm:$0xff] %v844
  %909 = vst [vmem:[#allocation2 + $0xc8] sm:$0xff] %v845
  %910 = vst [vmem:[#allocation2 + $0xd0] sm:$0xff] %v846
  %911 = vst [vmem:[#allocation2 + $0xd8] sm:$0xff] %v847
  %912 = vst [vmem:[#allocation2 + $0xe0] sm:$0xff] %v848
  %913 = vst [vmem:[#allocation2 + $0xe8] sm:$0xff] %v849
  %914 = vst [vmem:[#allocation2 + $0xf0] sm:$0xff] %v850
  %915 = vst [vmem:[#allocation2 + $0xf8] sm:$0xff] %v851
  %916 = vst [vmem:[#allocation2 + $0x100] sm:$0xff] %v852
  %917 = vst [vmem:[#allocation2 + $0x108] sm:$0xff] %v853
  %918 = vst [vmem:[#allocation2 + $0x110] sm:$0xff] %v854
  %919 = vst [vmem:[#allocation2 + $0x118] sm:$0xff] %v855
  %920 = vst [vmem:[#allocation2 + $0x120] sm:$0xff] %v856
  %921 = vst [vmem:[#allocation2 + $0x128] sm:$0xff] %v857
  %922 = vst [vmem:[#allocation2 + $0x130] sm:$0xff] %v858
  %923 = vst [vmem:[#allocation2 + $0x138] sm:$0xff] %v859
  %924 = vst [vmem:[#allocation2 + $0x140] sm:$0xff] %v860
  %925 = vst [vmem:[#allocation2 + $0x148] sm:$0xff] %v861
  %926 = vst [vmem:[#allocation2 + $0x150] sm:$0xff] %v862
  %927 = vst [vmem:[#allocation2 + $0x158] sm:$0xff] %v863
  %928 = vst [vmem:[#allocation2 + $0x160] sm:$0xff] %v864
  %929 = vst [vmem:[#allocation2 + $0x168] sm:$0xff] %v865
  %930 = vst [vmem:[#allocation2 + $0x170] sm:$0xff] %v866
  %931 = vst [vmem:[#allocation2 + $0x178] sm:$0xff] %v867
  %932 = vst [vmem:[#allocation2 + $0x180] sm:$0xff] %v868
  %933 = vst [vmem:[#allocation2 + $0x188] sm:$0xff] %v869
  %934 = vst [vmem:[#allocation2 + $0x190] sm:$0xff] %v870
  %935 = vst [vmem:[#allocation2 + $0x198] sm:$0xff] %v871
  %936 = vst [vmem:[#allocation2 + $0x1a0] sm:$0xff] %v872
  %937 = vst [vmem:[#allocation2 + $0x1a8] sm:$0xff] %v873
  %938 = vst [vmem:[#allocation2 + $0x1b0] sm:$0xff] %v874
  %939 = vst [vmem:[#allocation2 + $0x1b8] sm:$0xff] %v875
  %940 = vst [vmem:[#allocation2 + $0x1c0] sm:$0xff] %v876
  %941 = vst [vmem:[#allocation2 + $0x1c8] sm:$0xff] %v877
  %942 = vst [vmem:[#allocation2 + $0x1d0] sm:$0xff] %v878
  %943 = vst [vmem:[#allocation2 + $0x1d8] sm:$0xff] %v879
  %944 = vst [vmem:[#allocation2 + $0x1e0] sm:$0xff] %v880
  %945 = vst [vmem:[#allocation2 + $0x1e8] sm:$0xff] %v881
  %946 = vst [vmem:[#allocation2 + $0x1f0] sm:$0xff] %v882
  %947 = vst [vmem:[#allocation2 + $0x1f8] sm:$0xff] %v883
  // Predicated region
  $region18: #{_lambda_.40} parent=0 // pred_check
    %p948 = pneg %p15
  $region19: #{_lambda_.40} parent=0 // pred_check_branch
    %950 = sbr.rel (%p948) target = $region21
  $region20: #{_lambda_.40} parent=0 // pred_region
    %v951 = vld [vmem:[#allocation2] sm:$0xff]
    %v952 = vld [vmem:[#allocation2 + $0x8] sm:$0xff]
    %v953 = vld [vmem:[#allocation2 + $0x10] sm:$0xff]
    %v954 = vld [vmem:[#allocation2 + $0x18] sm:$0xff]
    %v955 = vld [vmem:[#allocation2 + $0x20] sm:$0xff]
    %v956 = vld [vmem:[#allocation2 + $0x28] sm:$0xff]
    %v957 = vld [vmem:[#allocation2 + $0x30] sm:$0xff]
    %v958 = vld [vmem:[#allocation2 + $0x38] sm:$0xff]
    %v959 = vld [vmem:[#allocation2 + $0x40] sm:$0xff]
    %v960 = vld [vmem:[#allocation2 + $0x48] sm:$0xff]
    %v961 = vld [vmem:[#allocation2 + $0x50] sm:$0xff]
    %v962 = vld [vmem:[#allocation2 + $0x58] sm:$0xff]
    %v963 = vld [vmem:[#allocation2 + $0x60] sm:$0xff]
    %v964 = vld [vmem:[#allocation2 + $0x68] sm:$0xff]
    %v965 = vld [vmem:[#allocation2 + $0x70] sm:$0xff]
    %v966 = vld [vmem:[#allocation2 + $0x78] sm:$0xff]
    %v967 = vld [vmem:[#allocation2 + $0x80] sm:$0xff]
    %v968 = vld [vmem:[#allocation2 + $0x88] sm:$0xff]
    %v969 = vld [vmem:[#allocation2 + $0x90] sm:$0xff]
    %v970 = vld [vmem:[#allocation2 + $0x98] sm:$0xff]
    %v971 = vld [vmem:[#allocation2 + $0xa0] sm:$0xff]
    %v972 = vld [vmem:[#allocation2 + $0xa8] sm:$0xff]
    %v973 = vld [vmem:[#allocation2 + $0xb0] sm:$0xff]
    %v974 = vld [vmem:[#allocation2 + $0xb8] sm:$0xff]
    %v975 = vld [vmem:[#allocation2 + $0xc0] sm:$0xff]
    %v976 = vld [vmem:[#allocation2 + $0xc8] sm:$0xff]
    %v977 = vld [vmem:[#allocation2 + $0xd0] sm:$0xff]
    %v978 = vld [vmem:[#allocation2 + $0xd8] sm:$0xff]
    %v979 = vld [vmem:[#allocation2 + $0xe0] sm:$0xff]
    %v980 = vld [vmem:[#allocation2 + $0xe8] sm:$0xff]
    %v981 = vld [vmem:[#allocation2 + $0xf0] sm:$0xff]
    %v982 = vld [vmem:[#allocation2 + $0xf8] sm:$0xff]
    %v983 = vld [vmem:[#allocation2 + $0x100] sm:$0xff]
    %v984 = vld [vmem:[#allocation2 + $0x108] sm:$0xff]
    %v985 = vld [vmem:[#allocation2 + $0x110] sm:$0xff]
    %v986 = vld [vmem:[#allocation2 + $0x118] sm:$0xff]
    %v987 = vld [vmem:[#allocation2 + $0x120] sm:$0xff]
    %v988 = vld [vmem:[#allocation2 + $0x128] sm:$0xff]
    %v989 = vld [vmem:[#allocation2 + $0x130] sm:$0xff]
    %v990 = vld [vmem:[#allocation2 + $0x138] sm:$0xff]
    %v991 = vld [vmem:[#allocation2 + $0x140] sm:$0xff]
    %v992 = vld [vmem:[#allocation2 + $0x148] sm:$0xff]
    %v993 = vld [vmem:[#allocation2 + $0x150] sm:$0xff]
    %v994 = vld [vmem:[#allocation2 + $0x158] sm:$0xff]
    %v995 = vld [vmem:[#allocation2 + $0x160] sm:$0xff]
    %v996 = vld [vmem:[#allocation2 + $0x168] sm:$0xff]
    %v997 = vld [vmem:[#allocation2 + $0x170] sm:$0xff]
    %v998 = vld [vmem:[#allocation2 + $0x178] sm:$0xff]
    %v999 = vld [vmem:[#allocation2 + $0x180] sm:$0xff]
    %v1000 = vld [vmem:[#allocation2 + $0x188] sm:$0xff]
    %v1001 = vld [vmem:[#allocation2 + $0x190] sm:$0xff]
    %v1002 = vld [vmem:[#allocation2 + $0x198] sm:$0xff]
    %v1003 = vld [vmem:[#allocation2 + $0x1a0] sm:$0xff]
    %v1004 = vld [vmem:[#allocation2 + $0x1a8] sm:$0xff]
    %v1005 = vld [vmem:[#allocation2 + $0x1b0] sm:$0xff]
    %v1006 = vld [vmem:[#allocation2 + $0x1b8] sm:$0xff]
    %v1007 = vld [vmem:[#allocation2 + $0x1c0] sm:$0xff]
    %v1008 = vld [vmem:[#allocation2 + $0x1c8] sm:$0xff]
    %v1009 = vld [vmem:[#allocation2 + $0x1d0] sm:$0xff]
    %v1010 = vld [vmem:[#allocation2 + $0x1d8] sm:$0xff]
    %v1011 = vld [vmem:[#allocation2 + $0x1e0] sm:$0xff]
    %v1012 = vld [vmem:[#allocation2 + $0x1e8] sm:$0xff]
    %v1013 = vld [vmem:[#allocation2 + $0x1f0] sm:$0xff]
    %v1014 = vld [vmem:[#allocation2 + $0x1f8] sm:$0xff]
    %v1015 = vld [vmem:[%s2] sm:$0x1]
    %v1017 = vlaneseq
    %v1018 = vshrl.u32 %v1017, 7
    %v1019 = vsub.s32 0, %v1018
    %v1020 = vrot.slane %v1015, %v1019
    %v1022 = vadd.f32 %v951, %v1020
    %v1023 = vadd.f32 %v952, %v1020
    %v1024 = vadd.f32 %v953, %v1020
    %v1025 = vadd.f32 %v954, %v1020
    %v1026 = vadd.f32 %v955, %v1020
    %v1027 = vadd.f32 %v956, %v1020
    %v1028 = vadd.f32 %v957, %v1020
    %v1029 = vadd.f32 %v958, %v1020
    %v1030 = vadd.f32 %v959, %v1020
    %v1031 = vadd.f32 %v960, %v1020
    %v1032 = vadd.f32 %v961, %v1020
    %v1033 = vadd.f32 %v962, %v1020
    %v1034 = vadd.f32 %v963, %v1020
    %v1035 = vadd.f32 %v964, %v1020
    %v1036 = vadd.f32 %v965, %v1020
    %v1037 = vadd.f32 %v966, %v1020
    %v1038 = vadd.f32 %v967, %v1020
    %v1039 = vadd.f32 %v968, %v1020
    %v1040 = vadd.f32 %v969, %v1020
    %v1041 = vadd.f32 %v970, %v1020
    %v1042 = vadd.f32 %v971, %v1020
    %v1043 = vadd.f32 %v972, %v1020
    %v1044 = vadd.f32 %v973, %v1020
    %v1045 = vadd.f32 %v974, %v1020
    %v1046 = vadd.f32 %v975, %v1020
    %v1047 = vadd.f32 %v976, %v1020
    %v1048 = vadd.f32 %v977, %v1020
    %v1049 = vadd.f32 %v978, %v1020
    %v1050 = vadd.f32 %v979, %v1020
    %v1051 = vadd.f32 %v980, %v1020
    %v1052 = vadd.f32 %v981, %v1020
    %v1053 = vadd.f32 %v982, %v1020
    %v1054 = vadd.f32 %v983, %v1020
    %v1055 = vadd.f32 %v984, %v1020
    %v1056 = vadd.f32 %v985, %v1020
    %v1057 = vadd.f32 %v986, %v1020
    %v1058 = vadd.f32 %v987, %v1020
    %v1059 = vadd.f32 %v988, %v1020
    %v1060 = vadd.f32 %v989, %v1020
    %v1061 = vadd.f32 %v990, %v1020
    %v1062 = vadd.f32 %v991, %v1020
    %v1063 = vadd.f32 %v992, %v1020
    %v1064 = vadd.f32 %v993, %v1020
    %v1065 = vadd.f32 %v994, %v1020
    %v1066 = vadd.f32 %v995, %v1020
    %v1067 = vadd.f32 %v996, %v1020
    %v1068 = vadd.f32 %v997, %v1020
    %v1069 = vadd.f32 %v998, %v1020
    %v1070 = vadd.f32 %v999, %v1020
    %v1071 = vadd.f32 %v1000, %v1020
    %v1072 = vadd.f32 %v1001, %v1020
    %v1073 = vadd.f32 %v1002, %v1020
    %v1074 = vadd.f32 %v1003, %v1020
    %v1075 = vadd.f32 %v1004, %v1020
    %v1076 = vadd.f32 %v1005, %v1020
    %v1077 = vadd.f32 %v1006, %v1020
    %v1078 = vadd.f32 %v1007, %v1020
    %v1079 = vadd.f32 %v1008, %v1020
    %v1080 = vadd.f32 %v1009, %v1020
    %v1081 = vadd.f32 %v1010, %v1020
    %v1082 = vadd.f32 %v1011, %v1020
    %v1083 = vadd.f32 %v1012, %v1020
    %v1084 = vadd.f32 %v1013, %v1020
    %v1085 = vadd.f32 %v1014, %v1020
    %v1086 = vtanh.pop %v1022
    %v1087 = vtanh.pop %v1023
    %v1088 = vtanh.pop %v1024
    %v1089 = vtanh.pop %v1025
    %v1090 = vtanh.pop %v1026
    %v1091 = vtanh.pop %v1027
    %v1092 = vtanh.pop %v1028
    %v1093 = vtanh.pop %v1029
    %v1094 = vtanh.pop %v1030
    %v1095 = vtanh.pop %v1031
    %v1096 = vtanh.pop %v1032
    %v1097 = vtanh.pop %v1033
    %v1098 = vtanh.pop %v1034
    %v1099 = vtanh.pop %v1035
    %v1100 = vtanh.pop %v1036
    %v1101 = vtanh.pop %v1037
    %v1102 = vtanh.pop %v1038
    %v1103 = vtanh.pop %v1039
    %v1104 = vtanh.pop %v1040
    %v1105 = vtanh.pop %v1041
    %v1106 = vtanh.pop %v1042
    %v1107 = vtanh.pop %v1043
    %v1108 = vtanh.pop %v1044
    %v1109 = vtanh.pop %v1045
    %v1110 = vtanh.pop %v1046
    %v1111 = vtanh.pop %v1047
    %v1112 = vtanh.pop %v1048
    %v1113 = vtanh.pop %v1049
    %v1114 = vtanh.pop %v1050
    %v1115 = vtanh.pop %v1051
    %v1116 = vtanh.pop %v1052
    %v1117 = vtanh.pop %v1053
    %v1118 = vtanh.pop %v1054
    %v1119 = vtanh.pop %v1055
    %v1120 = vtanh.pop %v1056
    %v1121 = vtanh.pop %v1057
    %v1122 = vtanh.pop %v1058
    %v1123 = vtanh.pop %v1059
    %v1124 = vtanh.pop %v1060
    %v1125 = vtanh.pop %v1061
    %v1126 = vtanh.pop %v1062
    %v1127 = vtanh.pop %v1063
    %v1128 = vtanh.pop %v1064
    %v1129 = vtanh.pop %v1065
    %v1130 = vtanh.pop %v1066
    %v1131 = vtanh.pop %v1067
    %v1132 = vtanh.pop %v1068
    %v1133 = vtanh.pop %v1069
    %v1134 = vtanh.pop %v1070
    %v1135 = vtanh.pop %v1071
    %v1136 = vtanh.pop %v1072
    %v1137 = vtanh.pop %v1073
    %v1138 = vtanh.pop %v1074
    %v1139 = vtanh.pop %v1075
    %v1140 = vtanh.pop %v1076
    %v1141 = vtanh.pop %v1077
    %v1142 = vtanh.pop %v1078
    %v1143 = vtanh.pop %v1079
    %v1144 = vtanh.pop %v1080
    %v1145 = vtanh.pop %v1081
    %v1146 = vtanh.pop %v1082
    %v1147 = vtanh.pop %v1083
    %v1148 = vtanh.pop %v1084
    %v1149 = vtanh.pop %v1085
    %1150 = vst [vmem:[%s3] sm:$0xff] %v1086
    %1151 = vst [vmem:[%s3 + $0x8] sm:$0xff] %v1087
    %1152 = vst [vmem:[%s3 + $0x10] sm:$0xff] %v1088
    %1153 = vst [vmem:[%s3 + $0x18] sm:$0xff] %v1089
    %1154 = vst [vmem:[%s3 + $0x20] sm:$0xff] %v1090
    %1155 = vst [vmem:[%s3 + $0x28] sm:$0xff] %v1091
    %1156 = vst [vmem:[%s3 + $0x30] sm:$0xff] %v1092
    %1157 = vst [vmem:[%s3 + $0x38] sm:$0xff] %v1093
    %1158 = vst [vmem:[%s3 + $0x40] sm:$0xff] %v1094
    %1159 = vst [vmem:[%s3 + $0x48] sm:$0xff] %v1095
    %1160 = vst [vmem:[%s3 + $0x50] sm:$0xff] %v1096
    %1161 = vst [vmem:[%s3 + $0x58] sm:$0xff] %v1097
    %1162 = vst [vmem:[%s3 + $0x60] sm:$0xff] %v1098
    %1163 = vst [vmem:[%s3 + $0x68] sm:$0xff] %v1099
    %1164 = vst [vmem:[%s3 + $0x70] sm:$0xff] %v1100
    %1165 = vst [vmem:[%s3 + $0x78] sm:$0xff] %v1101
    %1166 = vst [vmem:[%s3 + $0x80] sm:$0xff] %v1102
    %1167 = vst [vmem:[%s3 + $0x88] sm:$0xff] %v1103
    %1168 = vst [vmem:[%s3 + $0x90] sm:$0xff] %v1104
    %1169 = vst [vmem:[%s3 + $0x98] sm:$0xff] %v1105
    %1170 = vst [vmem:[%s3 + $0xa0] sm:$0xff] %v1106
    %1171 = vst [vmem:[%s3 + $0xa8] sm:$0xff] %v1107
    %1172 = vst [vmem:[%s3 + $0xb0] sm:$0xff] %v1108
    %1173 = vst [vmem:[%s3 + $0xb8] sm:$0xff] %v1109
    %1174 = vst [vmem:[%s3 + $0xc0] sm:$0xff] %v1110
    %1175 = vst [vmem:[%s3 + $0xc8] sm:$0xff] %v1111
    %1176 = vst [vmem:[%s3 + $0xd0] sm:$0xff] %v1112
    %1177 = vst [vmem:[%s3 + $0xd8] sm:$0xff] %v1113
    %1178 = vst [vmem:[%s3 + $0xe0] sm:$0xff] %v1114
    %1179 = vst [vmem:[%s3 + $0xe8] sm:$0xff] %v1115
    %1180 = vst [vmem:[%s3 + $0xf0] sm:$0xff] %v1116
    %1181 = vst [vmem:[%s3 + $0xf8] sm:$0xff] %v1117
    %1182 = vst [vmem:[%s3 + $0x100] sm:$0xff] %v1118
    %1183 = vst [vmem:[%s3 + $0x108] sm:$0xff] %v1119
    %1184 = vst [vmem:[%s3 + $0x110] sm:$0xff] %v1120
    %1185 = vst [vmem:[%s3 + $0x118] sm:$0xff] %v1121
    %1186 = vst [vmem:[%s3 + $0x120] sm:$0xff] %v1122
    %1187 = vst [vmem:[%s3 + $0x128] sm:$0xff] %v1123
    %1188 = vst [vmem:[%s3 + $0x130] sm:$0xff] %v1124
    %1189 = vst [vmem:[%s3 + $0x138] sm:$0xff] %v1125
    %1190 = vst [vmem:[%s3 + $0x140] sm:$0xff] %v1126
    %1191 = vst [vmem:[%s3 + $0x148] sm:$0xff] %v1127
    %1192 = vst [vmem:[%s3 + $0x150] sm:$0xff] %v1128
    %1193 = vst [vmem:[%s3 + $0x158] sm:$0xff] %v1129
    %1194 = vst [vmem:[%s3 + $0x160] sm:$0xff] %v1130
    %1195 = vst [vmem:[%s3 + $0x168] sm:$0xff] %v1131
    %1196 = vst [vmem:[%s3 + $0x170] sm:$0xff] %v1132
    %1197 = vst [vmem:[%s3 + $0x178] sm:$0xff] %v1133
    %1198 = vst [vmem:[%s3 + $0x180] sm:$0xff] %v1134
    %1199 = vst [vmem:[%s3 + $0x188] sm:$0xff] %v1135
    %1200 = vst [vmem:[%s3 + $0x190] sm:$0xff] %v1136
    %1201 = vst [vmem:[%s3 + $0x198] sm:$0xff] %v1137
    %1202 = vst [vmem:[%s3 + $0x1a0] sm:$0xff] %v1138
    %1203 = vst [vmem:[%s3 + $0x1a8] sm:$0xff] %v1139
    %1204 = vst [vmem:[%s3 + $0x1b0] sm:$0xff] %v1140
    %1205 = vst [vmem:[%s3 + $0x1b8] sm:$0xff] %v1141
    %1206 = vst [vmem:[%s3 + $0x1c0] sm:$0xff] %v1142
    %1207 = vst [vmem:[%s3 + $0x1c8] sm:$0xff] %v1143
    %1208 = vst [vmem:[%s3 + $0x1d0] sm:$0xff] %v1144
    %1209 = vst [vmem:[%s3 + $0x1d8] sm:$0xff] %v1145
    %1210 = vst [vmem:[%s3 + $0x1e0] sm:$0xff] %v1146
    %1211 = vst [vmem:[%s3 + $0x1e8] sm:$0xff] %v1147
    %1212 = vst [vmem:[%s3 + $0x1f0] sm:$0xff] %v1148
    %1213 = vst [vmem:[%s3 + $0x1f8] sm:$0xff] %v1149
  $region21: #{_lambda_.40} parent=0 // pred_fallthru
    _
  // Predicated region
  $region22: #{_lambda_.40} parent=0 // pred_check
    _
  $region23: #{_lambda_.40} parent=0 // pred_check_branch
    %1215 = sbr.rel (0) target = $region25
  $region24: #{_lambda_.40} parent=0 // pred_region
    _
  $region25: #{_lambda_.40} parent=0 // pred_fallthru
    _
  // Predicated region
  $region26: #{_lambda_.40} parent=0 // pred_check
    _
  $region27: #{_lambda_.40} parent=0 // pred_check_branch
    %1217 = sbr.rel (0) target = $region29
  $region28: #{_lambda_.40} parent=0 // pred_region
    _
  $region29: #{_lambda_.40} parent=0 // pred_fallthru
    _

</llo_original>
